<compile_context>
chip_gen: v6e
topology: v6e:2x2x1
jax: 0.10.0
libtpu: 0.0.40
codegen_flags: <defaults>
</compile_context>

<pallas_src>
import math

import numpy as np
import jax
import jax.numpy as jnp
from jax import lax
from jax.experimental import pallas as pl
from jax.experimental.pallas import tpu as pltpu

EPS = 1e-5
IMG = 14
NIMG = IMG * IMG                                            # 196 pixels / image
TAPS1 = tuple(IMG * dy + dx for dy in range(3) for dx in range(3))          # conv1 lane shifts
TAPS2 = tuple(2 * IMG * dy + 2 * dx for dy in range(3) for dx in range(3))  # conv2 lane shifts
POOL2_OFF = (0, 2, 2 * IMG, 2 * IMG + 2)                    # 2x2 pool over conv2 lanes
FLAT_OFF = (0, 4, 4 * IMG, 4 * IMG + 4)                     # lanes of pooled (y,x) outputs


# ----------------------------------------------------------------------------
# Fused kernel: both branches (conv1+BN+ReLU+pool+conv2+pool+flatten), the
# shared linear head, and the predictor, all in one grid step.
# ----------------------------------------------------------------------------
def cnn_ws_kernel(x_ref, mask_ref, w1_ref, g1_ref, bt1_ref, w2_ref, b2_ref,
                  wl_ref, bl_ref, gl_ref, btl_ref, wp_ref, bp_ref, gp_ref,
                  btp_ref, o_ref):
    npix = mask_ref.shape[1]          # B * 196
    B = npix // NIMG
    wh = npix                         # conv1 output window width (lanes)
    wp1 = wh - 15                     # pool1 window width
    wc2 = wp1 - TAPS2[-1]             # conv2 window width
    wp2 = wc2 - POOL2_OFF[-1]         # pool2 window width

    mask = mask_ref[...]              # (1, wh)   1.0 on valid conv1 positions
    w1 = w1_ref[...]                  # (16, 9)
    g1 = g1_ref[...]                  # (16, 1)
    bt1 = bt1_ref[...]                # (16, 1)
    w2 = w2_ref[...]                  # (32, 144)
    b2 = b2_ref[...]                  # (32, 1)

    def branch(br):
        xv = x_ref[br:br + 1, :]      # (1, PADW) flat zero-padded pixels

        # Conv2d(1,16,3): 9 lane-shifted broadcast MACs, channels on sublanes.
        # Conv1 bias omitted - it is cancelled exactly by the BN2d mean.
        h = xv[:, 0:wh] * w1[:, 0:1]
        for t in range(1, 9):
            k = TAPS1[t]
            h = h + xv[:, k:k + wh] * w1[:, t:t + 1]        # (16, wh)

        # BatchNorm2d(16) training-mode stats over the B*12*12 valid positions.
        hm = h * mask
        cnt = float(B * 12 * 12)
        mean = jnp.sum(hm, axis=1, keepdims=True) / cnt
        var = jnp.maximum(jnp.sum(hm * hm, axis=1, keepdims=True) / cnt
                          - mean * mean, 0.0)
        scale = g1 * lax.rsqrt(var + EPS)     # > 0 (gamma=1) so BN+ReLU commute with max
        shift = bt1 - mean * scale

        # MaxPool2d(2,2) as two batched lane-shifted maxes, then ONE fused
        # affine+ReLU on the pooled tensor (BN/ReLU folded past the max).
        mh = jnp.maximum(hm[:, 0:wh - 1], hm[:, 1:wh])
        p1 = jnp.maximum(mh[:, 0:wp1], mh[:, IMG:IMG + wp1])
        y1 = jnp.maximum(p1 * scale + shift, 0.0)           # (16, wp1)

        # Conv2d(16,32,3): im2col = 9 lane-shifted views stacked on sublanes,
        # one MXU matmul (32,144)@(144,wc2).
        lhs = jnp.concatenate([y1[:, k:k + wc2] for k in TAPS2], axis=0)
        c2 = jnp.dot(w2, lhs, preferred_element_type=jnp.float32) + b2   # (32, wc2)

        # MaxPool2d(2,2), batched over all output positions.
        p2 = c2[:, 0:wp2]
        for d in POOL2_OFF[1:]:
            p2 = jnp.maximum(p2, c2[:, d:d + wp2])          # (32, wp2)

        # Flatten to (128, B): feature row = (y*2+x)*32 + channel (the Linear
        # weight is permuted host-side to match PyTorch's CHW flatten).
        pieces = []
        for o in FLAT_OFF:
            cols = [p2[:, NIMG * b + o:NIMG * b + o + 1] for b in range(B)]
            pieces.append(jnp.concatenate(cols, axis=1) if B > 1 else cols[0])
        return jnp.concatenate(pieces, axis=0)              # (128, B)

    # Both branch tails batched into one (10,128)@(128,2B) matmul.
    xlin = jnp.concatenate([branch(0), branch(1)], axis=1)  # (128, 2B)
    z = jnp.dot(wl_ref[...], xlin, preferred_element_type=jnp.float32) + bl_ref[...]

    def bn_over_batch(zc, g, bt):     # zc: (C, n), training-mode stats over lanes
        mu = jnp.mean(zc, axis=1, keepdims=True)
        v = jnp.maximum(jnp.mean(zc * zc, axis=1, keepdims=True) - mu * mu, 0.0)
        return g * (zc - mu) * lax.rsqrt(v + EPS) + bt

    # BatchNorm1d(10): separate batch statistics per branch (two module calls).
    zn = jnp.concatenate(
        [bn_over_batch(z[:, br * B:(br + 1) * B], gl_ref[...], btl_ref[...])
         for br in range(2)], axis=1)                        # (10, 2B)
    e = jnp.exp(zn - jnp.max(zn, axis=0, keepdims=True))
    prob = e / jnp.sum(e, axis=0, keepdims=True)             # softmax over classes

    # Predictor: concat(d1,d2) -> Linear(20,2) -> BN1d(2) -> Softmax.
    dcat = jnp.concatenate([prob[:, 0:B], prob[:, B:2 * B]], axis=0)   # (20, B)
    zp = jnp.dot(wp_ref[...], dcat, preferred_element_type=jnp.float32) + bp_ref[...]
    zpn = bn_over_batch(zp, gp_ref[...], btp_ref[...])       # (2, B)
    ep = jnp.exp(zpn - jnp.max(zpn, axis=0, keepdims=True))
    o_ref[...] = ep / jnp.sum(ep, axis=0, keepdims=True)     # (2, B)


# ----------------------------------------------------------------------------
# pallas_call plumbing
# ----------------------------------------------------------------------------
def _full_spec(shape):
    nd = len(shape)
    return pl.BlockSpec(shape, lambda i, nd=nd: (0,) * nd)


def _valid_mask(B):
    p = np.arange(B * NIMG)
    rem = p % NIMG
    ok = ((rem // IMG) < 12) & ((rem % IMG) < 12)
    return jnp.asarray(ok.astype(np.float32)[None, :])       # (1, B*196)


def cnn_ws_forward(im1, im2, q):
    x1 = im1.reshape(-1).astype(jnp.float32)                 # (B*196,)
    x2 = im2.reshape(-1).astype(jnp.float32)
    npix = x1.shape[0]
    B = npix // NIMG
    padw = ((npix + TAPS1[-1] + 127) // 128) * 128
    xall = jnp.stack([jnp.pad(x1, (0, padw - npix)),
                      jnp.pad(x2, (0, padw - npix))], axis=0)  # (2, padw)
    mask = _valid_mask(B)

    args = (xall, mask, q["w1"], q["g1"], q["bt1"], q["w2"], q["b2"],
            q["wl"], q["bl"], q["gl"], q["btl"], q["wp"], q["bp"], q["gp"],
            q["btp"])
    out = pl.pallas_call(
        cnn_ws_kernel,
        out_shape=jax.ShapeDtypeStruct((2, B), jnp.float32),
        grid=(1,),
        in_specs=[_full_spec(a.shape) for a in args],
        out_specs=_full_spec((2, B)),
        compiler_params=pltpu.CompilerParams(
            dimension_semantics=("arbitrary",)),
    )(*args)
    return (None, None, out.T)                                # (B, 2)


# ----------------------------------------------------------------------------
# Parameters (deterministic, PyTorch-default-like uniform init)
# ----------------------------------------------------------------------------
def init_params():
    keys = jax.random.split(jax.random.PRNGKey(1), 8)

    def uinit(key, shape, fan_in):
        bound = 1.0 / math.sqrt(fan_in)
        return jax.random.uniform(key, shape, jnp.float32, -bound, bound)

    p = {}
    p["W1"] = uinit(keys[0], (16, 1, 3, 3), 9)
    p["b1"] = uinit(keys[1], (16,), 9)               # cancelled by BN2d in-kernel
    p["g1"] = jnp.ones((16,), jnp.float32)
    p["bt1"] = jnp.zeros((16,), jnp.float32)
    p["W2"] = uinit(keys[2], (32, 16, 3, 3), 144)
    p["b2"] = uinit(keys[3], (32,), 144)
    p["Wl"] = uinit(keys[4], (10, 128), 128)
    p["bl"] = uinit(keys[5], (10,), 128)
    p["gl"] = jnp.ones((10,), jnp.float32)
    p["btl"] = jnp.zeros((10,), jnp.float32)
    p["Wp"] = uinit(keys[6], (2, 20), 20)
    p["bp"] = uinit(keys[7], (2,), 20)
    p["gp"] = jnp.ones((2,), jnp.float32)
    p["btp"] = jnp.zeros((2,), jnp.float32)
    return p


def prep_params(p):
    """Reshape PyTorch-layout params to the in-kernel layouts."""
    q = {}
    q["w1"] = p["W1"].reshape(16, 9)                                   # (co, dy*3+dx)
    q["w2"] = jnp.transpose(p["W2"], (0, 2, 3, 1)).reshape(32, 144)    # cols = (dy,dx,ci)
    q["b2"] = p["b2"].reshape(32, 1)
    # Linear(128,10): permute input axis from CHW flatten to (y,x,channel) flatten.
    q["wl"] = jnp.transpose(p["Wl"].reshape(10, 32, 4), (0, 2, 1)).reshape(10, 128)
    q["bl"] = p["bl"].reshape(10, 1)
    q["gl"] = p["gl"].reshape(10, 1)
    q["btl"] = p["btl"].reshape(10, 1)
    q["g1"] = p["g1"].reshape(16, 1)
    q["bt1"] = p["bt1"].reshape(16, 1)
    q["wp"] = p["Wp"]                                                  # (2, 20)
    q["bp"] = p["bp"].reshape(2, 1)
    q["gp"] = p["gp"].reshape(2, 1)
    q["btp"] = p["btp"].reshape(2, 1)
    # p["b1"] intentionally unused: training-mode BN2d mean cancels it exactly.
    return q


# ----------------------------------------------------------------------------
# Pure-JAX reference (mirrors the PyTorch module, training-mode BN)
# ----------------------------------------------------------------------------
def _bn_train(z, g, b, axes):
    mu = jnp.mean(z, axis=axes, keepdims=True)
    var = jnp.mean((z - mu) ** 2, axis=axes, keepdims=True)
    return (z - mu) / jnp.sqrt(var + EPS) * g + b


def _conv(x, w, b):
    y = lax.conv_general_dilated(x, w, (1, 1), "VALID",
                                 dimension_numbers=("NCHW", "OIHW", "NCHW"),
                                 precision=lax.Precision.HIGHEST)
    return y + b.reshape(1, -1, 1, 1)


def _ref_branch(x, p):
    Bn = x.shape[0]
    y = _conv(x, p["W1"], p["b1"])
    y = _bn_train(y, p["g1"].reshape(1, 16, 1, 1), p["bt1"].reshape(1, 16, 1, 1), (0, 2, 3))
    y = jnp.maximum(y, 0.0)
    y = y.reshape(Bn, 16, 6, 2, 6, 2).max(axis=(3, 5))
    y = _conv(y, p["W2"], p["b2"])
    y = y.reshape(Bn, 32, 2, 2, 2, 2).max(axis=(3, 5)).reshape(Bn, 128)
    z = jnp.dot(y, p["Wl"].T, precision=lax.Precision.HIGHEST) + p["bl"]
    z = _bn_train(z, p["gl"], p["btl"], (0,))
    return jax.nn.softmax(z, axis=1)


def cnn_ws_reference(im1, im2, p):
    d1 = _ref_branch(im1.reshape(-1, 1, IMG, IMG), p)
    d2 = _ref_branch(im2.reshape(-1, 1, IMG, IMG), p)
    d = jnp.concatenate([d1, d2], axis=1)
    z = jnp.dot(d, p["Wp"].T, precision=lax.Precision.HIGHEST) + p["bp"]
    z = _bn_train(z, p["gp"], p["btp"], (0,))
    return jax.nn.softmax(z, axis=1)


if __name__ == "__main__":
    B = 2
    k1, k2 = jax.random.split(jax.random.PRNGKey(0))
    im1 = jax.random.normal(k1, (B, 1, IMG, IMG), jnp.float32)
    im2 = jax.random.normal(k2, (B, 1, IMG, IMG), jnp.float32)

    p = init_params()
    q = prep_params(p)

    fwd = jax.jit(lambda a, b: cnn_ws_forward(a, b, q)[2])
    target = fwd(im1, im2)
    jax.block_until_ready(target)

    assert target.shape == (B, 2)
    assert bool(jnp.isfinite(target).all())

    ref = jax.jit(lambda a, b: cnn_ws_reference(a, b, p))(im1, im2)
    np.testing.assert_allclose(np.asarray(target), np.asarray(ref),
                               rtol=1e-2, atol=1e-3)
    print("KERNEL_OK")
</pallas_src>

<mosaic_0001>
module attributes {stable_mosaic.version = 11 : i64} {
  func.func @cnn_ws_kernel(%arg0: i32, %arg1: memref<2x512xf32, #tpu.memory_space<vmem>>, %arg2: memref<1x392xf32, #tpu.memory_space<vmem>>, %arg3: memref<16x9xf32, #tpu.memory_space<vmem>>, %arg4: memref<16x1xf32, #tpu.memory_space<vmem>>, %arg5: memref<16x1xf32, #tpu.memory_space<vmem>>, %arg6: memref<32x144xf32, #tpu.memory_space<vmem>>, %arg7: memref<32x1xf32, #tpu.memory_space<vmem>>, %arg8: memref<10x128xf32, #tpu.memory_space<vmem>>, %arg9: memref<10x1xf32, #tpu.memory_space<vmem>>, %arg10: memref<10x1xf32, #tpu.memory_space<vmem>>, %arg11: memref<10x1xf32, #tpu.memory_space<vmem>>, %arg12: memref<2x20xf32, #tpu.memory_space<vmem>>, %arg13: memref<2x1xf32, #tpu.memory_space<vmem>>, %arg14: memref<2x1xf32, #tpu.memory_space<vmem>>, %arg15: memref<2x1xf32, #tpu.memory_space<vmem>>, %arg16: memref<2x2xf32, #tpu.memory_space<vmem>>) attributes {dimension_semantics = [#tpu.dimension_semantics<arbitrary>], iteration_bounds = array<i64: 1>, scalar_prefetch = 0 : i64, scratch_operands = 0 : i64, tpu.core_type = #tpu.core_type<tc>, window_params = [{pipeline_mode = #tpu.pipeline_mode<synchronous>, transform_indices = @transform_0, window_bounds = array<i64: 2, 512>}, {pipeline_mode = #tpu.pipeline_mode<synchronous>, transform_indices = @transform_1, window_bounds = array<i64: 1, 392>}, {pipeline_mode = #tpu.pipeline_mode<synchronous>, transform_indices = @transform_2, window_bounds = array<i64: 16, 9>}, {pipeline_mode = #tpu.pipeline_mode<synchronous>, transform_indices = @transform_3, window_bounds = array<i64: 16, 1>}, {pipeline_mode = #tpu.pipeline_mode<synchronous>, transform_indices = @transform_4, window_bounds = array<i64: 16, 1>}, {pipeline_mode = #tpu.pipeline_mode<synchronous>, transform_indices = @transform_5, window_bounds = array<i64: 32, 144>}, {pipeline_mode = #tpu.pipeline_mode<synchronous>, transform_indices = @transform_6, window_bounds = array<i64: 32, 1>}, {pipeline_mode = #tpu.pipeline_mode<synchronous>, transform_indices = @transform_7, window_bounds = array<i64: 10, 128>}, {pipeline_mode = #tpu.pipeline_mode<synchronous>, transform_indices = @transform_8, window_bounds = array<i64: 10, 1>}, {pipeline_mode = #tpu.pipeline_mode<synchronous>, transform_indices = @transform_9, window_bounds = array<i64: 10, 1>}, {pipeline_mode = #tpu.pipeline_mode<synchronous>, transform_indices = @transform_10, window_bounds = array<i64: 10, 1>}, {pipeline_mode = #tpu.pipeline_mode<synchronous>, transform_indices = @transform_11, window_bounds = array<i64: 2, 20>}, {pipeline_mode = #tpu.pipeline_mode<synchronous>, transform_indices = @transform_12, window_bounds = array<i64: 2, 1>}, {pipeline_mode = #tpu.pipeline_mode<synchronous>, transform_indices = @transform_13, window_bounds = array<i64: 2, 1>}, {pipeline_mode = #tpu.pipeline_mode<synchronous>, transform_indices = @transform_14, window_bounds = array<i64: 2, 1>}, {pipeline_mode = #tpu.pipeline_mode<synchronous>, transform_indices = @transform_15, window_bounds = array<i64: 2, 2>}]} {
    %c0 = arith.constant 0 : index
    %c0_0 = arith.constant 0 : index
    %0 = vector.load %arg2[%c0, %c0_0] : memref<1x392xf32, #tpu.memory_space<vmem>>, vector<1x392xf32>
    %c0_1 = arith.constant 0 : index
    %c0_2 = arith.constant 0 : index
    %1 = vector.load %arg3[%c0_1, %c0_2] : memref<16x9xf32, #tpu.memory_space<vmem>>, vector<16x9xf32>
    %c0_3 = arith.constant 0 : index
    %c0_4 = arith.constant 0 : index
    %2 = vector.load %arg4[%c0_3, %c0_4] : memref<16x1xf32, #tpu.memory_space<vmem>>, vector<16x1xf32>
    %c0_5 = arith.constant 0 : index
    %c0_6 = arith.constant 0 : index
    %3 = vector.load %arg5[%c0_5, %c0_6] : memref<16x1xf32, #tpu.memory_space<vmem>>, vector<16x1xf32>
    %c0_7 = arith.constant 0 : index
    %c0_8 = arith.constant 0 : index
    %4 = vector.load %arg6[%c0_7, %c0_8] : memref<32x144xf32, #tpu.memory_space<vmem>>, vector<32x144xf32>
    %c0_9 = arith.constant 0 : index
    %c0_10 = arith.constant 0 : index
    %5 = vector.load %arg7[%c0_9, %c0_10] : memref<32x1xf32, #tpu.memory_space<vmem>>, vector<32x1xf32>
    %c0_11 = arith.constant 0 : index
    %c0_12 = arith.constant 0 : index
    %6 = vector.load %arg1[%c0_11, %c0_12] : memref<2x512xf32, #tpu.memory_space<vmem>>, vector<1x512xf32>
    %7 = vector.extract_strided_slice %6 {offsets = [0, 0], sizes = [1, 392], strides = [1, 1]} : vector<1x512xf32> to vector<1x392xf32>
    %8 = vector.extract_strided_slice %1 {offsets = [0, 0], sizes = [16, 1], strides = [1, 1]} : vector<16x9xf32> to vector<16x1xf32>
    %9 = vector.broadcast %7 : vector<1x392xf32> to vector<16x392xf32>
    %10 = vector.broadcast %8 : vector<16x1xf32> to vector<16x392xf32>
    %11 = arith.mulf %9, %10 : vector<16x392xf32>
    %12 = vector.extract_strided_slice %6 {offsets = [0, 1], sizes = [1, 392], strides = [1, 1]} : vector<1x512xf32> to vector<1x392xf32>
    %13 = vector.extract_strided_slice %1 {offsets = [0, 1], sizes = [16, 1], strides = [1, 1]} : vector<16x9xf32> to vector<16x1xf32>
    %14 = vector.broadcast %12 : vector<1x392xf32> to vector<16x392xf32>
    %15 = vector.broadcast %13 : vector<16x1xf32> to vector<16x392xf32>
    %16 = arith.mulf %14, %15 : vector<16x392xf32>
    %17 = arith.addf %11, %16 : vector<16x392xf32>
    %18 = vector.extract_strided_slice %6 {offsets = [0, 2], sizes = [1, 392], strides = [1, 1]} : vector<1x512xf32> to vector<1x392xf32>
    %19 = vector.extract_strided_slice %1 {offsets = [0, 2], sizes = [16, 1], strides = [1, 1]} : vector<16x9xf32> to vector<16x1xf32>
    %20 = vector.broadcast %18 : vector<1x392xf32> to vector<16x392xf32>
    %21 = vector.broadcast %19 : vector<16x1xf32> to vector<16x392xf32>
    %22 = arith.mulf %20, %21 : vector<16x392xf32>
    %23 = arith.addf %17, %22 : vector<16x392xf32>
    %24 = vector.extract_strided_slice %6 {offsets = [0, 14], sizes = [1, 392], strides = [1, 1]} : vector<1x512xf32> to vector<1x392xf32>
    %25 = vector.extract_strided_slice %1 {offsets = [0, 3], sizes = [16, 1], strides = [1, 1]} : vector<16x9xf32> to vector<16x1xf32>
    %26 = vector.broadcast %24 : vector<1x392xf32> to vector<16x392xf32>
    %27 = vector.broadcast %25 : vector<16x1xf32> to vector<16x392xf32>
    %28 = arith.mulf %26, %27 : vector<16x392xf32>
    %29 = arith.addf %23, %28 : vector<16x392xf32>
    %30 = vector.extract_strided_slice %6 {offsets = [0, 15], sizes = [1, 392], strides = [1, 1]} : vector<1x512xf32> to vector<1x392xf32>
    %31 = vector.extract_strided_slice %1 {offsets = [0, 4], sizes = [16, 1], strides = [1, 1]} : vector<16x9xf32> to vector<16x1xf32>
    %32 = vector.broadcast %30 : vector<1x392xf32> to vector<16x392xf32>
    %33 = vector.broadcast %31 : vector<16x1xf32> to vector<16x392xf32>
    %34 = arith.mulf %32, %33 : vector<16x392xf32>
    %35 = arith.addf %29, %34 : vector<16x392xf32>
    %36 = vector.extract_strided_slice %6 {offsets = [0, 16], sizes = [1, 392], strides = [1, 1]} : vector<1x512xf32> to vector<1x392xf32>
    %37 = vector.extract_strided_slice %1 {offsets = [0, 5], sizes = [16, 1], strides = [1, 1]} : vector<16x9xf32> to vector<16x1xf32>
    %38 = vector.broadcast %36 : vector<1x392xf32> to vector<16x392xf32>
    %39 = vector.broadcast %37 : vector<16x1xf32> to vector<16x392xf32>
    %40 = arith.mulf %38, %39 : vector<16x392xf32>
    %41 = arith.addf %35, %40 : vector<16x392xf32>
    %42 = vector.extract_strided_slice %6 {offsets = [0, 28], sizes = [1, 392], strides = [1, 1]} : vector<1x512xf32> to vector<1x392xf32>
    %43 = vector.extract_strided_slice %1 {offsets = [0, 6], sizes = [16, 1], strides = [1, 1]} : vector<16x9xf32> to vector<16x1xf32>
    %44 = vector.broadcast %42 : vector<1x392xf32> to vector<16x392xf32>
    %45 = vector.broadcast %43 : vector<16x1xf32> to vector<16x392xf32>
    %46 = arith.mulf %44, %45 : vector<16x392xf32>
    %47 = arith.addf %41, %46 : vector<16x392xf32>
    %48 = vector.extract_strided_slice %6 {offsets = [0, 29], sizes = [1, 392], strides = [1, 1]} : vector<1x512xf32> to vector<1x392xf32>
    %49 = vector.extract_strided_slice %1 {offsets = [0, 7], sizes = [16, 1], strides = [1, 1]} : vector<16x9xf32> to vector<16x1xf32>
    %50 = vector.broadcast %48 : vector<1x392xf32> to vector<16x392xf32>
    %51 = vector.broadcast %49 : vector<16x1xf32> to vector<16x392xf32>
    %52 = arith.mulf %50, %51 : vector<16x392xf32>
    %53 = arith.addf %47, %52 : vector<16x392xf32>
    %54 = vector.extract_strided_slice %6 {offsets = [0, 30], sizes = [1, 392], strides = [1, 1]} : vector<1x512xf32> to vector<1x392xf32>
    %55 = vector.extract_strided_slice %1 {offsets = [0, 8], sizes = [16, 1], strides = [1, 1]} : vector<16x9xf32> to vector<16x1xf32>
    %56 = vector.broadcast %54 : vector<1x392xf32> to vector<16x392xf32>
    %57 = vector.broadcast %55 : vector<16x1xf32> to vector<16x392xf32>
    %58 = arith.mulf %56, %57 : vector<16x392xf32>
    %59 = arith.addf %53, %58 : vector<16x392xf32>
    %60 = vector.broadcast %0 : vector<1x392xf32> to vector<16x392xf32>
    %61 = arith.mulf %59, %60 : vector<16x392xf32>
    %cst = arith.constant dense<0.000000e+00> : vector<16xf32>
    %62 = vector.multi_reduction <add>, %61, %cst [1] : vector<16x392xf32> to vector<16xf32>
    %63 = vector.shape_cast %62 : vector<16xf32> to vector<16x1xf32>
    %cst_13 = arith.constant 2.880000e+02 : f32
    %64 = vector.broadcast %cst_13 : f32 to vector<16x1xf32>
    %65 = arith.divf %63, %64 : vector<16x1xf32>
    %66 = arith.mulf %61, %61 : vector<16x392xf32>
    %cst_14 = arith.constant dense<0.000000e+00> : vector<16xf32>
    %67 = vector.multi_reduction <add>, %66, %cst_14 [1] : vector<16x392xf32> to vector<16xf32>
    %68 = vector.shape_cast %67 : vector<16xf32> to vector<16x1xf32>
    %cst_15 = arith.constant 2.880000e+02 : f32
    %69 = vector.broadcast %cst_15 : f32 to vector<16x1xf32>
    %70 = arith.divf %68, %69 : vector<16x1xf32>
    %71 = arith.mulf %65, %65 : vector<16x1xf32>
    %72 = arith.subf %70, %71 : vector<16x1xf32>
    %cst_16 = arith.constant 0.000000e+00 : f32
    %73 = vector.broadcast %cst_16 : f32 to vector<16x1xf32>
    %74 = arith.maximumf %72, %73 : vector<16x1xf32>
    %cst_17 = arith.constant 9.99999974E-6 : f32
    %75 = vector.broadcast %cst_17 : f32 to vector<16x1xf32>
    %76 = arith.addf %74, %75 : vector<16x1xf32>
    %77 = math.rsqrt %76 : vector<16x1xf32>
    %78 = arith.mulf %2, %77 : vector<16x1xf32>
    %79 = arith.mulf %65, %78 : vector<16x1xf32>
    %80 = arith.subf %3, %79 : vector<16x1xf32>
    %81 = vector.extract_strided_slice %61 {offsets = [0, 0], sizes = [16, 391], strides = [1, 1]} : vector<16x392xf32> to vector<16x391xf32>
    %82 = vector.extract_strided_slice %61 {offsets = [0, 1], sizes = [16, 391], strides = [1, 1]} : vector<16x392xf32> to vector<16x391xf32>
    %83 = arith.maximumf %81, %82 : vector<16x391xf32>
    %84 = vector.extract_strided_slice %83 {offsets = [0, 0], sizes = [16, 377], strides = [1, 1]} : vector<16x391xf32> to vector<16x377xf32>
    %85 = vector.extract_strided_slice %83 {offsets = [0, 14], sizes = [16, 377], strides = [1, 1]} : vector<16x391xf32> to vector<16x377xf32>
    %86 = arith.maximumf %84, %85 : vector<16x377xf32>
    %87 = vector.broadcast %78 : vector<16x1xf32> to vector<16x377xf32>
    %88 = arith.mulf %86, %87 : vector<16x377xf32>
    %89 = vector.broadcast %80 : vector<16x1xf32> to vector<16x377xf32>
    %90 = arith.addf %88, %89 : vector<16x377xf32>
    %cst_18 = arith.constant 0.000000e+00 : f32
    %91 = vector.broadcast %cst_18 : f32 to vector<16x377xf32>
    %92 = arith.maximumf %90, %91 : vector<16x377xf32>
    %93 = vector.extract_strided_slice %92 {offsets = [0, 0], sizes = [16, 317], strides = [1, 1]} : vector<16x377xf32> to vector<16x317xf32>
    %94 = vector.extract_strided_slice %92 {offsets = [0, 2], sizes = [16, 317], strides = [1, 1]} : vector<16x377xf32> to vector<16x317xf32>
    %95 = vector.extract_strided_slice %92 {offsets = [0, 4], sizes = [16, 317], strides = [1, 1]} : vector<16x377xf32> to vector<16x317xf32>
    %96 = vector.extract_strided_slice %92 {offsets = [0, 28], sizes = [16, 317], strides = [1, 1]} : vector<16x377xf32> to vector<16x317xf32>
    %97 = vector.extract_strided_slice %92 {offsets = [0, 30], sizes = [16, 317], strides = [1, 1]} : vector<16x377xf32> to vector<16x317xf32>
    %98 = vector.extract_strided_slice %92 {offsets = [0, 32], sizes = [16, 317], strides = [1, 1]} : vector<16x377xf32> to vector<16x317xf32>
    %99 = vector.extract_strided_slice %92 {offsets = [0, 56], sizes = [16, 317], strides = [1, 1]} : vector<16x377xf32> to vector<16x317xf32>
    %100 = vector.extract_strided_slice %92 {offsets = [0, 58], sizes = [16, 317], strides = [1, 1]} : vector<16x377xf32> to vector<16x317xf32>
    %101 = vector.extract_strided_slice %92 {offsets = [0, 60], sizes = [16, 317], strides = [1, 1]} : vector<16x377xf32> to vector<16x317xf32>
    %102 = tpu.concatenate %93, %94, %95, %96, %97, %98, %99, %100, %101 in 0 : vector<16x317xf32>, vector<16x317xf32>, vector<16x317xf32>, vector<16x317xf32>, vector<16x317xf32>, vector<16x317xf32>, vector<16x317xf32>, vector<16x317xf32>, vector<16x317xf32> -> vector<144x317xf32>
    %cst_19 = arith.constant dense<0.000000e+00> : vector<32x317xf32>
    %103 = tpu.matmul %4, %102, %cst_19 {dimension_numbers = #tpu.dot_dimension_numbers<[1], [0], [0], [1], [0, 0, 1, 1], [], []>} : vector<32x144xf32>, vector<144x317xf32>, vector<32x317xf32> -> vector<32x317xf32>
    %104 = vector.broadcast %5 : vector<32x1xf32> to vector<32x317xf32>
    %105 = arith.addf %103, %104 : vector<32x317xf32>
    %106 = vector.extract_strided_slice %105 {offsets = [0, 0], sizes = [32, 287], strides = [1, 1]} : vector<32x317xf32> to vector<32x287xf32>
    %107 = vector.extract_strided_slice %105 {offsets = [0, 2], sizes = [32, 287], strides = [1, 1]} : vector<32x317xf32> to vector<32x287xf32>
    %108 = arith.maximumf %106, %107 : vector<32x287xf32>
    %109 = vector.extract_strided_slice %105 {offsets = [0, 28], sizes = [32, 287], strides = [1, 1]} : vector<32x317xf32> to vector<32x287xf32>
    %110 = arith.maximumf %108, %109 : vector<32x287xf32>
    %111 = vector.extract_strided_slice %105 {offsets = [0, 30], sizes = [32, 287], strides = [1, 1]} : vector<32x317xf32> to vector<32x287xf32>
    %112 = arith.maximumf %110, %111 : vector<32x287xf32>
    %113 = vector.extract_strided_slice %112 {offsets = [0, 0], sizes = [32, 1], strides = [1, 1]} : vector<32x287xf32> to vector<32x1xf32>
    %114 = vector.extract_strided_slice %112 {offsets = [0, 196], sizes = [32, 1], strides = [1, 1]} : vector<32x287xf32> to vector<32x1xf32>
    %115 = tpu.concatenate %113, %114 in 1 : vector<32x1xf32>, vector<32x1xf32> -> vector<32x2xf32>
    %116 = vector.extract_strided_slice %112 {offsets = [0, 4], sizes = [32, 1], strides = [1, 1]} : vector<32x287xf32> to vector<32x1xf32>
    %117 = vector.extract_strided_slice %112 {offsets = [0, 200], sizes = [32, 1], strides = [1, 1]} : vector<32x287xf32> to vector<32x1xf32>
    %118 = tpu.concatenate %116, %117 in 1 : vector<32x1xf32>, vector<32x1xf32> -> vector<32x2xf32>
    %119 = vector.extract_strided_slice %112 {offsets = [0, 56], sizes = [32, 1], strides = [1, 1]} : vector<32x287xf32> to vector<32x1xf32>
    %120 = vector.extract_strided_slice %112 {offsets = [0, 252], sizes = [32, 1], strides = [1, 1]} : vector<32x287xf32> to vector<32x1xf32>
    %121 = tpu.concatenate %119, %120 in 1 : vector<32x1xf32>, vector<32x1xf32> -> vector<32x2xf32>
    %122 = vector.extract_strided_slice %112 {offsets = [0, 60], sizes = [32, 1], strides = [1, 1]} : vector<32x287xf32> to vector<32x1xf32>
    %123 = vector.extract_strided_slice %112 {offsets = [0, 256], sizes = [32, 1], strides = [1, 1]} : vector<32x287xf32> to vector<32x1xf32>
    %124 = tpu.concatenate %122, %123 in 1 : vector<32x1xf32>, vector<32x1xf32> -> vector<32x2xf32>
    %125 = tpu.concatenate %115, %118, %121, %124 in 0 : vector<32x2xf32>, vector<32x2xf32>, vector<32x2xf32>, vector<32x2xf32> -> vector<128x2xf32>
    %c1 = arith.constant 1 : index
    %c0_20 = arith.constant 0 : index
    %126 = vector.load %arg1[%c1, %c0_20] : memref<2x512xf32, #tpu.memory_space<vmem>>, vector<1x512xf32>
    %127 = vector.extract_strided_slice %126 {offsets = [0, 0], sizes = [1, 392], strides = [1, 1]} : vector<1x512xf32> to vector<1x392xf32>
    %128 = vector.extract_strided_slice %1 {offsets = [0, 0], sizes = [16, 1], strides = [1, 1]} : vector<16x9xf32> to vector<16x1xf32>
    %129 = vector.broadcast %127 : vector<1x392xf32> to vector<16x392xf32>
    %130 = vector.broadcast %128 : vector<16x1xf32> to vector<16x392xf32>
    %131 = arith.mulf %129, %130 : vector<16x392xf32>
    %132 = vector.extract_strided_slice %126 {offsets = [0, 1], sizes = [1, 392], strides = [1, 1]} : vector<1x512xf32> to vector<1x392xf32>
    %133 = vector.extract_strided_slice %1 {offsets = [0, 1], sizes = [16, 1], strides = [1, 1]} : vector<16x9xf32> to vector<16x1xf32>
    %134 = vector.broadcast %132 : vector<1x392xf32> to vector<16x392xf32>
    %135 = vector.broadcast %133 : vector<16x1xf32> to vector<16x392xf32>
    %136 = arith.mulf %134, %135 : vector<16x392xf32>
    %137 = arith.addf %131, %136 : vector<16x392xf32>
    %138 = vector.extract_strided_slice %126 {offsets = [0, 2], sizes = [1, 392], strides = [1, 1]} : vector<1x512xf32> to vector<1x392xf32>
    %139 = vector.extract_strided_slice %1 {offsets = [0, 2], sizes = [16, 1], strides = [1, 1]} : vector<16x9xf32> to vector<16x1xf32>
    %140 = vector.broadcast %138 : vector<1x392xf32> to vector<16x392xf32>
    %141 = vector.broadcast %139 : vector<16x1xf32> to vector<16x392xf32>
    %142 = arith.mulf %140, %141 : vector<16x392xf32>
    %143 = arith.addf %137, %142 : vector<16x392xf32>
    %144 = vector.extract_strided_slice %126 {offsets = [0, 14], sizes = [1, 392], strides = [1, 1]} : vector<1x512xf32> to vector<1x392xf32>
    %145 = vector.extract_strided_slice %1 {offsets = [0, 3], sizes = [16, 1], strides = [1, 1]} : vector<16x9xf32> to vector<16x1xf32>
    %146 = vector.broadcast %144 : vector<1x392xf32> to vector<16x392xf32>
    %147 = vector.broadcast %145 : vector<16x1xf32> to vector<16x392xf32>
    %148 = arith.mulf %146, %147 : vector<16x392xf32>
    %149 = arith.addf %143, %148 : vector<16x392xf32>
    %150 = vector.extract_strided_slice %126 {offsets = [0, 15], sizes = [1, 392], strides = [1, 1]} : vector<1x512xf32> to vector<1x392xf32>
    %151 = vector.extract_strided_slice %1 {offsets = [0, 4], sizes = [16, 1], strides = [1, 1]} : vector<16x9xf32> to vector<16x1xf32>
    %152 = vector.broadcast %150 : vector<1x392xf32> to vector<16x392xf32>
    %153 = vector.broadcast %151 : vector<16x1xf32> to vector<16x392xf32>
    %154 = arith.mulf %152, %153 : vector<16x392xf32>
    %155 = arith.addf %149, %154 : vector<16x392xf32>
    %156 = vector.extract_strided_slice %126 {offsets = [0, 16], sizes = [1, 392], strides = [1, 1]} : vector<1x512xf32> to vector<1x392xf32>
    %157 = vector.extract_strided_slice %1 {offsets = [0, 5], sizes = [16, 1], strides = [1, 1]} : vector<16x9xf32> to vector<16x1xf32>
    %158 = vector.broadcast %156 : vector<1x392xf32> to vector<16x392xf32>
    %159 = vector.broadcast %157 : vector<16x1xf32> to vector<16x392xf32>
    %160 = arith.mulf %158, %159 : vector<16x392xf32>
    %161 = arith.addf %155, %160 : vector<16x392xf32>
    %162 = vector.extract_strided_slice %126 {offsets = [0, 28], sizes = [1, 392], strides = [1, 1]} : vector<1x512xf32> to vector<1x392xf32>
    %163 = vector.extract_strided_slice %1 {offsets = [0, 6], sizes = [16, 1], strides = [1, 1]} : vector<16x9xf32> to vector<16x1xf32>
    %164 = vector.broadcast %162 : vector<1x392xf32> to vector<16x392xf32>
    %165 = vector.broadcast %163 : vector<16x1xf32> to vector<16x392xf32>
    %166 = arith.mulf %164, %165 : vector<16x392xf32>
    %167 = arith.addf %161, %166 : vector<16x392xf32>
    %168 = vector.extract_strided_slice %126 {offsets = [0, 29], sizes = [1, 392], strides = [1, 1]} : vector<1x512xf32> to vector<1x392xf32>
    %169 = vector.extract_strided_slice %1 {offsets = [0, 7], sizes = [16, 1], strides = [1, 1]} : vector<16x9xf32> to vector<16x1xf32>
    %170 = vector.broadcast %168 : vector<1x392xf32> to vector<16x392xf32>
    %171 = vector.broadcast %169 : vector<16x1xf32> to vector<16x392xf32>
    %172 = arith.mulf %170, %171 : vector<16x392xf32>
    %173 = arith.addf %167, %172 : vector<16x392xf32>
    %174 = vector.extract_strided_slice %126 {offsets = [0, 30], sizes = [1, 392], strides = [1, 1]} : vector<1x512xf32> to vector<1x392xf32>
    %175 = vector.extract_strided_slice %1 {offsets = [0, 8], sizes = [16, 1], strides = [1, 1]} : vector<16x9xf32> to vector<16x1xf32>
    %176 = vector.broadcast %174 : vector<1x392xf32> to vector<16x392xf32>
    %177 = vector.broadcast %175 : vector<16x1xf32> to vector<16x392xf32>
    %178 = arith.mulf %176, %177 : vector<16x392xf32>
    %179 = arith.addf %173, %178 : vector<16x392xf32>
    %180 = vector.broadcast %0 : vector<1x392xf32> to vector<16x392xf32>
    %181 = arith.mulf %179, %180 : vector<16x392xf32>
    %cst_21 = arith.constant dense<0.000000e+00> : vector<16xf32>
    %182 = vector.multi_reduction <add>, %181, %cst_21 [1] : vector<16x392xf32> to vector<16xf32>
    %183 = vector.shape_cast %182 : vector<16xf32> to vector<16x1xf32>
    %cst_22 = arith.constant 2.880000e+02 : f32
    %184 = vector.broadcast %cst_22 : f32 to vector<16x1xf32>
    %185 = arith.divf %183, %184 : vector<16x1xf32>
    %186 = arith.mulf %181, %181 : vector<16x392xf32>
    %cst_23 = arith.constant dense<0.000000e+00> : vector<16xf32>
    %187 = vector.multi_reduction <add>, %186, %cst_23 [1] : vector<16x392xf32> to vector<16xf32>
    %188 = vector.shape_cast %187 : vector<16xf32> to vector<16x1xf32>
    %cst_24 = arith.constant 2.880000e+02 : f32
    %189 = vector.broadcast %cst_24 : f32 to vector<16x1xf32>
    %190 = arith.divf %188, %189 : vector<16x1xf32>
    %191 = arith.mulf %185, %185 : vector<16x1xf32>
    %192 = arith.subf %190, %191 : vector<16x1xf32>
    %cst_25 = arith.constant 0.000000e+00 : f32
    %193 = vector.broadcast %cst_25 : f32 to vector<16x1xf32>
    %194 = arith.maximumf %192, %193 : vector<16x1xf32>
    %cst_26 = arith.constant 9.99999974E-6 : f32
    %195 = vector.broadcast %cst_26 : f32 to vector<16x1xf32>
    %196 = arith.addf %194, %195 : vector<16x1xf32>
    %197 = math.rsqrt %196 : vector<16x1xf32>
    %198 = arith.mulf %2, %197 : vector<16x1xf32>
    %199 = arith.mulf %185, %198 : vector<16x1xf32>
    %200 = arith.subf %3, %199 : vector<16x1xf32>
    %201 = vector.extract_strided_slice %181 {offsets = [0, 0], sizes = [16, 391], strides = [1, 1]} : vector<16x392xf32> to vector<16x391xf32>
    %202 = vector.extract_strided_slice %181 {offsets = [0, 1], sizes = [16, 391], strides = [1, 1]} : vector<16x392xf32> to vector<16x391xf32>
    %203 = arith.maximumf %201, %202 : vector<16x391xf32>
    %204 = vector.extract_strided_slice %203 {offsets = [0, 0], sizes = [16, 377], strides = [1, 1]} : vector<16x391xf32> to vector<16x377xf32>
    %205 = vector.extract_strided_slice %203 {offsets = [0, 14], sizes = [16, 377], strides = [1, 1]} : vector<16x391xf32> to vector<16x377xf32>
    %206 = arith.maximumf %204, %205 : vector<16x377xf32>
    %207 = vector.broadcast %198 : vector<16x1xf32> to vector<16x377xf32>
    %208 = arith.mulf %206, %207 : vector<16x377xf32>
    %209 = vector.broadcast %200 : vector<16x1xf32> to vector<16x377xf32>
    %210 = arith.addf %208, %209 : vector<16x377xf32>
    %cst_27 = arith.constant 0.000000e+00 : f32
    %211 = vector.broadcast %cst_27 : f32 to vector<16x377xf32>
    %212 = arith.maximumf %210, %211 : vector<16x377xf32>
    %213 = vector.extract_strided_slice %212 {offsets = [0, 0], sizes = [16, 317], strides = [1, 1]} : vector<16x377xf32> to vector<16x317xf32>
    %214 = vector.extract_strided_slice %212 {offsets = [0, 2], sizes = [16, 317], strides = [1, 1]} : vector<16x377xf32> to vector<16x317xf32>
    %215 = vector.extract_strided_slice %212 {offsets = [0, 4], sizes = [16, 317], strides = [1, 1]} : vector<16x377xf32> to vector<16x317xf32>
    %216 = vector.extract_strided_slice %212 {offsets = [0, 28], sizes = [16, 317], strides = [1, 1]} : vector<16x377xf32> to vector<16x317xf32>
    %217 = vector.extract_strided_slice %212 {offsets = [0, 30], sizes = [16, 317], strides = [1, 1]} : vector<16x377xf32> to vector<16x317xf32>
    %218 = vector.extract_strided_slice %212 {offsets = [0, 32], sizes = [16, 317], strides = [1, 1]} : vector<16x377xf32> to vector<16x317xf32>
    %219 = vector.extract_strided_slice %212 {offsets = [0, 56], sizes = [16, 317], strides = [1, 1]} : vector<16x377xf32> to vector<16x317xf32>
    %220 = vector.extract_strided_slice %212 {offsets = [0, 58], sizes = [16, 317], strides = [1, 1]} : vector<16x377xf32> to vector<16x317xf32>
    %221 = vector.extract_strided_slice %212 {offsets = [0, 60], sizes = [16, 317], strides = [1, 1]} : vector<16x377xf32> to vector<16x317xf32>
    %222 = tpu.concatenate %213, %214, %215, %216, %217, %218, %219, %220, %221 in 0 : vector<16x317xf32>, vector<16x317xf32>, vector<16x317xf32>, vector<16x317xf32>, vector<16x317xf32>, vector<16x317xf32>, vector<16x317xf32>, vector<16x317xf32>, vector<16x317xf32> -> vector<144x317xf32>
    %cst_28 = arith.constant dense<0.000000e+00> : vector<32x317xf32>
    %223 = tpu.matmul %4, %222, %cst_28 {dimension_numbers = #tpu.dot_dimension_numbers<[1], [0], [0], [1], [0, 0, 1, 1], [], []>} : vector<32x144xf32>, vector<144x317xf32>, vector<32x317xf32> -> vector<32x317xf32>
    %224 = vector.broadcast %5 : vector<32x1xf32> to vector<32x317xf32>
    %225 = arith.addf %223, %224 : vector<32x317xf32>
    %226 = vector.extract_strided_slice %225 {offsets = [0, 0], sizes = [32, 287], strides = [1, 1]} : vector<32x317xf32> to vector<32x287xf32>
    %227 = vector.extract_strided_slice %225 {offsets = [0, 2], sizes = [32, 287], strides = [1, 1]} : vector<32x317xf32> to vector<32x287xf32>
    %228 = arith.maximumf %226, %227 : vector<32x287xf32>
    %229 = vector.extract_strided_slice %225 {offsets = [0, 28], sizes = [32, 287], strides = [1, 1]} : vector<32x317xf32> to vector<32x287xf32>
    %230 = arith.maximumf %228, %229 : vector<32x287xf32>
    %231 = vector.extract_strided_slice %225 {offsets = [0, 30], sizes = [32, 287], strides = [1, 1]} : vector<32x317xf32> to vector<32x287xf32>
    %232 = arith.maximumf %230, %231 : vector<32x287xf32>
    %233 = vector.extract_strided_slice %232 {offsets = [0, 0], sizes = [32, 1], strides = [1, 1]} : vector<32x287xf32> to vector<32x1xf32>
    %234 = vector.extract_strided_slice %232 {offsets = [0, 196], sizes = [32, 1], strides = [1, 1]} : vector<32x287xf32> to vector<32x1xf32>
    %235 = tpu.concatenate %233, %234 in 1 : vector<32x1xf32>, vector<32x1xf32> -> vector<32x2xf32>
    %236 = vector.extract_strided_slice %232 {offsets = [0, 4], sizes = [32, 1], strides = [1, 1]} : vector<32x287xf32> to vector<32x1xf32>
    %237 = vector.extract_strided_slice %232 {offsets = [0, 200], sizes = [32, 1], strides = [1, 1]} : vector<32x287xf32> to vector<32x1xf32>
    %238 = tpu.concatenate %236, %237 in 1 : vector<32x1xf32>, vector<32x1xf32> -> vector<32x2xf32>
    %239 = vector.extract_strided_slice %232 {offsets = [0, 56], sizes = [32, 1], strides = [1, 1]} : vector<32x287xf32> to vector<32x1xf32>
    %240 = vector.extract_strided_slice %232 {offsets = [0, 252], sizes = [32, 1], strides = [1, 1]} : vector<32x287xf32> to vector<32x1xf32>
    %241 = tpu.concatenate %239, %240 in 1 : vector<32x1xf32>, vector<32x1xf32> -> vector<32x2xf32>
    %242 = vector.extract_strided_slice %232 {offsets = [0, 60], sizes = [32, 1], strides = [1, 1]} : vector<32x287xf32> to vector<32x1xf32>
    %243 = vector.extract_strided_slice %232 {offsets = [0, 256], sizes = [32, 1], strides = [1, 1]} : vector<32x287xf32> to vector<32x1xf32>
    %244 = tpu.concatenate %242, %243 in 1 : vector<32x1xf32>, vector<32x1xf32> -> vector<32x2xf32>
    %245 = tpu.concatenate %235, %238, %241, %244 in 0 : vector<32x2xf32>, vector<32x2xf32>, vector<32x2xf32>, vector<32x2xf32> -> vector<128x2xf32>
    %246 = tpu.concatenate %125, %245 in 1 : vector<128x2xf32>, vector<128x2xf32> -> vector<128x4xf32>
    %c0_29 = arith.constant 0 : index
    %c0_30 = arith.constant 0 : index
    %247 = vector.load %arg8[%c0_29, %c0_30] : memref<10x128xf32, #tpu.memory_space<vmem>>, vector<10x128xf32>
    %cst_31 = arith.constant dense<0.000000e+00> : vector<10x4xf32>
    %248 = tpu.matmul %247, %246, %cst_31 {dimension_numbers = #tpu.dot_dimension_numbers<[1], [0], [0], [1], [0, 0, 1, 1], [], []>} : vector<10x128xf32>, vector<128x4xf32>, vector<10x4xf32> -> vector<10x4xf32>
    %c0_32 = arith.constant 0 : index
    %c0_33 = arith.constant 0 : index
    %249 = vector.load %arg9[%c0_32, %c0_33] : memref<10x1xf32, #tpu.memory_space<vmem>>, vector<10x1xf32>
    %250 = vector.broadcast %249 : vector<10x1xf32> to vector<10x4xf32>
    %251 = arith.addf %248, %250 : vector<10x4xf32>
    %252 = vector.extract_strided_slice %251 {offsets = [0, 0], sizes = [10, 2], strides = [1, 1]} : vector<10x4xf32> to vector<10x2xf32>
    %c0_34 = arith.constant 0 : index
    %c0_35 = arith.constant 0 : index
    %253 = vector.load %arg10[%c0_34, %c0_35] : memref<10x1xf32, #tpu.memory_space<vmem>>, vector<10x1xf32>
    %c0_36 = arith.constant 0 : index
    %c0_37 = arith.constant 0 : index
    %254 = vector.load %arg11[%c0_36, %c0_37] : memref<10x1xf32, #tpu.memory_space<vmem>>, vector<10x1xf32>
    %cst_38 = arith.constant dense<0.000000e+00> : vector<10xf32>
    %255 = vector.multi_reduction <add>, %252, %cst_38 [1] : vector<10x2xf32> to vector<10xf32>
    %256 = vector.shape_cast %255 : vector<10xf32> to vector<10x1xf32>
    %cst_39 = arith.constant 2.000000e+00 : f32
    %257 = vector.broadcast %cst_39 : f32 to vector<10x1xf32>
    %258 = arith.divf %256, %257 : vector<10x1xf32>
    %259 = arith.mulf %252, %252 : vector<10x2xf32>
    %cst_40 = arith.constant dense<0.000000e+00> : vector<10xf32>
    %260 = vector.multi_reduction <add>, %259, %cst_40 [1] : vector<10x2xf32> to vector<10xf32>
    %261 = vector.shape_cast %260 : vector<10xf32> to vector<10x1xf32>
    %cst_41 = arith.constant 2.000000e+00 : f32
    %262 = vector.broadcast %cst_41 : f32 to vector<10x1xf32>
    %263 = arith.divf %261, %262 : vector<10x1xf32>
    %264 = arith.mulf %258, %258 : vector<10x1xf32>
    %265 = arith.subf %263, %264 : vector<10x1xf32>
    %cst_42 = arith.constant 0.000000e+00 : f32
    %266 = vector.broadcast %cst_42 : f32 to vector<10x1xf32>
    %267 = arith.maximumf %265, %266 : vector<10x1xf32>
    %268 = vector.broadcast %258 : vector<10x1xf32> to vector<10x2xf32>
    %269 = arith.subf %252, %268 : vector<10x2xf32>
    %270 = vector.broadcast %253 : vector<10x1xf32> to vector<10x2xf32>
    %271 = arith.mulf %270, %269 : vector<10x2xf32>
    %cst_43 = arith.constant 9.99999974E-6 : f32
    %272 = vector.broadcast %cst_43 : f32 to vector<10x1xf32>
    %273 = arith.addf %267, %272 : vector<10x1xf32>
    %274 = math.rsqrt %273 : vector<10x1xf32>
    %275 = vector.broadcast %274 : vector<10x1xf32> to vector<10x2xf32>
    %276 = arith.mulf %271, %275 : vector<10x2xf32>
    %277 = vector.broadcast %254 : vector<10x1xf32> to vector<10x2xf32>
    %278 = arith.addf %276, %277 : vector<10x2xf32>
    %279 = vector.extract_strided_slice %251 {offsets = [0, 2], sizes = [10, 2], strides = [1, 1]} : vector<10x4xf32> to vector<10x2xf32>
    %c0_44 = arith.constant 0 : index
    %c0_45 = arith.constant 0 : index
    %280 = vector.load %arg10[%c0_44, %c0_45] : memref<10x1xf32, #tpu.memory_space<vmem>>, vector<10x1xf32>
    %c0_46 = arith.constant 0 : index
    %c0_47 = arith.constant 0 : index
    %281 = vector.load %arg11[%c0_46, %c0_47] : memref<10x1xf32, #tpu.memory_space<vmem>>, vector<10x1xf32>
    %cst_48 = arith.constant dense<0.000000e+00> : vector<10xf32>
    %282 = vector.multi_reduction <add>, %279, %cst_48 [1] : vector<10x2xf32> to vector<10xf32>
    %283 = vector.shape_cast %282 : vector<10xf32> to vector<10x1xf32>
    %cst_49 = arith.constant 2.000000e+00 : f32
    %284 = vector.broadcast %cst_49 : f32 to vector<10x1xf32>
    %285 = arith.divf %283, %284 : vector<10x1xf32>
    %286 = arith.mulf %279, %279 : vector<10x2xf32>
    %cst_50 = arith.constant dense<0.000000e+00> : vector<10xf32>
    %287 = vector.multi_reduction <add>, %286, %cst_50 [1] : vector<10x2xf32> to vector<10xf32>
    %288 = vector.shape_cast %287 : vector<10xf32> to vector<10x1xf32>
    %cst_51 = arith.constant 2.000000e+00 : f32
    %289 = vector.broadcast %cst_51 : f32 to vector<10x1xf32>
    %290 = arith.divf %288, %289 : vector<10x1xf32>
    %291 = arith.mulf %285, %285 : vector<10x1xf32>
    %292 = arith.subf %290, %291 : vector<10x1xf32>
    %cst_52 = arith.constant 0.000000e+00 : f32
    %293 = vector.broadcast %cst_52 : f32 to vector<10x1xf32>
    %294 = arith.maximumf %292, %293 : vector<10x1xf32>
    %295 = vector.broadcast %285 : vector<10x1xf32> to vector<10x2xf32>
    %296 = arith.subf %279, %295 : vector<10x2xf32>
    %297 = vector.broadcast %280 : vector<10x1xf32> to vector<10x2xf32>
    %298 = arith.mulf %297, %296 : vector<10x2xf32>
    %cst_53 = arith.constant 9.99999974E-6 : f32
    %299 = vector.broadcast %cst_53 : f32 to vector<10x1xf32>
    %300 = arith.addf %294, %299 : vector<10x1xf32>
    %301 = math.rsqrt %300 : vector<10x1xf32>
    %302 = vector.broadcast %301 : vector<10x1xf32> to vector<10x2xf32>
    %303 = arith.mulf %298, %302 : vector<10x2xf32>
    %304 = vector.broadcast %281 : vector<10x1xf32> to vector<10x2xf32>
    %305 = arith.addf %303, %304 : vector<10x2xf32>
    %306 = tpu.concatenate %278, %305 in 1 : vector<10x2xf32>, vector<10x2xf32> -> vector<10x4xf32>
    %cst_54 = arith.constant dense<0xFF800000> : vector<4xf32>
    %307 = vector.multi_reduction <maximumf>, %306, %cst_54 [0] : vector<10x4xf32> to vector<4xf32>
    %308 = vector.shape_cast %307 : vector<4xf32> to vector<1x4xf32>
    %309 = vector.broadcast %308 : vector<1x4xf32> to vector<10x4xf32>
    %310 = arith.subf %306, %309 : vector<10x4xf32>
    %311 = math.exp %310 : vector<10x4xf32>
    %cst_55 = arith.constant dense<0.000000e+00> : vector<4xf32>
    %312 = vector.multi_reduction <add>, %311, %cst_55 [0] : vector<10x4xf32> to vector<4xf32>
    %313 = vector.shape_cast %312 : vector<4xf32> to vector<1x4xf32>
    %314 = vector.broadcast %313 : vector<1x4xf32> to vector<10x4xf32>
    %315 = arith.divf %311, %314 : vector<10x4xf32>
    %316 = vector.extract_strided_slice %315 {offsets = [0, 0], sizes = [10, 2], strides = [1, 1]} : vector<10x4xf32> to vector<10x2xf32>
    %317 = vector.extract_strided_slice %315 {offsets = [0, 2], sizes = [10, 2], strides = [1, 1]} : vector<10x4xf32> to vector<10x2xf32>
    %318 = tpu.concatenate %316, %317 in 0 : vector<10x2xf32>, vector<10x2xf32> -> vector<20x2xf32>
    %c0_56 = arith.constant 0 : index
    %c0_57 = arith.constant 0 : index
    %319 = vector.load %arg12[%c0_56, %c0_57] : memref<2x20xf32, #tpu.memory_space<vmem>>, vector<2x20xf32>
    %cst_58 = arith.constant dense<0.000000e+00> : vector<2x2xf32>
    %320 = tpu.matmul %319, %318, %cst_58 {dimension_numbers = #tpu.dot_dimension_numbers<[1], [0], [0], [1], [0, 0, 1, 1], [], []>} : vector<2x20xf32>, vector<20x2xf32>, vector<2x2xf32> -> vector<2x2xf32>
    %c0_59 = arith.constant 0 : index
    %c0_60 = arith.constant 0 : index
    %321 = vector.load %arg13[%c0_59, %c0_60] : memref<2x1xf32, #tpu.memory_space<vmem>>, vector<2x1xf32>
    %322 = vector.broadcast %321 : vector<2x1xf32> to vector<2x2xf32>
    %323 = arith.addf %320, %322 : vector<2x2xf32>
    %c0_61 = arith.constant 0 : index
    %c0_62 = arith.constant 0 : index
    %324 = vector.load %arg14[%c0_61, %c0_62] : memref<2x1xf32, #tpu.memory_space<vmem>>, vector<2x1xf32>
    %c0_63 = arith.constant 0 : index
    %c0_64 = arith.constant 0 : index
    %325 = vector.load %arg15[%c0_63, %c0_64] : memref<2x1xf32, #tpu.memory_space<vmem>>, vector<2x1xf32>
    %cst_65 = arith.constant dense<0.000000e+00> : vector<2xf32>
    %326 = vector.multi_reduction <add>, %323, %cst_65 [1] : vector<2x2xf32> to vector<2xf32>
    %327 = vector.shape_cast %326 : vector<2xf32> to vector<2x1xf32>
    %cst_66 = arith.constant 2.000000e+00 : f32
    %328 = vector.broadcast %cst_66 : f32 to vector<2x1xf32>
    %329 = arith.divf %327, %328 : vector<2x1xf32>
    %330 = arith.mulf %323, %323 : vector<2x2xf32>
    %cst_67 = arith.constant dense<0.000000e+00> : vector<2xf32>
    %331 = vector.multi_reduction <add>, %330, %cst_67 [1] : vector<2x2xf32> to vector<2xf32>
    %332 = vector.shape_cast %331 : vector<2xf32> to vector<2x1xf32>
    %cst_68 = arith.constant 2.000000e+00 : f32
    %333 = vector.broadcast %cst_68 : f32 to vector<2x1xf32>
    %334 = arith.divf %332, %333 : vector<2x1xf32>
    %335 = arith.mulf %329, %329 : vector<2x1xf32>
    %336 = arith.subf %334, %335 : vector<2x1xf32>
    %cst_69 = arith.constant 0.000000e+00 : f32
    %337 = vector.broadcast %cst_69 : f32 to vector<2x1xf32>
    %338 = arith.maximumf %336, %337 : vector<2x1xf32>
    %339 = vector.broadcast %329 : vector<2x1xf32> to vector<2x2xf32>
    %340 = arith.subf %323, %339 : vector<2x2xf32>
    %341 = vector.broadcast %324 : vector<2x1xf32> to vector<2x2xf32>
    %342 = arith.mulf %341, %340 : vector<2x2xf32>
    %cst_70 = arith.constant 9.99999974E-6 : f32
    %343 = vector.broadcast %cst_70 : f32 to vector<2x1xf32>
    %344 = arith.addf %338, %343 : vector<2x1xf32>
    %345 = math.rsqrt %344 : vector<2x1xf32>
    %346 = vector.broadcast %345 : vector<2x1xf32> to vector<2x2xf32>
    %347 = arith.mulf %342, %346 : vector<2x2xf32>
    %348 = vector.broadcast %325 : vector<2x1xf32> to vector<2x2xf32>
    %349 = arith.addf %347, %348 : vector<2x2xf32>
    %cst_71 = arith.constant dense<0xFF800000> : vector<2xf32>
    %350 = vector.multi_reduction <maximumf>, %349, %cst_71 [0] : vector<2x2xf32> to vector<2xf32>
    %351 = vector.shape_cast %350 : vector<2xf32> to vector<1x2xf32>
    %352 = vector.broadcast %351 : vector<1x2xf32> to vector<2x2xf32>
    %353 = arith.subf %349, %352 : vector<2x2xf32>
    %354 = math.exp %353 : vector<2x2xf32>
    %cst_72 = arith.constant dense<0.000000e+00> : vector<2xf32>
    %355 = vector.multi_reduction <add>, %354, %cst_72 [0] : vector<2x2xf32> to vector<2xf32>
    %356 = vector.shape_cast %355 : vector<2xf32> to vector<1x2xf32>
    %357 = vector.broadcast %356 : vector<1x2xf32> to vector<2x2xf32>
    %358 = arith.divf %354, %357 : vector<2x2xf32>
    %c0_73 = arith.constant 0 : index
    %c0_74 = arith.constant 0 : index
    %359 = vector.load %arg16[%c0_73, %c0_74] : memref<2x2xf32, #tpu.memory_space<vmem>>, vector<2x2xf32>
    tpu.vector_store %arg16[%c0_73, %c0_74], %358 {strides = array<i32>} : memref<2x2xf32, #tpu.memory_space<vmem>>, vector<2x2xf32>,
    return
  }
  func.func @transform_0(%arg0: i32) -> (i32, i32) {
    %c0_i32 = arith.constant 0 : i32
    %c0_i32_0 = arith.constant 0 : i32
    %c0_i32_1 = arith.constant 0 : i32
    return %c0_i32, %c0_i32_0 : i32, i32
  }
  func.func @transform_1(%arg0: i32) -> (i32, i32) {
    %c0_i32 = arith.constant 0 : i32
    %c0_i32_0 = arith.constant 0 : i32
    %c0_i32_1 = arith.constant 0 : i32
    return %c0_i32, %c0_i32_0 : i32, i32
  }
  func.func @transform_2(%arg0: i32) -> (i32, i32) {
    %c0_i32 = arith.constant 0 : i32
    %c0_i32_0 = arith.constant 0 : i32
    %c0_i32_1 = arith.constant 0 : i32
    return %c0_i32, %c0_i32_0 : i32, i32
  }
  func.func @transform_3(%arg0: i32) -> (i32, i32) {
    %c0_i32 = arith.constant 0 : i32
    %c0_i32_0 = arith.constant 0 : i32
    %c0_i32_1 = arith.constant 0 : i32
    return %c0_i32, %c0_i32_0 : i32, i32
  }
  func.func @transform_4(%arg0: i32) -> (i32, i32) {
    %c0_i32 = arith.constant 0 : i32
    %c0_i32_0 = arith.constant 0 : i32
    %c0_i32_1 = arith.constant 0 : i32
    return %c0_i32, %c0_i32_0 : i32, i32
  }
  func.func @transform_5(%arg0: i32) -> (i32, i32) {
    %c0_i32 = arith.constant 0 : i32
    %c0_i32_0 = arith.constant 0 : i32
    %c0_i32_1 = arith.constant 0 : i32
    return %c0_i32, %c0_i32_0 : i32, i32
  }
  func.func @transform_6(%arg0: i32) -> (i32, i32) {
    %c0_i32 = arith.constant 0 : i32
    %c0_i32_0 = arith.constant 0 : i32
    %c0_i32_1 = arith.constant 0 : i32
    return %c0_i32, %c0_i32_0 : i32, i32
  }
  func.func @transform_7(%arg0: i32) -> (i32, i32) {
    %c0_i32 = arith.constant 0 : i32
    %c0_i32_0 = arith.constant 0 : i32
    %c0_i32_1 = arith.constant 0 : i32
    return %c0_i32, %c0_i32_0 : i32, i32
  }
  func.func @transform_8(%arg0: i32) -> (i32, i32) {
    %c0_i32 = arith.constant 0 : i32
    %c0_i32_0 = arith.constant 0 : i32
    %c0_i32_1 = arith.constant 0 : i32
    return %c0_i32, %c0_i32_0 : i32, i32
  }
  func.func @transform_9(%arg0: i32) -> (i32, i32) {
    %c0_i32 = arith.constant 0 : i32
    %c0_i32_0 = arith.constant 0 : i32
    %c0_i32_1 = arith.constant 0 : i32
    return %c0_i32, %c0_i32_0 : i32, i32
  }
  func.func @transform_10(%arg0: i32) -> (i32, i32) {
    %c0_i32 = arith.constant 0 : i32
    %c0_i32_0 = arith.constant 0 : i32
    %c0_i32_1 = arith.constant 0 : i32
    return %c0_i32, %c0_i32_0 : i32, i32
  }
  func.func @transform_11(%arg0: i32) -> (i32, i32) {
    %c0_i32 = arith.constant 0 : i32
    %c0_i32_0 = arith.constant 0 : i32
    %c0_i32_1 = arith.constant 0 : i32
    return %c0_i32, %c0_i32_0 : i32, i32
  }
  func.func @transform_12(%arg0: i32) -> (i32, i32) {
    %c0_i32 = arith.constant 0 : i32
    %c0_i32_0 = arith.constant 0 : i32
    %c0_i32_1 = arith.constant 0 : i32
    return %c0_i32, %c0_i32_0 : i32, i32
  }
  func.func @transform_13(%arg0: i32) -> (i32, i32) {
    %c0_i32 = arith.constant 0 : i32
    %c0_i32_0 = arith.constant 0 : i32
    %c0_i32_1 = arith.constant 0 : i32
    return %c0_i32, %c0_i32_0 : i32, i32
  }
  func.func @transform_14(%arg0: i32) -> (i32, i32) {
    %c0_i32 = arith.constant 0 : i32
    %c0_i32_0 = arith.constant 0 : i32
    %c0_i32_1 = arith.constant 0 : i32
    return %c0_i32, %c0_i32_0 : i32, i32
  }
  func.func @transform_15(%arg0: i32) -> (i32, i32) {
    %c0_i32 = arith.constant 0 : i32
    %c0_i32_0 = arith.constant 0 : i32
    %c0_i32_1 = arith.constant 0 : i32
    return %c0_i32, %c0_i32_0 : i32, i32
  }
}

</mosaic_0001>

<llo_original>
// kernel: _lambda_.1
$region0: #{_lambda_.1}
  #allocation0 [shape = 'u32[]', space=smem, size = 0x4, offset = 0x4, fixed_abs, tag = 'smem constant byte address 0x4 - core index']
  #allocation1 [shape = 'u32[144,128]{1,0:T(1,128)}', space=vmem, size = 0x12000, scoped, tag = 'internal scratch']
  %s0 = inlined_call_operand.vmem [shape: f32[2,512], index: 0, kind: input, shape index: {}]
  %s1 = inlined_call_operand.vmem [shape: f32[1,392], index: 1, kind: input, shape index: {}]
  %s2 = inlined_call_operand.vmem [shape: f32[16,9], index: 2, kind: input, shape index: {}]
  %s3 = inlined_call_operand.vmem [shape: f32[16,1], index: 3, kind: input, shape index: {}]
  %s4 = inlined_call_operand.vmem [shape: f32[16,1], index: 4, kind: input, shape index: {}]
  %s5 = inlined_call_operand.vmem [shape: f32[32,144], index: 5, kind: input, shape index: {}]
  %s6 = inlined_call_operand.vmem [shape: f32[32,1], index: 6, kind: input, shape index: {}]
  %s7 = inlined_call_operand.vmem [shape: f32[10,128], index: 7, kind: input, shape index: {}]
  %s8 = inlined_call_operand.vmem [shape: f32[10,1], index: 8, kind: input, shape index: {}]
  %s9 = inlined_call_operand.vmem [shape: f32[10,1], index: 9, kind: input, shape index: {}]
  %s10 = inlined_call_operand.vmem [shape: f32[10,1], index: 10, kind: input, shape index: {}]
  %s11 = inlined_call_operand.vmem [shape: f32[2,20], index: 11, kind: input, shape index: {}]
  %s12 = inlined_call_operand.vmem [shape: f32[2,1], index: 12, kind: input, shape index: {}]
  %s13 = inlined_call_operand.vmem [shape: f32[2,1], index: 13, kind: input, shape index: {}]
  %s14 = inlined_call_operand.vmem [shape: f32[2,1], index: 14, kind: input, shape index: {}]
  %s15 = inlined_call_operand.vmem [shape: f32[2,2], index: 15, kind: output, shape index: {}]
  %s16 = sld [smem:[#allocation0]]
  $region70: #{_lambda_.1} parent=0
    _
  %s18 = ssub.s32 1, %s16
  %s19 = scalar_select 0, %s18, %s16
  // Predicated region
  $region2: #{_lambda_.1} parent=0 // pred_check
    _
  $region3: #{_lambda_.1} parent=0 // pred_check_branch
    %21 = sbr.rel (0) target = $region5
  $region4: #{_lambda_.1} parent=0 // pred_region
    _
  $region5: #{_lambda_.1} parent=0 // pred_fallthru
    _
  // Predicated region
  $region6: #{_lambda_.1} parent=0 // pred_check
    _
  $region7: #{_lambda_.1} parent=0 // pred_check_branch
    %23 = sbr.rel (0) target = $region9
  $region8: #{_lambda_.1} parent=0 // pred_region
    _
  $region9: #{_lambda_.1} parent=0 // pred_fallthru
    _
  // Predicated region
  $region10: #{_lambda_.1} parent=0 // pred_check
    _
  $region11: #{_lambda_.1} parent=0 // pred_check_branch
    %25 = sbr.rel (0) target = $region13
  $region12: #{_lambda_.1} parent=0 // pred_region
    _
  $region13: #{_lambda_.1} parent=0 // pred_fallthru
    _
  // Predicated region
  $region14: #{_lambda_.1} parent=0 // pred_check
    _
  $region15: #{_lambda_.1} parent=0 // pred_check_branch
    %27 = sbr.rel (0) target = $region17
  $region16: #{_lambda_.1} parent=0 // pred_region
    _
  $region17: #{_lambda_.1} parent=0 // pred_fallthru
    _
  // Predicated region
  $region18: #{_lambda_.1} parent=0 // pred_check
    _
  $region19: #{_lambda_.1} parent=0 // pred_check_branch
    %29 = sbr.rel (0) target = $region21
  $region20: #{_lambda_.1} parent=0 // pred_region
    _
  $region21: #{_lambda_.1} parent=0 // pred_fallthru
    _
  // Predicated region
  $region22: #{_lambda_.1} parent=0 // pred_check
    _
  $region23: #{_lambda_.1} parent=0 // pred_check_branch
    %31 = sbr.rel (0) target = $region25
  $region24: #{_lambda_.1} parent=0 // pred_region
    _
  $region25: #{_lambda_.1} parent=0 // pred_fallthru
    _
  // Predicated region
  $region26: #{_lambda_.1} parent=0 // pred_check
    _
  $region27: #{_lambda_.1} parent=0 // pred_check_branch
    %33 = sbr.rel (0) target = $region29
  $region28: #{_lambda_.1} parent=0 // pred_region
    _
  $region29: #{_lambda_.1} parent=0 // pred_fallthru
    _
  // Predicated region
  $region30: #{_lambda_.1} parent=0 // pred_check
    _
  $region31: #{_lambda_.1} parent=0 // pred_check_branch
    %35 = sbr.rel (0) target = $region33
  $region32: #{_lambda_.1} parent=0 // pred_region
    _
  $region33: #{_lambda_.1} parent=0 // pred_fallthru
    _
  // Predicated region
  $region34: #{_lambda_.1} parent=0 // pred_check
    _
  $region35: #{_lambda_.1} parent=0 // pred_check_branch
    %37 = sbr.rel (0) target = $region37
  $region36: #{_lambda_.1} parent=0 // pred_region
    _
  $region37: #{_lambda_.1} parent=0 // pred_fallthru
    _
  // Predicated region
  $region38: #{_lambda_.1} parent=0 // pred_check
    _
  $region39: #{_lambda_.1} parent=0 // pred_check_branch
    %39 = sbr.rel (0) target = $region41
  $region40: #{_lambda_.1} parent=0 // pred_region
    _
  $region41: #{_lambda_.1} parent=0 // pred_fallthru
    _
  // Predicated region
  $region42: #{_lambda_.1} parent=0 // pred_check
    _
  $region43: #{_lambda_.1} parent=0 // pred_check_branch
    %41 = sbr.rel (0) target = $region45
  $region44: #{_lambda_.1} parent=0 // pred_region
    _
  $region45: #{_lambda_.1} parent=0 // pred_fallthru
    _
  // Predicated region
  $region46: #{_lambda_.1} parent=0 // pred_check
    _
  $region47: #{_lambda_.1} parent=0 // pred_check_branch
    %43 = sbr.rel (0) target = $region49
  $region48: #{_lambda_.1} parent=0 // pred_region
    _
  $region49: #{_lambda_.1} parent=0 // pred_fallthru
    _
  // Predicated region
  $region50: #{_lambda_.1} parent=0 // pred_check
    _
  $region51: #{_lambda_.1} parent=0 // pred_check_branch
    %45 = sbr.rel (0) target = $region53
  $region52: #{_lambda_.1} parent=0 // pred_region
    _
  $region53: #{_lambda_.1} parent=0 // pred_fallthru
    _
  // Predicated region
  $region54: #{_lambda_.1} parent=0 // pred_check
    _
  $region55: #{_lambda_.1} parent=0 // pred_check_branch
    %47 = sbr.rel (0) target = $region57
  $region56: #{_lambda_.1} parent=0 // pred_region
    _
  $region57: #{_lambda_.1} parent=0 // pred_fallthru
    _
  // Predicated region
  $region58: #{_lambda_.1} parent=0 // pred_check
    _
  $region59: #{_lambda_.1} parent=0 // pred_check_branch
    %49 = sbr.rel (0) target = $region61
  $region60: #{_lambda_.1} parent=0 // pred_region
    _
  $region61: #{_lambda_.1} parent=0 // pred_fallthru
    _
  %v50 = vld [vmem:[%s1] sm:$0xf]
  %v51 = vld [vmem:[%s2] sm:$0xff]
  %v52 = vld [vmem:[%s2 + $0x8] sm:$0xff]
  %v53 = vld [vmem:[%s3] sm:$0xff]
  %v54 = vld [vmem:[%s3 + $0x8] sm:$0xff]
  %v55 = vld [vmem:[%s4] sm:$0xff]
  %v56 = vld [vmem:[%s4 + $0x8] sm:$0xff]
  %v57 = vld [vmem:[%s5] sm:$0xff]
  %v58 = vld [vmem:[%s5 + $0x8] sm:$0xff]
  %v59 = vld [vmem:[%s5 + $0x10] sm:$0xff]
  %v60 = vld [vmem:[%s5 + $0x18] sm:$0xff]
  %v61 = vld [vmem:[%s5 + $0x20] sm:$0xff]
  %v62 = vld [vmem:[%s5 + $0x28] sm:$0xff]
  %v63 = vld [vmem:[%s5 + $0x30] sm:$0xff]
  %v64 = vld [vmem:[%s5 + $0x38] sm:$0xff]
  %v65 = vld [vmem:[%s6] sm:$0xff]
  %v66 = vld [vmem:[%s6 + $0x8] sm:$0xff]
  %v67 = vld [vmem:[%s6 + $0x10] sm:$0xff]
  %v68 = vld [vmem:[%s6 + $0x18] sm:$0xff]
  %v69 = vld [vmem:[%s0] ss:$2 sm:$0xf]
  %v71 = vlaneseq
  %v72 = vshrl.u32 %v71, 7
  %v73 = vsub.s32 0, %v72
  %v74 = vrot.slane %v69, %v73
  %v75 = vlaneseq
  %v76 = vshrl.u32 %v75, 7
  %v77 = vsub.s32 1, %v76
  %v78 = vrot.slane %v69, %v77
  %v79 = vlaneseq
  %v80 = vshrl.u32 %v79, 7
  %v81 = vsub.s32 2, %v80
  %v82 = vrot.slane %v69, %v81
  %v83 = vlaneseq
  %v84 = vshrl.u32 %v83, 7
  %v85 = vsub.s32 3, %v84
  %v86 = vrot.slane %v69, %v85
  %92 = vset.pattern.permute.xlu0 0
  %93 = vperm.xlu0 %92, %v51
  %v94 = vpop.permute.xlu0 %93
  %97 = vset.pattern.permute.xlu0 0
  %98 = vperm.xlu0 %97, %v52
  %v99 = vpop.permute.xlu0 %98
  %v101 = vmul.f32 %v74, %v94
  %v102 = vmul.f32 %v78, %v94
  %v103 = vmul.f32 %v82, %v94
  %v104 = vmul.f32 %v86, %v94
  %v105 = vmul.f32 %v74, %v99
  %v106 = vmul.f32 %v78, %v99
  %v107 = vmul.f32 %v82, %v99
  %v108 = vmul.f32 %v86, %v99
  %109 = vset.pattern.permute.xlu0 1
  %110 = vperm.xlu0 %109, %v51
  %v111 = vpop.permute.xlu0 %110
  %113 = vset.pattern.permute.xlu0 1
  %114 = vperm.xlu0 %113, %v52
  %v115 = vpop.permute.xlu0 %114
  %v117 = vmul.f32 %v74, %v111
  %v118 = vmul.f32 %v78, %v111
  %v119 = vmul.f32 %v82, %v111
  %v120 = vmul.f32 %v86, %v111
  %v121 = vmul.f32 %v74, %v115
  %v122 = vmul.f32 %v78, %v115
  %v123 = vmul.f32 %v82, %v115
  %v124 = vmul.f32 %v86, %v115
  %133 = vrot.lane.b32.xlu0 %v117, 127
  %v134 = vpop.permute.xlu0 %133
  %135 = vrot.lane.b32.xlu0 %v118, 127
  %v136 = vpop.permute.xlu0 %135
  %137 = vrot.lane.b32.xlu0 %v119, 127
  %v138 = vpop.permute.xlu0 %137
  %139 = vrot.lane.b32.xlu0 %v120, 127
  %v140 = vpop.permute.xlu0 %139
  %141 = vrot.lane.b32.xlu0 %v121, 127
  %v142 = vpop.permute.xlu0 %141
  %143 = vrot.lane.b32.xlu0 %v122, 127
  %v144 = vpop.permute.xlu0 %143
  %145 = vrot.lane.b32.xlu0 %v123, 127
  %v146 = vpop.permute.xlu0 %145
  %147 = vrot.lane.b32.xlu0 %v124, 127
  %v148 = vpop.permute.xlu0 %147
  %vm149 = vcmask 1039360
  %v150 = vsel %vm149, %v134, %v136
  %v151 = vsel %vm149, %v136, %v138
  %v152 = vsel %vm149, %v138, %v140
  %v153 = vsel %vm149, %v142, %v144
  %v154 = vsel %vm149, %v144, %v146
  %v155 = vsel %vm149, %v146, %v148
  %v164 = vadd.f32 %v101, %v150
  %v165 = vadd.f32 %v102, %v151
  %v166 = vadd.f32 %v103, %v152
  %v167 = vadd.f32 %v104, %v140
  %v168 = vadd.f32 %v105, %v153
  %v169 = vadd.f32 %v106, %v154
  %v170 = vadd.f32 %v107, %v155
  %v171 = vadd.f32 %v108, %v148
  %172 = vset.pattern.permute.xlu0 2
  %173 = vperm.xlu0 %172, %v51
  %v174 = vpop.permute.xlu0 %173
  %176 = vset.pattern.permute.xlu0 2
  %177 = vperm.xlu0 %176, %v52
  %v178 = vpop.permute.xlu0 %177
  %v180 = vmul.f32 %v74, %v174
  %v181 = vmul.f32 %v78, %v174
  %v182 = vmul.f32 %v82, %v174
  %v183 = vmul.f32 %v86, %v174
  %v184 = vmul.f32 %v74, %v178
  %v185 = vmul.f32 %v78, %v178
  %v186 = vmul.f32 %v82, %v178
  %v187 = vmul.f32 %v86, %v178
  %196 = vrot.lane.b32.xlu0 %v180, 126
  %v197 = vpop.permute.xlu0 %196
  %198 = vrot.lane.b32.xlu0 %v181, 126
  %v199 = vpop.permute.xlu0 %198
  %200 = vrot.lane.b32.xlu0 %v182, 126
  %v201 = vpop.permute.xlu0 %200
  %202 = vrot.lane.b32.xlu0 %v183, 126
  %v203 = vpop.permute.xlu0 %202
  %204 = vrot.lane.b32.xlu0 %v184, 126
  %v205 = vpop.permute.xlu0 %204
  %206 = vrot.lane.b32.xlu0 %v185, 126
  %v207 = vpop.permute.xlu0 %206
  %208 = vrot.lane.b32.xlu0 %v186, 126
  %v209 = vpop.permute.xlu0 %208
  %210 = vrot.lane.b32.xlu0 %v187, 126
  %v211 = vpop.permute.xlu0 %210
  %vm212 = vcmask 1031168
  %v213 = vsel %vm212, %v197, %v199
  %v214 = vsel %vm212, %v199, %v201
  %v215 = vsel %vm212, %v201, %v203
  %v216 = vsel %vm212, %v205, %v207
  %v217 = vsel %vm212, %v207, %v209
  %v218 = vsel %vm212, %v209, %v211
  %v227 = vadd.f32 %v164, %v213
  %v228 = vadd.f32 %v165, %v214
  %v229 = vadd.f32 %v166, %v215
  %v230 = vadd.f32 %v167, %v203
  %v231 = vadd.f32 %v168, %v216
  %v232 = vadd.f32 %v169, %v217
  %v233 = vadd.f32 %v170, %v218
  %v234 = vadd.f32 %v171, %v211
  %235 = vset.pattern.permute.xlu0 3
  %236 = vperm.xlu0 %235, %v51
  %v237 = vpop.permute.xlu0 %236
  %239 = vset.pattern.permute.xlu0 3
  %240 = vperm.xlu0 %239, %v52
  %v241 = vpop.permute.xlu0 %240
  %v243 = vmul.f32 %v74, %v237
  %v244 = vmul.f32 %v78, %v237
  %v245 = vmul.f32 %v82, %v237
  %v246 = vmul.f32 %v86, %v237
  %v247 = vmul.f32 %v74, %v241
  %v248 = vmul.f32 %v78, %v241
  %v249 = vmul.f32 %v82, %v241
  %v250 = vmul.f32 %v86, %v241
  %259 = vrot.lane.b32.xlu0 %v243, 114
  %v260 = vpop.permute.xlu0 %259
  %261 = vrot.lane.b32.xlu0 %v244, 114
  %v262 = vpop.permute.xlu0 %261
  %263 = vrot.lane.b32.xlu0 %v245, 114
  %v264 = vpop.permute.xlu0 %263
  %265 = vrot.lane.b32.xlu0 %v246, 114
  %v266 = vpop.permute.xlu0 %265
  %267 = vrot.lane.b32.xlu0 %v247, 114
  %v268 = vpop.permute.xlu0 %267
  %269 = vrot.lane.b32.xlu0 %v248, 114
  %v270 = vpop.permute.xlu0 %269
  %271 = vrot.lane.b32.xlu0 %v249, 114
  %v272 = vpop.permute.xlu0 %271
  %273 = vrot.lane.b32.xlu0 %v250, 114
  %v274 = vpop.permute.xlu0 %273
  %vm275 = vcmask 932864
  %v276 = vsel %vm275, %v260, %v262
  %v277 = vsel %vm275, %v262, %v264
  %v278 = vsel %vm275, %v264, %v266
  %v279 = vsel %vm275, %v268, %v270
  %v280 = vsel %vm275, %v270, %v272
  %v281 = vsel %vm275, %v272, %v274
  %v290 = vadd.f32 %v227, %v276
  %v291 = vadd.f32 %v228, %v277
  %v292 = vadd.f32 %v229, %v278
  %v293 = vadd.f32 %v230, %v266
  %v294 = vadd.f32 %v231, %v279
  %v295 = vadd.f32 %v232, %v280
  %v296 = vadd.f32 %v233, %v281
  %v297 = vadd.f32 %v234, %v274
  %298 = vset.pattern.permute.xlu0 4
  %299 = vperm.xlu0 %298, %v51
  %v300 = vpop.permute.xlu0 %299
  %302 = vset.pattern.permute.xlu0 4
  %303 = vperm.xlu0 %302, %v52
  %v304 = vpop.permute.xlu0 %303
  %v306 = vmul.f32 %v74, %v300
  %v307 = vmul.f32 %v78, %v300
  %v308 = vmul.f32 %v82, %v300
  %v309 = vmul.f32 %v86, %v300
  %v310 = vmul.f32 %v74, %v304
  %v311 = vmul.f32 %v78, %v304
  %v312 = vmul.f32 %v82, %v304
  %v313 = vmul.f32 %v86, %v304
  %322 = vrot.lane.b32.xlu0 %v306, 113
  %v323 = vpop.permute.xlu0 %322
  %324 = vrot.lane.b32.xlu0 %v307, 113
  %v325 = vpop.permute.xlu0 %324
  %326 = vrot.lane.b32.xlu0 %v308, 113
  %v327 = vpop.permute.xlu0 %326
  %328 = vrot.lane.b32.xlu0 %v309, 113
  %v329 = vpop.permute.xlu0 %328
  %330 = vrot.lane.b32.xlu0 %v310, 113
  %v331 = vpop.permute.xlu0 %330
  %332 = vrot.lane.b32.xlu0 %v311, 113
  %v333 = vpop.permute.xlu0 %332
  %334 = vrot.lane.b32.xlu0 %v312, 113
  %v335 = vpop.permute.xlu0 %334
  %336 = vrot.lane.b32.xlu0 %v313, 113
  %v337 = vpop.permute.xlu0 %336
  %vm338 = vcmask 924672
  %v339 = vsel %vm338, %v323, %v325
  %v340 = vsel %vm338, %v325, %v327
  %v341 = vsel %vm338, %v327, %v329
  %v342 = vsel %vm338, %v331, %v333
  %v343 = vsel %vm338, %v333, %v335
  %v344 = vsel %vm338, %v335, %v337
  %v353 = vadd.f32 %v290, %v339
  %v354 = vadd.f32 %v291, %v340
  %v355 = vadd.f32 %v292, %v341
  %v356 = vadd.f32 %v293, %v329
  %v357 = vadd.f32 %v294, %v342
  %v358 = vadd.f32 %v295, %v343
  %v359 = vadd.f32 %v296, %v344
  %v360 = vadd.f32 %v297, %v337
  %361 = vset.pattern.permute.xlu0 5
  %362 = vperm.xlu0 %361, %v51
  %v363 = vpop.permute.xlu0 %362
  %365 = vset.pattern.permute.xlu0 5
  %366 = vperm.xlu0 %365, %v52
  %v367 = vpop.permute.xlu0 %366
  %v369 = vmul.f32 %v74, %v363
  %v370 = vmul.f32 %v78, %v363
  %v371 = vmul.f32 %v82, %v363
  %v372 = vmul.f32 %v86, %v363
  %v373 = vmul.f32 %v74, %v367
  %v374 = vmul.f32 %v78, %v367
  %v375 = vmul.f32 %v82, %v367
  %v376 = vmul.f32 %v86, %v367
  %385 = vrot.lane.b32.xlu0 %v369, 112
  %v386 = vpop.permute.xlu0 %385
  %387 = vrot.lane.b32.xlu0 %v370, 112
  %v388 = vpop.permute.xlu0 %387
  %389 = vrot.lane.b32.xlu0 %v371, 112
  %v390 = vpop.permute.xlu0 %389
  %391 = vrot.lane.b32.xlu0 %v372, 112
  %v392 = vpop.permute.xlu0 %391
  %393 = vrot.lane.b32.xlu0 %v373, 112
  %v394 = vpop.permute.xlu0 %393
  %395 = vrot.lane.b32.xlu0 %v374, 112
  %v396 = vpop.permute.xlu0 %395
  %397 = vrot.lane.b32.xlu0 %v375, 112
  %v398 = vpop.permute.xlu0 %397
  %399 = vrot.lane.b32.xlu0 %v376, 112
  %v400 = vpop.permute.xlu0 %399
  %vm401 = vcmask 916480
  %v402 = vsel %vm401, %v386, %v388
  %v403 = vsel %vm401, %v388, %v390
  %v404 = vsel %vm401, %v390, %v392
  %v405 = vsel %vm401, %v394, %v396
  %v406 = vsel %vm401, %v396, %v398
  %v407 = vsel %vm401, %v398, %v400
  %v416 = vadd.f32 %v353, %v402
  %v417 = vadd.f32 %v354, %v403
  %v418 = vadd.f32 %v355, %v404
  %v419 = vadd.f32 %v356, %v392
  %v420 = vadd.f32 %v357, %v405
  %v421 = vadd.f32 %v358, %v406
  %v422 = vadd.f32 %v359, %v407
  %v423 = vadd.f32 %v360, %v400
  %424 = vset.pattern.permute.xlu0 6
  %425 = vperm.xlu0 %424, %v51
  %v426 = vpop.permute.xlu0 %425
  %428 = vset.pattern.permute.xlu0 6
  %429 = vperm.xlu0 %428, %v52
  %v430 = vpop.permute.xlu0 %429
  %v432 = vmul.f32 %v74, %v426
  %v433 = vmul.f32 %v78, %v426
  %v434 = vmul.f32 %v82, %v426
  %v435 = vmul.f32 %v86, %v426
  %v436 = vmul.f32 %v74, %v430
  %v437 = vmul.f32 %v78, %v430
  %v438 = vmul.f32 %v82, %v430
  %v439 = vmul.f32 %v86, %v430
  %448 = vrot.lane.b32.xlu0 %v432, 100
  %v449 = vpop.permute.xlu0 %448
  %450 = vrot.lane.b32.xlu0 %v433, 100
  %v451 = vpop.permute.xlu0 %450
  %452 = vrot.lane.b32.xlu0 %v434, 100
  %v453 = vpop.permute.xlu0 %452
  %454 = vrot.lane.b32.xlu0 %v435, 100
  %v455 = vpop.permute.xlu0 %454
  %456 = vrot.lane.b32.xlu0 %v436, 100
  %v457 = vpop.permute.xlu0 %456
  %458 = vrot.lane.b32.xlu0 %v437, 100
  %v459 = vpop.permute.xlu0 %458
  %460 = vrot.lane.b32.xlu0 %v438, 100
  %v461 = vpop.permute.xlu0 %460
  %462 = vrot.lane.b32.xlu0 %v439, 100
  %v463 = vpop.permute.xlu0 %462
  %vm464 = vcmask 818176
  %v465 = vsel %vm464, %v449, %v451
  %v466 = vsel %vm464, %v451, %v453
  %v467 = vsel %vm464, %v453, %v455
  %v468 = vsel %vm464, %v457, %v459
  %v469 = vsel %vm464, %v459, %v461
  %v470 = vsel %vm464, %v461, %v463
  %v479 = vadd.f32 %v416, %v465
  %v480 = vadd.f32 %v417, %v466
  %v481 = vadd.f32 %v418, %v467
  %v482 = vadd.f32 %v419, %v455
  %v483 = vadd.f32 %v420, %v468
  %v484 = vadd.f32 %v421, %v469
  %v485 = vadd.f32 %v422, %v470
  %v486 = vadd.f32 %v423, %v463
  %487 = vset.pattern.permute.xlu0 7
  %488 = vperm.xlu0 %487, %v51
  %v489 = vpop.permute.xlu0 %488
  %491 = vset.pattern.permute.xlu0 7
  %492 = vperm.xlu0 %491, %v52
  %v493 = vpop.permute.xlu0 %492
  %v495 = vmul.f32 %v74, %v489
  %v496 = vmul.f32 %v78, %v489
  %v497 = vmul.f32 %v82, %v489
  %v498 = vmul.f32 %v86, %v489
  %v499 = vmul.f32 %v74, %v493
  %v500 = vmul.f32 %v78, %v493
  %v501 = vmul.f32 %v82, %v493
  %v502 = vmul.f32 %v86, %v493
  %511 = vrot.lane.b32.xlu0 %v495, 99
  %v512 = vpop.permute.xlu0 %511
  %513 = vrot.lane.b32.xlu0 %v496, 99
  %v514 = vpop.permute.xlu0 %513
  %515 = vrot.lane.b32.xlu0 %v497, 99
  %v516 = vpop.permute.xlu0 %515
  %517 = vrot.lane.b32.xlu0 %v498, 99
  %v518 = vpop.permute.xlu0 %517
  %519 = vrot.lane.b32.xlu0 %v499, 99
  %v520 = vpop.permute.xlu0 %519
  %521 = vrot.lane.b32.xlu0 %v500, 99
  %v522 = vpop.permute.xlu0 %521
  %523 = vrot.lane.b32.xlu0 %v501, 99
  %v524 = vpop.permute.xlu0 %523
  %525 = vrot.lane.b32.xlu0 %v502, 99
  %v526 = vpop.permute.xlu0 %525
  %vm527 = vcmask 809984
  %v528 = vsel %vm527, %v512, %v514
  %v529 = vsel %vm527, %v514, %v516
  %v530 = vsel %vm527, %v516, %v518
  %v531 = vsel %vm527, %v520, %v522
  %v532 = vsel %vm527, %v522, %v524
  %v533 = vsel %vm527, %v524, %v526
  %v542 = vadd.f32 %v479, %v528
  %v543 = vadd.f32 %v480, %v529
  %v544 = vadd.f32 %v481, %v530
  %v545 = vadd.f32 %v482, %v518
  %v546 = vadd.f32 %v483, %v531
  %v547 = vadd.f32 %v484, %v532
  %v548 = vadd.f32 %v485, %v533
  %v549 = vadd.f32 %v486, %v526
  %550 = vset.pattern.permute.xlu0 8
  %551 = vperm.xlu0 %550, %v51
  %v552 = vpop.permute.xlu0 %551
  %554 = vset.pattern.permute.xlu0 8
  %555 = vperm.xlu0 %554, %v52
  %v556 = vpop.permute.xlu0 %555
  %v558 = vmul.f32 %v74, %v552
  %v559 = vmul.f32 %v78, %v552
  %v560 = vmul.f32 %v82, %v552
  %v561 = vmul.f32 %v86, %v552
  %v562 = vmul.f32 %v74, %v556
  %v563 = vmul.f32 %v78, %v556
  %v564 = vmul.f32 %v82, %v556
  %v565 = vmul.f32 %v86, %v556
  %574 = vrot.lane.b32.xlu0 %v558, 98
  %v575 = vpop.permute.xlu0 %574
  %576 = vrot.lane.b32.xlu0 %v559, 98
  %v577 = vpop.permute.xlu0 %576
  %578 = vrot.lane.b32.xlu0 %v560, 98
  %v579 = vpop.permute.xlu0 %578
  %580 = vrot.lane.b32.xlu0 %v561, 98
  %v581 = vpop.permute.xlu0 %580
  %582 = vrot.lane.b32.xlu0 %v562, 98
  %v583 = vpop.permute.xlu0 %582
  %584 = vrot.lane.b32.xlu0 %v563, 98
  %v585 = vpop.permute.xlu0 %584
  %586 = vrot.lane.b32.xlu0 %v564, 98
  %v587 = vpop.permute.xlu0 %586
  %588 = vrot.lane.b32.xlu0 %v565, 98
  %v589 = vpop.permute.xlu0 %588
  %vm590 = vcmask 801792
  %v591 = vsel %vm590, %v575, %v577
  %v592 = vsel %vm590, %v577, %v579
  %v593 = vsel %vm590, %v579, %v581
  %v594 = vsel %vm590, %v583, %v585
  %v595 = vsel %vm590, %v585, %v587
  %v596 = vsel %vm590, %v587, %v589
  %v605 = vadd.f32 %v542, %v591
  %v606 = vadd.f32 %v543, %v592
  %v607 = vadd.f32 %v544, %v593
  %v608 = vadd.f32 %v545, %v581
  %v609 = vadd.f32 %v546, %v594
  %v610 = vadd.f32 %v547, %v595
  %v611 = vadd.f32 %v548, %v596
  %v612 = vadd.f32 %v549, %v589
  %v614 = vlaneseq
  %v615 = vshrl.u32 %v614, 7
  %v616 = vsub.s32 0, %v615
  %v617 = vrot.slane %v50, %v616
  %v618 = vlaneseq
  %v619 = vshrl.u32 %v618, 7
  %v620 = vsub.s32 1, %v619
  %v621 = vrot.slane %v50, %v620
  %v622 = vlaneseq
  %v623 = vshrl.u32 %v622, 7
  %v624 = vsub.s32 2, %v623
  %v625 = vrot.slane %v50, %v624
  %v626 = vlaneseq
  %v627 = vshrl.u32 %v626, 7
  %v628 = vsub.s32 3, %v627
  %v629 = vrot.slane %v50, %v628
  %v634 = vmul.f32 %v605, %v617
  %v635 = vmul.f32 %v606, %v621
  %v636 = vmul.f32 %v607, %v625
  %v637 = vmul.f32 %v608, %v629
  %v638 = vmul.f32 %v609, %v617
  %v639 = vmul.f32 %v610, %v621
  %v640 = vmul.f32 %v611, %v625
  %v641 = vmul.f32 %v612, %v629
  %v642 = vadd.f32 %v634, %v635
  %v643 = vadd.f32 %v642, %v636
  %vm644 = vcmask 64512
  %v645 = vsel %vm644, %v637, 0.0
  %v646 = vadd.f32 %v643, %v645
  %647 = vadd.xlane.f32.xlu0 %v646
  %v648 = vpop.xlane.xlu0 %647
  %v649 = vadd.f32 %v638, %v639
  %v650 = vadd.f32 %v649, %v640
  %v651 = vsel %vm644, %v641, 0.0
  %v652 = vadd.f32 %v650, %v651
  %653 = vadd.xlane.f32.xlu0 %v652
  %v654 = vpop.xlane.xlu0 %653
  %v655 = vrcp.pop 288.0
  %v656 = vmul.f32 %v648, %v655
  %v657 = vmul.f32 %v654, %v655
  %v658 = vmul.f32 %v634, %v634
  %v659 = vmul.f32 %v635, %v635
  %v660 = vmul.f32 %v636, %v636
  %v661 = vmul.f32 %v637, %v637
  %v662 = vmul.f32 %v638, %v638
  %v663 = vmul.f32 %v639, %v639
  %v664 = vmul.f32 %v640, %v640
  %v665 = vmul.f32 %v641, %v641
  %v666 = vadd.f32 %v658, %v659
  %v667 = vadd.f32 %v666, %v660
  %v668 = vsel %vm644, %v661, 0.0
  %v669 = vadd.f32 %v667, %v668
  %670 = vadd.xlane.f32.xlu0 %v669
  %v671 = vpop.xlane.xlu0 %670
  %v672 = vadd.f32 %v662, %v663
  %v673 = vadd.f32 %v672, %v664
  %v674 = vsel %vm644, %v665, 0.0
  %v675 = vadd.f32 %v673, %v674
  %676 = vadd.xlane.f32.xlu0 %v675
  %v677 = vpop.xlane.xlu0 %676
  %v678 = vmul.f32 %v671, %v655
  %v679 = vmul.f32 %v677, %v655
  %v680 = vmul.f32 %v656, %v656
  %v681 = vmul.f32 %v657, %v657
  %v682 = vsub.f32 %v678, %v680
  %v683 = vsub.f32 %v679, %v681
  %v684 = vmax.f32 %v682, 0.0
  %v685 = vmax.f32 %v683, 0.0
  %v686 = vadd.f32 %v684, 1e-05
  %v687 = vadd.f32 %v685, 1e-05
  %v688 = vrsqrt.pop %v686
  %v689 = vrsqrt.pop %v687
  %v690 = vmul.f32 %v53, %v688
  %v691 = vmul.f32 %v54, %v689
  %v692 = vmul.f32 %v656, %v690
  %v693 = vmul.f32 %v657, %v691
  %v694 = vsub.f32 %v55, %v692
  %v695 = vsub.f32 %v56, %v693
  %704 = vrot.lane.b32.xlu0 %v634, 127
  %v705 = vpop.permute.xlu0 %704
  %706 = vrot.lane.b32.xlu0 %v635, 127
  %v707 = vpop.permute.xlu0 %706
  %708 = vrot.lane.b32.xlu0 %v636, 127
  %v709 = vpop.permute.xlu0 %708
  %710 = vrot.lane.b32.xlu0 %v637, 127
  %v711 = vpop.permute.xlu0 %710
  %712 = vrot.lane.b32.xlu0 %v638, 127
  %v713 = vpop.permute.xlu0 %712
  %714 = vrot.lane.b32.xlu0 %v639, 127
  %v715 = vpop.permute.xlu0 %714
  %716 = vrot.lane.b32.xlu0 %v640, 127
  %v717 = vpop.permute.xlu0 %716
  %718 = vrot.lane.b32.xlu0 %v641, 127
  %v719 = vpop.permute.xlu0 %718
  %v720 = vsel %vm149, %v705, %v707
  %v721 = vsel %vm149, %v707, %v709
  %v722 = vsel %vm149, %v709, %v711
  %v723 = vsel %vm149, %v713, %v715
  %v724 = vsel %vm149, %v715, %v717
  %v725 = vsel %vm149, %v717, %v719
  %v734 = vmax.f32 %v634, %v720
  %v735 = vmax.f32 %v635, %v721
  %v736 = vmax.f32 %v636, %v722
  %v737 = vmax.f32 %v637, %v711
  %v738 = vmax.f32 %v638, %v723
  %v739 = vmax.f32 %v639, %v724
  %v740 = vmax.f32 %v640, %v725
  %v741 = vmax.f32 %v641, %v719
  %750 = vrot.lane.b32.xlu0 %v734, 114
  %v751 = vpop.permute.xlu0 %750
  %752 = vrot.lane.b32.xlu0 %v735, 114
  %v753 = vpop.permute.xlu0 %752
  %754 = vrot.lane.b32.xlu0 %v736, 114
  %v755 = vpop.permute.xlu0 %754
  %756 = vrot.lane.b32.xlu0 %v737, 114
  %v757 = vpop.permute.xlu0 %756
  %758 = vrot.lane.b32.xlu0 %v738, 114
  %v759 = vpop.permute.xlu0 %758
  %760 = vrot.lane.b32.xlu0 %v739, 114
  %v761 = vpop.permute.xlu0 %760
  %762 = vrot.lane.b32.xlu0 %v740, 114
  %v763 = vpop.permute.xlu0 %762
  %764 = vrot.lane.b32.xlu0 %v741, 114
  %v765 = vpop.permute.xlu0 %764
  %v766 = vsel %vm275, %v751, %v753
  %v767 = vsel %vm275, %v753, %v755
  %v768 = vsel %vm275, %v755, %v757
  %v769 = vsel %vm275, %v759, %v761
  %v770 = vsel %vm275, %v761, %v763
  %v771 = vsel %vm275, %v763, %v765
  %v778 = vmax.f32 %v734, %v766
  %v779 = vmax.f32 %v735, %v767
  %v780 = vmax.f32 %v736, %v768
  %v781 = vmax.f32 %v738, %v769
  %v782 = vmax.f32 %v739, %v770
  %v783 = vmax.f32 %v740, %v771
  %785 = vset.pattern.permute.xlu0 0
  %786 = vperm.xlu0 %785, %v690
  %v787 = vpop.permute.xlu0 %786
  %790 = vset.pattern.permute.xlu0 0
  %791 = vperm.xlu0 %790, %v691
  %v792 = vpop.permute.xlu0 %791
  %v794 = vmul.f32 %v778, %v787
  %v795 = vmul.f32 %v779, %v787
  %v796 = vmul.f32 %v780, %v787
  %v797 = vmul.f32 %v781, %v792
  %v798 = vmul.f32 %v782, %v792
  %v799 = vmul.f32 %v783, %v792
  %801 = vset.pattern.permute.xlu0 0
  %802 = vperm.xlu0 %801, %v694
  %v803 = vpop.permute.xlu0 %802
  %806 = vset.pattern.permute.xlu0 0
  %807 = vperm.xlu0 %806, %v695
  %v808 = vpop.permute.xlu0 %807
  %v810 = vadd.f32 %v794, %v803
  %v811 = vadd.f32 %v795, %v803
  %v812 = vadd.f32 %v796, %v803
  %v813 = vadd.f32 %v797, %v808
  %v814 = vadd.f32 %v798, %v808
  %v815 = vadd.f32 %v799, %v808
  %v816 = vmax.f32 %v810, 0.0
  %v817 = vmax.f32 %v811, 0.0
  %v818 = vmax.f32 %v812, 0.0
  %v819 = vmax.f32 %v813, 0.0
  %v820 = vmax.f32 %v814, 0.0
  %v821 = vmax.f32 %v815, 0.0
  %828 = vrot.lane.b32.xlu0 %v816, 126
  %v829 = vpop.permute.xlu0 %828
  %830 = vrot.lane.b32.xlu0 %v817, 126
  %v831 = vpop.permute.xlu0 %830
  %832 = vrot.lane.b32.xlu0 %v818, 126
  %v833 = vpop.permute.xlu0 %832
  %834 = vrot.lane.b32.xlu0 %v819, 126
  %v835 = vpop.permute.xlu0 %834
  %836 = vrot.lane.b32.xlu0 %v820, 126
  %v837 = vpop.permute.xlu0 %836
  %838 = vrot.lane.b32.xlu0 %v821, 126
  %v839 = vpop.permute.xlu0 %838
  %v840 = vsel %vm212, %v829, %v831
  %v841 = vsel %vm212, %v831, %v833
  %v842 = vsel %vm212, %v835, %v837
  %v843 = vsel %vm212, %v837, %v839
  %850 = vrot.lane.b32.xlu0 %v816, 124
  %v851 = vpop.permute.xlu0 %850
  %852 = vrot.lane.b32.xlu0 %v817, 124
  %v853 = vpop.permute.xlu0 %852
  %854 = vrot.lane.b32.xlu0 %v818, 124
  %v855 = vpop.permute.xlu0 %854
  %856 = vrot.lane.b32.xlu0 %v819, 124
  %v857 = vpop.permute.xlu0 %856
  %858 = vrot.lane.b32.xlu0 %v820, 124
  %v859 = vpop.permute.xlu0 %858
  %860 = vrot.lane.b32.xlu0 %v821, 124
  %v861 = vpop.permute.xlu0 %860
  %vm862 = vcmask 1014784
  %v863 = vsel %vm862, %v851, %v853
  %v864 = vsel %vm862, %v853, %v855
  %v865 = vsel %vm862, %v857, %v859
  %v866 = vsel %vm862, %v859, %v861
  %873 = vrot.lane.b32.xlu0 %v816, 100
  %v874 = vpop.permute.xlu0 %873
  %875 = vrot.lane.b32.xlu0 %v817, 100
  %v876 = vpop.permute.xlu0 %875
  %877 = vrot.lane.b32.xlu0 %v818, 100
  %v878 = vpop.permute.xlu0 %877
  %879 = vrot.lane.b32.xlu0 %v819, 100
  %v880 = vpop.permute.xlu0 %879
  %881 = vrot.lane.b32.xlu0 %v820, 100
  %v882 = vpop.permute.xlu0 %881
  %883 = vrot.lane.b32.xlu0 %v821, 100
  %v884 = vpop.permute.xlu0 %883
  %v885 = vsel %vm464, %v874, %v876
  %v886 = vsel %vm464, %v876, %v878
  %v887 = vsel %vm464, %v880, %v882
  %v888 = vsel %vm464, %v882, %v884
  %895 = vrot.lane.b32.xlu0 %v816, 98
  %v896 = vpop.permute.xlu0 %895
  %897 = vrot.lane.b32.xlu0 %v817, 98
  %v898 = vpop.permute.xlu0 %897
  %899 = vrot.lane.b32.xlu0 %v818, 98
  %v900 = vpop.permute.xlu0 %899
  %901 = vrot.lane.b32.xlu0 %v819, 98
  %v902 = vpop.permute.xlu0 %901
  %903 = vrot.lane.b32.xlu0 %v820, 98
  %v904 = vpop.permute.xlu0 %903
  %905 = vrot.lane.b32.xlu0 %v821, 98
  %v906 = vpop.permute.xlu0 %905
  %v907 = vsel %vm590, %v896, %v898
  %v908 = vsel %vm590, %v898, %v900
  %v909 = vsel %vm590, %v902, %v904
  %v910 = vsel %vm590, %v904, %v906
  %917 = vrot.lane.b32.xlu0 %v816, 96
  %v918 = vpop.permute.xlu0 %917
  %919 = vrot.lane.b32.xlu0 %v817, 96
  %v920 = vpop.permute.xlu0 %919
  %921 = vrot.lane.b32.xlu0 %v818, 96
  %v922 = vpop.permute.xlu0 %921
  %923 = vrot.lane.b32.xlu0 %v819, 96
  %v924 = vpop.permute.xlu0 %923
  %925 = vrot.lane.b32.xlu0 %v820, 96
  %v926 = vpop.permute.xlu0 %925
  %927 = vrot.lane.b32.xlu0 %v821, 96
  %v928 = vpop.permute.xlu0 %927
  %vm929 = vcmask 785408
  %v930 = vsel %vm929, %v918, %v920
  %v931 = vsel %vm929, %v920, %v922
  %v932 = vsel %vm929, %v924, %v926
  %v933 = vsel %vm929, %v926, %v928
  %940 = vrot.lane.b32.xlu0 %v816, 72
  %v941 = vpop.permute.xlu0 %940
  %942 = vrot.lane.b32.xlu0 %v817, 72
  %v943 = vpop.permute.xlu0 %942
  %944 = vrot.lane.b32.xlu0 %v818, 72
  %v945 = vpop.permute.xlu0 %944
  %946 = vrot.lane.b32.xlu0 %v819, 72
  %v947 = vpop.permute.xlu0 %946
  %948 = vrot.lane.b32.xlu0 %v820, 72
  %v949 = vpop.permute.xlu0 %948
  %950 = vrot.lane.b32.xlu0 %v821, 72
  %v951 = vpop.permute.xlu0 %950
  %vm952 = vcmask 588800
  %v953 = vsel %vm952, %v941, %v943
  %v954 = vsel %vm952, %v943, %v945
  %v955 = vsel %vm952, %v947, %v949
  %v956 = vsel %vm952, %v949, %v951
  %963 = vrot.lane.b32.xlu0 %v816, 70
  %v964 = vpop.permute.xlu0 %963
  %965 = vrot.lane.b32.xlu0 %v817, 70
  %v966 = vpop.permute.xlu0 %965
  %967 = vrot.lane.b32.xlu0 %v818, 70
  %v968 = vpop.permute.xlu0 %967
  %969 = vrot.lane.b32.xlu0 %v819, 70
  %v970 = vpop.permute.xlu0 %969
  %971 = vrot.lane.b32.xlu0 %v820, 70
  %v972 = vpop.permute.xlu0 %971
  %973 = vrot.lane.b32.xlu0 %v821, 70
  %v974 = vpop.permute.xlu0 %973
  %vm975 = vcmask 572416
  %v976 = vsel %vm975, %v964, %v966
  %v977 = vsel %vm975, %v966, %v968
  %v978 = vsel %vm975, %v970, %v972
  %v979 = vsel %vm975, %v972, %v974
  %986 = vrot.lane.b32.xlu0 %v816, 68
  %v987 = vpop.permute.xlu0 %986
  %988 = vrot.lane.b32.xlu0 %v817, 68
  %v989 = vpop.permute.xlu0 %988
  %990 = vrot.lane.b32.xlu0 %v818, 68
  %v991 = vpop.permute.xlu0 %990
  %992 = vrot.lane.b32.xlu0 %v819, 68
  %v993 = vpop.permute.xlu0 %992
  %994 = vrot.lane.b32.xlu0 %v820, 68
  %v995 = vpop.permute.xlu0 %994
  %996 = vrot.lane.b32.xlu0 %v821, 68
  %v997 = vpop.permute.xlu0 %996
  %vm998 = vcmask 556032
  %v999 = vsel %vm998, %v987, %v989
  %v1000 = vsel %vm998, %v989, %v991
  %v1001 = vsel %vm998, %v993, %v995
  %v1002 = vsel %vm998, %v995, %v997
  %1010 = vset.pattern.permute.xlu0 0
  %1011 = vperm.xlu0 %1010, %v65
  %v1012 = vpop.permute.xlu0 %1011
  %1015 = vset.pattern.permute.xlu0 0
  %1016 = vperm.xlu0 %1015, %v66
  %v1017 = vpop.permute.xlu0 %1016
  %1020 = vset.pattern.permute.xlu0 0
  %1021 = vperm.xlu0 %1020, %v67
  %v1022 = vpop.permute.xlu0 %1021
  %1025 = vset.pattern.permute.xlu0 0
  %1026 = vperm.xlu0 %1025, %v68
  %v1027 = vpop.permute.xlu0 %1026
  %vm1029 = vcmask 130048
  %v1031 = vsel %vm1029, %v58, 0
  %v1034 = vsel %vm1029, %v60, 0
  %v1037 = vsel %vm1029, %v62, 0
  %v1040 = vsel %vm1029, %v64, 0
  %1042 = vmatprep.subr.mxu0 %v979
  %1043 = vmatpush1.msra.mxu0 %v978
  %1044 = vmatprep.subr.mxu0 %v977
  %1045 = vmatpush1.msra.mxu0 %v976
  %1046 = vmatprep.subr.mxu0 %v956
  %1047 = vmatpush1.msra.mxu0 %v955
  %1048 = vmatprep.subr.mxu0 %v954
  %1049 = vmatpush1.msra.mxu0 %v953
  %1050 = vmatprep.subr.mxu0 %v933
  %1051 = vmatpush1.msra.mxu0 %v932
  %1052 = vmatprep.subr.mxu0 %v931
  %1053 = vmatpush1.msra.mxu0 %v930
  %1054 = vmatprep.subr.mxu0 %v910
  %1055 = vmatpush1.msra.mxu0 %v909
  %1056 = vmatprep.subr.mxu0 %v908
  %1057 = vmatpush1.msra.mxu0 %v907
  %1058 = vmatprep.subr.mxu0 %v888
  %1059 = vmatpush1.msra.mxu0 %v887
  %1060 = vmatprep.subr.mxu0 %v886
  %1061 = vmatpush1.msra.mxu0 %v885
  %1062 = vmatprep.subr.mxu0 %v866
  %1063 = vmatpush1.msra.mxu0 %v865
  %1064 = vmatprep.subr.mxu0 %v864
  %1065 = vmatpush1.msra.mxu0 %v863
  %1066 = vmatprep.subr.mxu0 %v843
  %1067 = vmatpush1.msra.mxu0 %v842
  %1068 = vmatprep.subr.mxu0 %v841
  %1069 = vmatpush1.msra.mxu0 %v840
  %1070 = vmatprep.subr.mxu0 %v820
  %1071 = vmatpush1.msra.mxu0 %v819
  %1072 = vmatprep.subr.mxu0 %v817
  %1073 = vmatpush1.msra.mxu0 %v816
  %1074 = vmatprep.subr.mxu0 0.0
  %1075 = vmatpush2.msra.mxu0 0.0
  %1076 = vmatprep.subr.mxu0 0.0
  %1077 = vmatpush2.msra.mxu0 0.0
  %1078 = vmatprep.subr.mxu0 0.0
  %1079 = vmatpush2.msra.mxu0 0.0
  %1080 = vmatprep.subr.mxu0 0.0
  %1081 = vmatpush2.msra.mxu0 0.0
  %1082 = vmatprep.subr.mxu0 0.0
  %1083 = vmatpush2.msra.mxu0 0.0
  %1084 = vmatprep.subr.mxu0 0.0
  %1085 = vmatpush2.msra.mxu0 0.0
  %1086 = vmatprep.subr.mxu0 0.0
  %1087 = vmatpush2.msra.mxu0 0.0
  %1088 = vmatprep.subr.mxu0 0.0
  %1089 = vmatpush2.msra.mxu0 0.0
  %1090 = vmatprep.subr.mxu0 0.0
  %1091 = vmatpush2.msra.mxu0 0.0
  %1092 = vmatprep.subr.mxu0 0.0
  %1093 = vmatpush2.msra.mxu0 0.0
  %1094 = vmatprep.subr.mxu0 0.0
  %1095 = vmatpush2.msra.mxu0 0.0
  %1096 = vmatprep.subr.mxu0 0.0
  %1097 = vmatpush2.msra.mxu0 0.0
  %1098 = vmatprep.subr.mxu0 0.0
  %1099 = vmatpush2.msra.mxu0 0.0
  %1100 = vmatprep.subr.mxu0 0.0
  %1101 = vmatpush2.msra.mxu0 0.0
  %1102 = vmatprep.subr.mxu0 %v1002
  %1103 = vmatpush2.msra.mxu0 %v1001
  %1104 = vmatprep.subr.mxu0 %v1000
  %1105 = vmatpush2.msra.mxu0 %v999
  %1106 = vmatprep.mubr.f32.mxu0 %v1031
  %1107 = vmatmul.mubr.f32.gmra.mxu0 %v57
  %v1108 = vpop.f32.mrf.mxu0
  %v1109 = vadd.f32 %v1012, %v1108
  %v1110 = vpop.f32.mrf.mxu0
  %v1111 = vadd.f32 %v1012, %v1110
  %1112 = vmatprep.mubr.f32.mxu0 %v1034
  %1113 = vmatmul.mubr.f32.gmra.mxu0 %v59
  %v1114 = vpop.f32.mrf.mxu0
  %v1115 = vadd.f32 %v1017, %v1114
  %v1116 = vpop.f32.mrf.mxu0
  %v1117 = vadd.f32 %v1017, %v1116
  %1118 = vmatprep.mubr.f32.mxu0 %v1037
  %1119 = vmatmul.mubr.f32.gmra.mxu0 %v61
  %v1120 = vpop.f32.mrf.mxu0
  %v1121 = vadd.f32 %v1022, %v1120
  %v1122 = vpop.f32.mrf.mxu0
  %v1123 = vadd.f32 %v1022, %v1122
  %1124 = vmatprep.mubr.f32.mxu0 %v1040
  %1125 = vmatmul.mubr.f32.gmra.mxu0 %v63
  %v1126 = vpop.f32.mrf.mxu0
  %v1127 = vadd.f32 %v1027, %v1126
  %v1128 = vpop.f32.mrf.mxu0
  %v1129 = vadd.f32 %v1027, %v1128
  %1130 = vdwg.mxu0
  %1131 = vmatprep.subr.mxu0 0.0
  %1132 = vmatpush1.msra.mxu0 %v974
  %1133 = vmatprep.subr.mxu0 0.0
  %1134 = vmatpush1.msra.mxu0 %v968
  %1135 = vmatprep.subr.mxu0 0.0
  %1136 = vmatpush1.msra.mxu0 %v951
  %1137 = vmatprep.subr.mxu0 0.0
  %1138 = vmatpush1.msra.mxu0 %v945
  %1139 = vmatprep.subr.mxu0 0.0
  %1140 = vmatpush1.msra.mxu0 %v928
  %1141 = vmatprep.subr.mxu0 0.0
  %1142 = vmatpush1.msra.mxu0 %v922
  %1143 = vmatprep.subr.mxu0 0.0
  %1144 = vmatpush1.msra.mxu0 %v906
  %1145 = vmatprep.subr.mxu0 0.0
  %1146 = vmatpush1.msra.mxu0 %v900
  %1147 = vmatprep.subr.mxu0 0.0
  %1148 = vmatpush1.msra.mxu0 %v884
  %1149 = vmatprep.subr.mxu0 0.0
  %1150 = vmatpush1.msra.mxu0 %v878
  %1151 = vmatprep.subr.mxu0 0.0
  %1152 = vmatpush1.msra.mxu0 %v861
  %1153 = vmatprep.subr.mxu0 0.0
  %1154 = vmatpush1.msra.mxu0 %v855
  %1155 = vmatprep.subr.mxu0 0.0
  %1156 = vmatpush1.msra.mxu0 %v839
  %1157 = vmatprep.subr.mxu0 0.0
  %1158 = vmatpush1.msra.mxu0 %v833
  %1159 = vmatprep.subr.mxu0 0.0
  %1160 = vmatpush1.msra.mxu0 %v821
  %1161 = vmatprep.subr.mxu0 0.0
  %1162 = vmatpush1.msra.mxu0 %v818
  %1163 = vmatprep.subr.mxu0 0.0
  %1164 = vmatpush2.msra.mxu0 0.0
  %1165 = vmatprep.subr.mxu0 0.0
  %1166 = vmatpush2.msra.mxu0 0.0
  %1167 = vmatprep.subr.mxu0 0.0
  %1168 = vmatpush2.msra.mxu0 0.0
  %1169 = vmatprep.subr.mxu0 0.0
  %1170 = vmatpush2.msra.mxu0 0.0
  %1171 = vmatprep.subr.mxu0 0.0
  %1172 = vmatpush2.msra.mxu0 0.0
  %1173 = vmatprep.subr.mxu0 0.0
  %1174 = vmatpush2.msra.mxu0 0.0
  %1175 = vmatprep.subr.mxu0 0.0
  %1176 = vmatpush2.msra.mxu0 0.0
  %1177 = vmatprep.subr.mxu0 0.0
  %1178 = vmatpush2.msra.mxu0 0.0
  %1179 = vmatprep.subr.mxu0 0.0
  %1180 = vmatpush2.msra.mxu0 0.0
  %1181 = vmatprep.subr.mxu0 0.0
  %1182 = vmatpush2.msra.mxu0 0.0
  %1183 = vmatprep.subr.mxu0 0.0
  %1184 = vmatpush2.msra.mxu0 0.0
  %1185 = vmatprep.subr.mxu0 0.0
  %1186 = vmatpush2.msra.mxu0 0.0
  %1187 = vmatprep.subr.mxu0 0.0
  %1188 = vmatpush2.msra.mxu0 0.0
  %1189 = vmatprep.subr.mxu0 0.0
  %1190 = vmatpush2.msra.mxu0 0.0
  %1191 = vmatprep.subr.mxu0 0.0
  %1192 = vmatpush2.msra.mxu0 %v997
  %1193 = vmatprep.subr.mxu0 0.0
  %1194 = vmatpush2.msra.mxu0 %v991
  %1195 = vmatprep.mubr.f32.mxu0 %v1031
  %1196 = vmatmul.mubr.f32.gmra.mxu0 %v57
  %v1197 = vpop.f32.mrf.mxu0
  %v1198 = vadd.f32 %v1012, %v1197
  %v1199 = vpop.f32.mrf.mxu0
  %1200 = vmatprep.mubr.f32.mxu0 %v1034
  %1201 = vmatmul.mubr.f32.gmra.mxu0 %v59
  %v1202 = vpop.f32.mrf.mxu0
  %v1203 = vadd.f32 %v1017, %v1202
  %v1204 = vpop.f32.mrf.mxu0
  %1205 = vmatprep.mubr.f32.mxu0 %v1037
  %1206 = vmatmul.mubr.f32.gmra.mxu0 %v61
  %v1207 = vpop.f32.mrf.mxu0
  %v1208 = vadd.f32 %v1022, %v1207
  %v1209 = vpop.f32.mrf.mxu0
  %1210 = vmatprep.mubr.f32.mxu0 %v1040
  %1211 = vmatmul.mubr.f32.gmra.mxu0 %v63
  %v1212 = vpop.f32.mrf.mxu0
  %v1213 = vadd.f32 %v1027, %v1212
  %v1214 = vpop.f32.mrf.mxu0
  %1215 = vdwg.mxu0
  %1228 = vrot.lane.b32.xlu0 %v1109, 126
  %v1229 = vpop.permute.xlu0 %1228
  %1230 = vrot.lane.b32.xlu0 %v1111, 126
  %v1231 = vpop.permute.xlu0 %1230
  %1232 = vrot.lane.b32.xlu0 %v1198, 126
  %v1233 = vpop.permute.xlu0 %1232
  %1234 = vrot.lane.b32.xlu0 %v1115, 126
  %v1235 = vpop.permute.xlu0 %1234
  %1236 = vrot.lane.b32.xlu0 %v1117, 126
  %v1237 = vpop.permute.xlu0 %1236
  %1238 = vrot.lane.b32.xlu0 %v1203, 126
  %v1239 = vpop.permute.xlu0 %1238
  %1240 = vrot.lane.b32.xlu0 %v1121, 126
  %v1241 = vpop.permute.xlu0 %1240
  %1242 = vrot.lane.b32.xlu0 %v1123, 126
  %v1243 = vpop.permute.xlu0 %1242
  %1244 = vrot.lane.b32.xlu0 %v1208, 126
  %v1245 = vpop.permute.xlu0 %1244
  %1246 = vrot.lane.b32.xlu0 %v1127, 126
  %v1247 = vpop.permute.xlu0 %1246
  %1248 = vrot.lane.b32.xlu0 %v1129, 126
  %v1249 = vpop.permute.xlu0 %1248
  %1250 = vrot.lane.b32.xlu0 %v1213, 126
  %v1251 = vpop.permute.xlu0 %1250
  %v1252 = vsel %vm212, %v1229, %v1231
  %v1253 = vsel %vm212, %v1231, %v1233
  %v1254 = vsel %vm212, %v1235, %v1237
  %v1255 = vsel %vm212, %v1237, %v1239
  %v1256 = vsel %vm212, %v1241, %v1243
  %v1257 = vsel %vm212, %v1243, %v1245
  %v1258 = vsel %vm212, %v1247, %v1249
  %v1259 = vsel %vm212, %v1249, %v1251
  %v1272 = vmax.f32 %v1109, %v1252
  %v1273 = vmax.f32 %v1111, %v1253
  %v1274 = vmax.f32 %v1198, %v1233
  %v1275 = vmax.f32 %v1115, %v1254
  %v1276 = vmax.f32 %v1117, %v1255
  %v1277 = vmax.f32 %v1203, %v1239
  %v1278 = vmax.f32 %v1121, %v1256
  %v1279 = vmax.f32 %v1123, %v1257
  %v1280 = vmax.f32 %v1208, %v1245
  %v1281 = vmax.f32 %v1127, %v1258
  %v1282 = vmax.f32 %v1129, %v1259
  %v1283 = vmax.f32 %v1213, %v1251
  %1284 = vrot.lane.b32.xlu0 %v1109, 100
  %v1285 = vpop.permute.xlu0 %1284
  %1286 = vrot.lane.b32.xlu0 %v1111, 100
  %v1287 = vpop.permute.xlu0 %1286
  %1288 = vrot.lane.b32.xlu0 %v1198, 100
  %v1289 = vpop.permute.xlu0 %1288
  %1290 = vrot.lane.b32.xlu0 %v1115, 100
  %v1291 = vpop.permute.xlu0 %1290
  %1292 = vrot.lane.b32.xlu0 %v1117, 100
  %v1293 = vpop.permute.xlu0 %1292
  %1294 = vrot.lane.b32.xlu0 %v1203, 100
  %v1295 = vpop.permute.xlu0 %1294
  %1296 = vrot.lane.b32.xlu0 %v1121, 100
  %v1297 = vpop.permute.xlu0 %1296
  %1298 = vrot.lane.b32.xlu0 %v1123, 100
  %v1299 = vpop.permute.xlu0 %1298
  %1300 = vrot.lane.b32.xlu0 %v1208, 100
  %v1301 = vpop.permute.xlu0 %1300
  %1302 = vrot.lane.b32.xlu0 %v1127, 100
  %v1303 = vpop.permute.xlu0 %1302
  %1304 = vrot.lane.b32.xlu0 %v1129, 100
  %v1305 = vpop.permute.xlu0 %1304
  %1306 = vrot.lane.b32.xlu0 %v1213, 100
  %v1307 = vpop.permute.xlu0 %1306
  %v1308 = vsel %vm464, %v1285, %v1287
  %v1309 = vsel %vm464, %v1287, %v1289
  %v1310 = vsel %vm464, %v1291, %v1293
  %v1311 = vsel %vm464, %v1293, %v1295
  %v1312 = vsel %vm464, %v1297, %v1299
  %v1313 = vsel %vm464, %v1299, %v1301
  %v1314 = vsel %vm464, %v1303, %v1305
  %v1315 = vsel %vm464, %v1305, %v1307
  %v1328 = vmax.f32 %v1272, %v1308
  %v1329 = vmax.f32 %v1273, %v1309
  %v1330 = vmax.f32 %v1274, %v1289
  %v1331 = vmax.f32 %v1275, %v1310
  %v1332 = vmax.f32 %v1276, %v1311
  %v1333 = vmax.f32 %v1277, %v1295
  %v1334 = vmax.f32 %v1278, %v1312
  %v1335 = vmax.f32 %v1279, %v1313
  %v1336 = vmax.f32 %v1280, %v1301
  %v1337 = vmax.f32 %v1281, %v1314
  %v1338 = vmax.f32 %v1282, %v1315
  %v1339 = vmax.f32 %v1283, %v1307
  %1340 = vrot.lane.b32.xlu0 %v1109, 98
  %v1341 = vpop.permute.xlu0 %1340
  %1342 = vrot.lane.b32.xlu0 %v1111, 98
  %v1343 = vpop.permute.xlu0 %1342
  %1344 = vrot.lane.b32.xlu0 %v1198, 98
  %v1345 = vpop.permute.xlu0 %1344
  %1346 = vrot.lane.b32.xlu0 %v1115, 98
  %v1347 = vpop.permute.xlu0 %1346
  %1348 = vrot.lane.b32.xlu0 %v1117, 98
  %v1349 = vpop.permute.xlu0 %1348
  %1350 = vrot.lane.b32.xlu0 %v1203, 98
  %v1351 = vpop.permute.xlu0 %1350
  %1352 = vrot.lane.b32.xlu0 %v1121, 98
  %v1353 = vpop.permute.xlu0 %1352
  %1354 = vrot.lane.b32.xlu0 %v1123, 98
  %v1355 = vpop.permute.xlu0 %1354
  %1356 = vrot.lane.b32.xlu0 %v1208, 98
  %v1357 = vpop.permute.xlu0 %1356
  %1358 = vrot.lane.b32.xlu0 %v1127, 98
  %v1359 = vpop.permute.xlu0 %1358
  %1360 = vrot.lane.b32.xlu0 %v1129, 98
  %v1361 = vpop.permute.xlu0 %1360
  %1362 = vrot.lane.b32.xlu0 %v1213, 98
  %v1363 = vpop.permute.xlu0 %1362
  %v1364 = vsel %vm590, %v1341, %v1343
  %v1365 = vsel %vm590, %v1343, %v1345
  %v1366 = vsel %vm590, %v1347, %v1349
  %v1367 = vsel %vm590, %v1349, %v1351
  %v1368 = vsel %vm590, %v1353, %v1355
  %v1369 = vsel %vm590, %v1355, %v1357
  %v1370 = vsel %vm590, %v1359, %v1361
  %v1371 = vsel %vm590, %v1361, %v1363
  %v1384 = vmax.f32 %v1328, %v1364
  %v1385 = vmax.f32 %v1329, %v1365
  %v1386 = vmax.f32 %v1330, %v1345
  %v1387 = vmax.f32 %v1331, %v1366
  %v1388 = vmax.f32 %v1332, %v1367
  %v1389 = vmax.f32 %v1333, %v1351
  %v1390 = vmax.f32 %v1334, %v1368
  %v1391 = vmax.f32 %v1335, %v1369
  %v1392 = vmax.f32 %v1336, %v1357
  %v1393 = vmax.f32 %v1337, %v1370
  %v1394 = vmax.f32 %v1338, %v1371
  %v1395 = vmax.f32 %v1339, %v1363
  %1400 = vrot.lane.b32.xlu0 %v1385, 61
  %v1401 = vpop.permute.xlu0 %1400
  %1402 = vrot.lane.b32.xlu0 %v1388, 61
  %v1403 = vpop.permute.xlu0 %1402
  %1404 = vrot.lane.b32.xlu0 %v1391, 61
  %v1405 = vpop.permute.xlu0 %1404
  %1406 = vrot.lane.b32.xlu0 %v1394, 61
  %v1407 = vpop.permute.xlu0 %1406
  %vm1412 = vcmask 7168
  %v1413 = vsel %vm1412, %v1384, %v1401
  %v1414 = vsel %vm1412, %v1387, %v1403
  %v1415 = vsel %vm1412, %v1390, %v1405
  %v1416 = vsel %vm1412, %v1393, %v1407
  %1421 = vrot.lane.b32.xlu0 %v1384, 124
  %v1422 = vpop.permute.xlu0 %1421
  %1423 = vrot.lane.b32.xlu0 %v1387, 124
  %v1424 = vpop.permute.xlu0 %1423
  %1425 = vrot.lane.b32.xlu0 %v1390, 124
  %v1426 = vpop.permute.xlu0 %1425
  %1427 = vrot.lane.b32.xlu0 %v1393, 124
  %v1428 = vpop.permute.xlu0 %1427
  %1433 = vrot.lane.b32.xlu0 %v1385, 57
  %v1434 = vpop.permute.xlu0 %1433
  %1435 = vrot.lane.b32.xlu0 %v1388, 57
  %v1436 = vpop.permute.xlu0 %1435
  %1437 = vrot.lane.b32.xlu0 %v1391, 57
  %v1438 = vpop.permute.xlu0 %1437
  %1439 = vrot.lane.b32.xlu0 %v1394, 57
  %v1440 = vpop.permute.xlu0 %1439
  %v1445 = vsel %vm1412, %v1422, %v1434
  %v1446 = vsel %vm1412, %v1424, %v1436
  %v1447 = vsel %vm1412, %v1426, %v1438
  %v1448 = vsel %vm1412, %v1428, %v1440
  %1449 = vrot.lane.b32.xlu0 %v1384, 72
  %v1450 = vpop.permute.xlu0 %1449
  %1451 = vrot.lane.b32.xlu0 %v1387, 72
  %v1452 = vpop.permute.xlu0 %1451
  %1453 = vrot.lane.b32.xlu0 %v1390, 72
  %v1454 = vpop.permute.xlu0 %1453
  %1455 = vrot.lane.b32.xlu0 %v1393, 72
  %v1456 = vpop.permute.xlu0 %1455
  %1461 = vrot.lane.b32.xlu0 %v1385, 5
  %v1462 = vpop.permute.xlu0 %1461
  %1463 = vrot.lane.b32.xlu0 %v1388, 5
  %v1464 = vpop.permute.xlu0 %1463
  %1465 = vrot.lane.b32.xlu0 %v1391, 5
  %v1466 = vpop.permute.xlu0 %1465
  %1467 = vrot.lane.b32.xlu0 %v1394, 5
  %v1468 = vpop.permute.xlu0 %1467
  %v1473 = vsel %vm1412, %v1450, %v1462
  %v1474 = vsel %vm1412, %v1452, %v1464
  %v1475 = vsel %vm1412, %v1454, %v1466
  %v1476 = vsel %vm1412, %v1456, %v1468
  %1477 = vrot.lane.b32.xlu0 %v1384, 68
  %v1478 = vpop.permute.xlu0 %1477
  %1479 = vrot.lane.b32.xlu0 %v1387, 68
  %v1480 = vpop.permute.xlu0 %1479
  %1481 = vrot.lane.b32.xlu0 %v1390, 68
  %v1482 = vpop.permute.xlu0 %1481
  %1483 = vrot.lane.b32.xlu0 %v1393, 68
  %v1484 = vpop.permute.xlu0 %1483
  %1493 = vrot.lane.b32.xlu0 %v1386, 1
  %v1494 = vpop.permute.xlu0 %1493
  %1495 = vrot.lane.b32.xlu0 %v1389, 1
  %v1496 = vpop.permute.xlu0 %1495
  %1497 = vrot.lane.b32.xlu0 %v1392, 1
  %v1498 = vpop.permute.xlu0 %1497
  %1499 = vrot.lane.b32.xlu0 %v1395, 1
  %v1500 = vpop.permute.xlu0 %1499
  %v1505 = vsel %vm1412, %v1478, %v1494
  %v1506 = vsel %vm1412, %v1480, %v1496
  %v1507 = vsel %vm1412, %v1482, %v1498
  %v1508 = vsel %vm1412, %v1484, %v1500
  %s1509 = scalar_lea.vmem %s0, 1
  %v1510 = vld [vmem:[%s1509] ss:$2 sm:$0xf]
  %v1512 = vlaneseq
  %v1513 = vshrl.u32 %v1512, 7
  %v1514 = vsub.s32 0, %v1513
  %v1515 = vrot.slane %v1510, %v1514
  %v1516 = vlaneseq
  %v1517 = vshrl.u32 %v1516, 7
  %v1518 = vsub.s32 1, %v1517
  %v1519 = vrot.slane %v1510, %v1518
  %v1520 = vlaneseq
  %v1521 = vshrl.u32 %v1520, 7
  %v1522 = vsub.s32 2, %v1521
  %v1523 = vrot.slane %v1510, %v1522
  %v1524 = vlaneseq
  %v1525 = vshrl.u32 %v1524, 7
  %v1526 = vsub.s32 3, %v1525
  %v1527 = vrot.slane %v1510, %v1526
  %v1532 = vmul.f32 %v1515, %v94
  %v1533 = vmul.f32 %v1519, %v94
  %v1534 = vmul.f32 %v1523, %v94
  %v1535 = vmul.f32 %v1527, %v94
  %v1536 = vmul.f32 %v1515, %v99
  %v1537 = vmul.f32 %v1519, %v99
  %v1538 = vmul.f32 %v1523, %v99
  %v1539 = vmul.f32 %v1527, %v99
  %v1540 = vmul.f32 %v1515, %v111
  %v1541 = vmul.f32 %v1519, %v111
  %v1542 = vmul.f32 %v1523, %v111
  %v1543 = vmul.f32 %v1527, %v111
  %v1544 = vmul.f32 %v1515, %v115
  %v1545 = vmul.f32 %v1519, %v115
  %v1546 = vmul.f32 %v1523, %v115
  %v1547 = vmul.f32 %v1527, %v115
  %1556 = vrot.lane.b32.xlu0 %v1540, 127
  %v1557 = vpop.permute.xlu0 %1556
  %1558 = vrot.lane.b32.xlu0 %v1541, 127
  %v1559 = vpop.permute.xlu0 %1558
  %1560 = vrot.lane.b32.xlu0 %v1542, 127
  %v1561 = vpop.permute.xlu0 %1560
  %1562 = vrot.lane.b32.xlu0 %v1543, 127
  %v1563 = vpop.permute.xlu0 %1562
  %1564 = vrot.lane.b32.xlu0 %v1544, 127
  %v1565 = vpop.permute.xlu0 %1564
  %1566 = vrot.lane.b32.xlu0 %v1545, 127
  %v1567 = vpop.permute.xlu0 %1566
  %1568 = vrot.lane.b32.xlu0 %v1546, 127
  %v1569 = vpop.permute.xlu0 %1568
  %1570 = vrot.lane.b32.xlu0 %v1547, 127
  %v1571 = vpop.permute.xlu0 %1570
  %v1572 = vsel %vm149, %v1557, %v1559
  %v1573 = vsel %vm149, %v1559, %v1561
  %v1574 = vsel %vm149, %v1561, %v1563
  %v1575 = vsel %vm149, %v1565, %v1567
  %v1576 = vsel %vm149, %v1567, %v1569
  %v1577 = vsel %vm149, %v1569, %v1571
  %v1586 = vadd.f32 %v1532, %v1572
  %v1587 = vadd.f32 %v1533, %v1573
  %v1588 = vadd.f32 %v1534, %v1574
  %v1589 = vadd.f32 %v1535, %v1563
  %v1590 = vadd.f32 %v1536, %v1575
  %v1591 = vadd.f32 %v1537, %v1576
  %v1592 = vadd.f32 %v1538, %v1577
  %v1593 = vadd.f32 %v1539, %v1571
  %v1594 = vmul.f32 %v1515, %v174
  %v1595 = vmul.f32 %v1519, %v174
  %v1596 = vmul.f32 %v1523, %v174
  %v1597 = vmul.f32 %v1527, %v174
  %v1598 = vmul.f32 %v1515, %v178
  %v1599 = vmul.f32 %v1519, %v178
  %v1600 = vmul.f32 %v1523, %v178
  %v1601 = vmul.f32 %v1527, %v178
  %1610 = vrot.lane.b32.xlu0 %v1594, 126
  %v1611 = vpop.permute.xlu0 %1610
  %1612 = vrot.lane.b32.xlu0 %v1595, 126
  %v1613 = vpop.permute.xlu0 %1612
  %1614 = vrot.lane.b32.xlu0 %v1596, 126
  %v1615 = vpop.permute.xlu0 %1614
  %1616 = vrot.lane.b32.xlu0 %v1597, 126
  %v1617 = vpop.permute.xlu0 %1616
  %1618 = vrot.lane.b32.xlu0 %v1598, 126
  %v1619 = vpop.permute.xlu0 %1618
  %1620 = vrot.lane.b32.xlu0 %v1599, 126
  %v1621 = vpop.permute.xlu0 %1620
  %1622 = vrot.lane.b32.xlu0 %v1600, 126
  %v1623 = vpop.permute.xlu0 %1622
  %1624 = vrot.lane.b32.xlu0 %v1601, 126
  %v1625 = vpop.permute.xlu0 %1624
  %v1626 = vsel %vm212, %v1611, %v1613
  %v1627 = vsel %vm212, %v1613, %v1615
  %v1628 = vsel %vm212, %v1615, %v1617
  %v1629 = vsel %vm212, %v1619, %v1621
  %v1630 = vsel %vm212, %v1621, %v1623
  %v1631 = vsel %vm212, %v1623, %v1625
  %v1640 = vadd.f32 %v1586, %v1626
  %v1641 = vadd.f32 %v1587, %v1627
  %v1642 = vadd.f32 %v1588, %v1628
  %v1643 = vadd.f32 %v1589, %v1617
  %v1644 = vadd.f32 %v1590, %v1629
  %v1645 = vadd.f32 %v1591, %v1630
  %v1646 = vadd.f32 %v1592, %v1631
  %v1647 = vadd.f32 %v1593, %v1625
  %v1648 = vmul.f32 %v1515, %v237
  %v1649 = vmul.f32 %v1519, %v237
  %v1650 = vmul.f32 %v1523, %v237
  %v1651 = vmul.f32 %v1527, %v237
  %v1652 = vmul.f32 %v1515, %v241
  %v1653 = vmul.f32 %v1519, %v241
  %v1654 = vmul.f32 %v1523, %v241
  %v1655 = vmul.f32 %v1527, %v241
  %1664 = vrot.lane.b32.xlu0 %v1648, 114
  %v1665 = vpop.permute.xlu0 %1664
  %1666 = vrot.lane.b32.xlu0 %v1649, 114
  %v1667 = vpop.permute.xlu0 %1666
  %1668 = vrot.lane.b32.xlu0 %v1650, 114
  %v1669 = vpop.permute.xlu0 %1668
  %1670 = vrot.lane.b32.xlu0 %v1651, 114
  %v1671 = vpop.permute.xlu0 %1670
  %1672 = vrot.lane.b32.xlu0 %v1652, 114
  %v1673 = vpop.permute.xlu0 %1672
  %1674 = vrot.lane.b32.xlu0 %v1653, 114
  %v1675 = vpop.permute.xlu0 %1674
  %1676 = vrot.lane.b32.xlu0 %v1654, 114
  %v1677 = vpop.permute.xlu0 %1676
  %1678 = vrot.lane.b32.xlu0 %v1655, 114
  %v1679 = vpop.permute.xlu0 %1678
  %v1680 = vsel %vm275, %v1665, %v1667
  %v1681 = vsel %vm275, %v1667, %v1669
  %v1682 = vsel %vm275, %v1669, %v1671
  %v1683 = vsel %vm275, %v1673, %v1675
  %v1684 = vsel %vm275, %v1675, %v1677
  %v1685 = vsel %vm275, %v1677, %v1679
  %v1694 = vadd.f32 %v1640, %v1680
  %v1695 = vadd.f32 %v1641, %v1681
  %v1696 = vadd.f32 %v1642, %v1682
  %v1697 = vadd.f32 %v1643, %v1671
  %v1698 = vadd.f32 %v1644, %v1683
  %v1699 = vadd.f32 %v1645, %v1684
  %v1700 = vadd.f32 %v1646, %v1685
  %v1701 = vadd.f32 %v1647, %v1679
  %v1702 = vmul.f32 %v1515, %v300
  %v1703 = vmul.f32 %v1519, %v300
  %v1704 = vmul.f32 %v1523, %v300
  %v1705 = vmul.f32 %v1527, %v300
  %v1706 = vmul.f32 %v1515, %v304
  %v1707 = vmul.f32 %v1519, %v304
  %v1708 = vmul.f32 %v1523, %v304
  %v1709 = vmul.f32 %v1527, %v304
  %1718 = vrot.lane.b32.xlu0 %v1702, 113
  %v1719 = vpop.permute.xlu0 %1718
  %1720 = vrot.lane.b32.xlu0 %v1703, 113
  %v1721 = vpop.permute.xlu0 %1720
  %1722 = vrot.lane.b32.xlu0 %v1704, 113
  %v1723 = vpop.permute.xlu0 %1722
  %1724 = vrot.lane.b32.xlu0 %v1705, 113
  %v1725 = vpop.permute.xlu0 %1724
  %1726 = vrot.lane.b32.xlu0 %v1706, 113
  %v1727 = vpop.permute.xlu0 %1726
  %1728 = vrot.lane.b32.xlu0 %v1707, 113
  %v1729 = vpop.permute.xlu0 %1728
  %1730 = vrot.lane.b32.xlu0 %v1708, 113
  %v1731 = vpop.permute.xlu0 %1730
  %1732 = vrot.lane.b32.xlu0 %v1709, 113
  %v1733 = vpop.permute.xlu0 %1732
  %v1734 = vsel %vm338, %v1719, %v1721
  %v1735 = vsel %vm338, %v1721, %v1723
  %v1736 = vsel %vm338, %v1723, %v1725
  %v1737 = vsel %vm338, %v1727, %v1729
  %v1738 = vsel %vm338, %v1729, %v1731
  %v1739 = vsel %vm338, %v1731, %v1733
  %v1748 = vadd.f32 %v1694, %v1734
  %v1749 = vadd.f32 %v1695, %v1735
  %v1750 = vadd.f32 %v1696, %v1736
  %v1751 = vadd.f32 %v1697, %v1725
  %v1752 = vadd.f32 %v1698, %v1737
  %v1753 = vadd.f32 %v1699, %v1738
  %v1754 = vadd.f32 %v1700, %v1739
  %v1755 = vadd.f32 %v1701, %v1733
  %v1756 = vmul.f32 %v1515, %v363
  %v1757 = vmul.f32 %v1519, %v363
  %v1758 = vmul.f32 %v1523, %v363
  %v1759 = vmul.f32 %v1527, %v363
  %v1760 = vmul.f32 %v1515, %v367
  %v1761 = vmul.f32 %v1519, %v367
  %v1762 = vmul.f32 %v1523, %v367
  %v1763 = vmul.f32 %v1527, %v367
  %1772 = vrot.lane.b32.xlu0 %v1756, 112
  %v1773 = vpop.permute.xlu0 %1772
  %1774 = vrot.lane.b32.xlu0 %v1757, 112
  %v1775 = vpop.permute.xlu0 %1774
  %1776 = vrot.lane.b32.xlu0 %v1758, 112
  %v1777 = vpop.permute.xlu0 %1776
  %1778 = vrot.lane.b32.xlu0 %v1759, 112
  %v1779 = vpop.permute.xlu0 %1778
  %1780 = vrot.lane.b32.xlu0 %v1760, 112
  %v1781 = vpop.permute.xlu0 %1780
  %1782 = vrot.lane.b32.xlu0 %v1761, 112
  %v1783 = vpop.permute.xlu0 %1782
  %1784 = vrot.lane.b32.xlu0 %v1762, 112
  %v1785 = vpop.permute.xlu0 %1784
  %1786 = vrot.lane.b32.xlu0 %v1763, 112
  %v1787 = vpop.permute.xlu0 %1786
  %v1788 = vsel %vm401, %v1773, %v1775
  %v1789 = vsel %vm401, %v1775, %v1777
  %v1790 = vsel %vm401, %v1777, %v1779
  %v1791 = vsel %vm401, %v1781, %v1783
  %v1792 = vsel %vm401, %v1783, %v1785
  %v1793 = vsel %vm401, %v1785, %v1787
  %v1802 = vadd.f32 %v1748, %v1788
  %v1803 = vadd.f32 %v1749, %v1789
  %v1804 = vadd.f32 %v1750, %v1790
  %v1805 = vadd.f32 %v1751, %v1779
  %v1806 = vadd.f32 %v1752, %v1791
  %v1807 = vadd.f32 %v1753, %v1792
  %v1808 = vadd.f32 %v1754, %v1793
  %v1809 = vadd.f32 %v1755, %v1787
  %v1810 = vmul.f32 %v1515, %v426
  %v1811 = vmul.f32 %v1519, %v426
  %v1812 = vmul.f32 %v1523, %v426
  %v1813 = vmul.f32 %v1527, %v426
  %v1814 = vmul.f32 %v1515, %v430
  %v1815 = vmul.f32 %v1519, %v430
  %v1816 = vmul.f32 %v1523, %v430
  %v1817 = vmul.f32 %v1527, %v430
  %1826 = vrot.lane.b32.xlu0 %v1810, 100
  %v1827 = vpop.permute.xlu0 %1826
  %1828 = vrot.lane.b32.xlu0 %v1811, 100
  %v1829 = vpop.permute.xlu0 %1828
  %1830 = vrot.lane.b32.xlu0 %v1812, 100
  %v1831 = vpop.permute.xlu0 %1830
  %1832 = vrot.lane.b32.xlu0 %v1813, 100
  %v1833 = vpop.permute.xlu0 %1832
  %1834 = vrot.lane.b32.xlu0 %v1814, 100
  %v1835 = vpop.permute.xlu0 %1834
  %1836 = vrot.lane.b32.xlu0 %v1815, 100
  %v1837 = vpop.permute.xlu0 %1836
  %1838 = vrot.lane.b32.xlu0 %v1816, 100
  %v1839 = vpop.permute.xlu0 %1838
  %1840 = vrot.lane.b32.xlu0 %v1817, 100
  %v1841 = vpop.permute.xlu0 %1840
  %v1842 = vsel %vm464, %v1827, %v1829
  %v1843 = vsel %vm464, %v1829, %v1831
  %v1844 = vsel %vm464, %v1831, %v1833
  %v1845 = vsel %vm464, %v1835, %v1837
  %v1846 = vsel %vm464, %v1837, %v1839
  %v1847 = vsel %vm464, %v1839, %v1841
  %v1856 = vadd.f32 %v1802, %v1842
  %v1857 = vadd.f32 %v1803, %v1843
  %v1858 = vadd.f32 %v1804, %v1844
  %v1859 = vadd.f32 %v1805, %v1833
  %v1860 = vadd.f32 %v1806, %v1845
  %v1861 = vadd.f32 %v1807, %v1846
  %v1862 = vadd.f32 %v1808, %v1847
  %v1863 = vadd.f32 %v1809, %v1841
  %v1864 = vmul.f32 %v1515, %v489
  %v1865 = vmul.f32 %v1519, %v489
  %v1866 = vmul.f32 %v1523, %v489
  %v1867 = vmul.f32 %v1527, %v489
  %v1868 = vmul.f32 %v1515, %v493
  %v1869 = vmul.f32 %v1519, %v493
  %v1870 = vmul.f32 %v1523, %v493
  %v1871 = vmul.f32 %v1527, %v493
  %1880 = vrot.lane.b32.xlu0 %v1864, 99
  %v1881 = vpop.permute.xlu0 %1880
  %1882 = vrot.lane.b32.xlu0 %v1865, 99
  %v1883 = vpop.permute.xlu0 %1882
  %1884 = vrot.lane.b32.xlu0 %v1866, 99
  %v1885 = vpop.permute.xlu0 %1884
  %1886 = vrot.lane.b32.xlu0 %v1867, 99
  %v1887 = vpop.permute.xlu0 %1886
  %1888 = vrot.lane.b32.xlu0 %v1868, 99
  %v1889 = vpop.permute.xlu0 %1888
  %1890 = vrot.lane.b32.xlu0 %v1869, 99
  %v1891 = vpop.permute.xlu0 %1890
  %1892 = vrot.lane.b32.xlu0 %v1870, 99
  %v1893 = vpop.permute.xlu0 %1892
  %1894 = vrot.lane.b32.xlu0 %v1871, 99
  %v1895 = vpop.permute.xlu0 %1894
  %v1896 = vsel %vm527, %v1881, %v1883
  %v1897 = vsel %vm527, %v1883, %v1885
  %v1898 = vsel %vm527, %v1885, %v1887
  %v1899 = vsel %vm527, %v1889, %v1891
  %v1900 = vsel %vm527, %v1891, %v1893
  %v1901 = vsel %vm527, %v1893, %v1895
  %v1910 = vadd.f32 %v1856, %v1896
  %v1911 = vadd.f32 %v1857, %v1897
  %v1912 = vadd.f32 %v1858, %v1898
  %v1913 = vadd.f32 %v1859, %v1887
  %v1914 = vadd.f32 %v1860, %v1899
  %v1915 = vadd.f32 %v1861, %v1900
  %v1916 = vadd.f32 %v1862, %v1901
  %v1917 = vadd.f32 %v1863, %v1895
  %v1918 = vmul.f32 %v1515, %v552
  %v1919 = vmul.f32 %v1519, %v552
  %v1920 = vmul.f32 %v1523, %v552
  %v1921 = vmul.f32 %v1527, %v552
  %v1922 = vmul.f32 %v1515, %v556
  %v1923 = vmul.f32 %v1519, %v556
  %v1924 = vmul.f32 %v1523, %v556
  %v1925 = vmul.f32 %v1527, %v556
  %1934 = vrot.lane.b32.xlu0 %v1918, 98
  %v1935 = vpop.permute.xlu0 %1934
  %1936 = vrot.lane.b32.xlu0 %v1919, 98
  %v1937 = vpop.permute.xlu0 %1936
  %1938 = vrot.lane.b32.xlu0 %v1920, 98
  %v1939 = vpop.permute.xlu0 %1938
  %1940 = vrot.lane.b32.xlu0 %v1921, 98
  %v1941 = vpop.permute.xlu0 %1940
  %1942 = vrot.lane.b32.xlu0 %v1922, 98
  %v1943 = vpop.permute.xlu0 %1942
  %1944 = vrot.lane.b32.xlu0 %v1923, 98
  %v1945 = vpop.permute.xlu0 %1944
  %1946 = vrot.lane.b32.xlu0 %v1924, 98
  %v1947 = vpop.permute.xlu0 %1946
  %1948 = vrot.lane.b32.xlu0 %v1925, 98
  %v1949 = vpop.permute.xlu0 %1948
  %v1950 = vsel %vm590, %v1935, %v1937
  %v1951 = vsel %vm590, %v1937, %v1939
  %v1952 = vsel %vm590, %v1939, %v1941
  %v1953 = vsel %vm590, %v1943, %v1945
  %v1954 = vsel %vm590, %v1945, %v1947
  %v1955 = vsel %vm590, %v1947, %v1949
  %v1964 = vadd.f32 %v1910, %v1950
  %v1965 = vadd.f32 %v1911, %v1951
  %v1966 = vadd.f32 %v1912, %v1952
  %v1967 = vadd.f32 %v1913, %v1941
  %v1968 = vadd.f32 %v1914, %v1953
  %v1969 = vadd.f32 %v1915, %v1954
  %v1970 = vadd.f32 %v1916, %v1955
  %v1971 = vadd.f32 %v1917, %v1949
  %v1972 = vmul.f32 %v1964, %v617
  %v1973 = vmul.f32 %v1965, %v621
  %v1974 = vmul.f32 %v1966, %v625
  %v1975 = vmul.f32 %v1967, %v629
  %v1976 = vmul.f32 %v1968, %v617
  %v1977 = vmul.f32 %v1969, %v621
  %v1978 = vmul.f32 %v1970, %v625
  %v1979 = vmul.f32 %v1971, %v629
  %v1980 = vadd.f32 %v1972, %v1973
  %v1981 = vadd.f32 %v1980, %v1974
  %v1982 = vsel %vm644, %v1975, 0.0
  %v1983 = vadd.f32 %v1981, %v1982
  %1984 = vadd.xlane.f32.xlu0 %v1983
  %v1985 = vpop.xlane.xlu0 %1984
  %v1986 = vadd.f32 %v1976, %v1977
  %v1987 = vadd.f32 %v1986, %v1978
  %v1988 = vsel %vm644, %v1979, 0.0
  %v1989 = vadd.f32 %v1987, %v1988
  %1990 = vadd.xlane.f32.xlu0 %v1989
  %v1991 = vpop.xlane.xlu0 %1990
  %v1992 = vmul.f32 %v1985, %v655
  %v1993 = vmul.f32 %v1991, %v655
  %v1994 = vmul.f32 %v1972, %v1972
  %v1995 = vmul.f32 %v1973, %v1973
  %v1996 = vmul.f32 %v1974, %v1974
  %v1997 = vmul.f32 %v1975, %v1975
  %v1998 = vmul.f32 %v1976, %v1976
  %v1999 = vmul.f32 %v1977, %v1977
  %v2000 = vmul.f32 %v1978, %v1978
  %v2001 = vmul.f32 %v1979, %v1979
  %v2002 = vadd.f32 %v1994, %v1995
  %v2003 = vadd.f32 %v2002, %v1996
  %v2004 = vsel %vm644, %v1997, 0.0
  %v2005 = vadd.f32 %v2003, %v2004
  %2006 = vadd.xlane.f32.xlu0 %v2005
  %v2007 = vpop.xlane.xlu0 %2006
  %v2008 = vadd.f32 %v1998, %v1999
  %v2009 = vadd.f32 %v2008, %v2000
  %v2010 = vsel %vm644, %v2001, 0.0
  %v2011 = vadd.f32 %v2009, %v2010
  %2012 = vadd.xlane.f32.xlu0 %v2011
  %v2013 = vpop.xlane.xlu0 %2012
  %v2014 = vmul.f32 %v2007, %v655
  %v2015 = vmul.f32 %v2013, %v655
  %v2016 = vmul.f32 %v1992, %v1992
  %v2017 = vmul.f32 %v1993, %v1993
  %v2018 = vsub.f32 %v2014, %v2016
  %v2019 = vsub.f32 %v2015, %v2017
  %v2020 = vmax.f32 %v2018, 0.0
  %v2021 = vmax.f32 %v2019, 0.0
  %v2022 = vadd.f32 %v2020, 1e-05
  %v2023 = vadd.f32 %v2021, 1e-05
  %v2024 = vrsqrt.pop %v2022
  %v2025 = vrsqrt.pop %v2023
  %v2026 = vmul.f32 %v53, %v2024
  %v2027 = vmul.f32 %v54, %v2025
  %v2028 = vmul.f32 %v1992, %v2026
  %v2029 = vmul.f32 %v1993, %v2027
  %v2030 = vsub.f32 %v55, %v2028
  %v2031 = vsub.f32 %v56, %v2029
  %2040 = vrot.lane.b32.xlu0 %v1972, 127
  %v2041 = vpop.permute.xlu0 %2040
  %2042 = vrot.lane.b32.xlu0 %v1973, 127
  %v2043 = vpop.permute.xlu0 %2042
  %2044 = vrot.lane.b32.xlu0 %v1974, 127
  %v2045 = vpop.permute.xlu0 %2044
  %2046 = vrot.lane.b32.xlu0 %v1975, 127
  %v2047 = vpop.permute.xlu0 %2046
  %2048 = vrot.lane.b32.xlu0 %v1976, 127
  %v2049 = vpop.permute.xlu0 %2048
  %2050 = vrot.lane.b32.xlu0 %v1977, 127
  %v2051 = vpop.permute.xlu0 %2050
  %2052 = vrot.lane.b32.xlu0 %v1978, 127
  %v2053 = vpop.permute.xlu0 %2052
  %2054 = vrot.lane.b32.xlu0 %v1979, 127
  %v2055 = vpop.permute.xlu0 %2054
  %v2056 = vsel %vm149, %v2041, %v2043
  %v2057 = vsel %vm149, %v2043, %v2045
  %v2058 = vsel %vm149, %v2045, %v2047
  %v2059 = vsel %vm149, %v2049, %v2051
  %v2060 = vsel %vm149, %v2051, %v2053
  %v2061 = vsel %vm149, %v2053, %v2055
  %v2070 = vmax.f32 %v1972, %v2056
  %v2071 = vmax.f32 %v1973, %v2057
  %v2072 = vmax.f32 %v1974, %v2058
  %v2073 = vmax.f32 %v1975, %v2047
  %v2074 = vmax.f32 %v1976, %v2059
  %v2075 = vmax.f32 %v1977, %v2060
  %v2076 = vmax.f32 %v1978, %v2061
  %v2077 = vmax.f32 %v1979, %v2055
  %2086 = vrot.lane.b32.xlu0 %v2070, 114
  %v2087 = vpop.permute.xlu0 %2086
  %2088 = vrot.lane.b32.xlu0 %v2071, 114
  %v2089 = vpop.permute.xlu0 %2088
  %2090 = vrot.lane.b32.xlu0 %v2072, 114
  %v2091 = vpop.permute.xlu0 %2090
  %2092 = vrot.lane.b32.xlu0 %v2073, 114
  %v2093 = vpop.permute.xlu0 %2092
  %2094 = vrot.lane.b32.xlu0 %v2074, 114
  %v2095 = vpop.permute.xlu0 %2094
  %2096 = vrot.lane.b32.xlu0 %v2075, 114
  %v2097 = vpop.permute.xlu0 %2096
  %2098 = vrot.lane.b32.xlu0 %v2076, 114
  %v2099 = vpop.permute.xlu0 %2098
  %2100 = vrot.lane.b32.xlu0 %v2077, 114
  %v2101 = vpop.permute.xlu0 %2100
  %v2102 = vsel %vm275, %v2087, %v2089
  %v2103 = vsel %vm275, %v2089, %v2091
  %v2104 = vsel %vm275, %v2091, %v2093
  %v2105 = vsel %vm275, %v2095, %v2097
  %v2106 = vsel %vm275, %v2097, %v2099
  %v2107 = vsel %vm275, %v2099, %v2101
  %v2114 = vmax.f32 %v2070, %v2102
  %v2115 = vmax.f32 %v2071, %v2103
  %v2116 = vmax.f32 %v2072, %v2104
  %v2117 = vmax.f32 %v2074, %v2105
  %v2118 = vmax.f32 %v2075, %v2106
  %v2119 = vmax.f32 %v2076, %v2107
  %2121 = vset.pattern.permute.xlu0 0
  %2122 = vperm.xlu0 %2121, %v2026
  %v2123 = vpop.permute.xlu0 %2122
  %2126 = vset.pattern.permute.xlu0 0
  %2127 = vperm.xlu0 %2126, %v2027
  %v2128 = vpop.permute.xlu0 %2127
  %v2130 = vmul.f32 %v2114, %v2123
  %v2131 = vmul.f32 %v2115, %v2123
  %v2132 = vmul.f32 %v2116, %v2123
  %v2133 = vmul.f32 %v2117, %v2128
  %v2134 = vmul.f32 %v2118, %v2128
  %v2135 = vmul.f32 %v2119, %v2128
  %2137 = vset.pattern.permute.xlu0 0
  %2138 = vperm.xlu0 %2137, %v2030
  %v2139 = vpop.permute.xlu0 %2138
  %2142 = vset.pattern.permute.xlu0 0
  %2143 = vperm.xlu0 %2142, %v2031
  %v2144 = vpop.permute.xlu0 %2143
  %v2146 = vadd.f32 %v2130, %v2139
  %v2147 = vadd.f32 %v2131, %v2139
  %v2148 = vadd.f32 %v2132, %v2139
  %v2149 = vadd.f32 %v2133, %v2144
  %v2150 = vadd.f32 %v2134, %v2144
  %v2151 = vadd.f32 %v2135, %v2144
  %v2152 = vmax.f32 %v2146, 0.0
  %v2153 = vmax.f32 %v2147, 0.0
  %v2154 = vmax.f32 %v2148, 0.0
  %v2155 = vmax.f32 %v2149, 0.0
  %v2156 = vmax.f32 %v2150, 0.0
  %v2157 = vmax.f32 %v2151, 0.0
  %2164 = vrot.lane.b32.xlu0 %v2152, 126
  %v2165 = vpop.permute.xlu0 %2164
  %2166 = vrot.lane.b32.xlu0 %v2153, 126
  %v2167 = vpop.permute.xlu0 %2166
  %2168 = vrot.lane.b32.xlu0 %v2154, 126
  %v2169 = vpop.permute.xlu0 %2168
  %2170 = vrot.lane.b32.xlu0 %v2155, 126
  %v2171 = vpop.permute.xlu0 %2170
  %2172 = vrot.lane.b32.xlu0 %v2156, 126
  %v2173 = vpop.permute.xlu0 %2172
  %2174 = vrot.lane.b32.xlu0 %v2157, 126
  %v2175 = vpop.permute.xlu0 %2174
  %v2176 = vsel %vm212, %v2165, %v2167
  %v2177 = vsel %vm212, %v2167, %v2169
  %v2178 = vsel %vm212, %v2171, %v2173
  %v2179 = vsel %vm212, %v2173, %v2175
  %2186 = vrot.lane.b32.xlu0 %v2152, 124
  %v2187 = vpop.permute.xlu0 %2186
  %2188 = vrot.lane.b32.xlu0 %v2153, 124
  %v2189 = vpop.permute.xlu0 %2188
  %2190 = vrot.lane.b32.xlu0 %v2154, 124
  %v2191 = vpop.permute.xlu0 %2190
  %2192 = vrot.lane.b32.xlu0 %v2155, 124
  %v2193 = vpop.permute.xlu0 %2192
  %2194 = vrot.lane.b32.xlu0 %v2156, 124
  %v2195 = vpop.permute.xlu0 %2194
  %2196 = vrot.lane.b32.xlu0 %v2157, 124
  %v2197 = vpop.permute.xlu0 %2196
  %v2198 = vsel %vm862, %v2187, %v2189
  %v2199 = vsel %vm862, %v2189, %v2191
  %v2200 = vsel %vm862, %v2193, %v2195
  %v2201 = vsel %vm862, %v2195, %v2197
  %2208 = vrot.lane.b32.xlu0 %v2152, 100
  %v2209 = vpop.permute.xlu0 %2208
  %2210 = vrot.lane.b32.xlu0 %v2153, 100
  %v2211 = vpop.permute.xlu0 %2210
  %2212 = vrot.lane.b32.xlu0 %v2154, 100
  %v2213 = vpop.permute.xlu0 %2212
  %2214 = vrot.lane.b32.xlu0 %v2155, 100
  %v2215 = vpop.permute.xlu0 %2214
  %2216 = vrot.lane.b32.xlu0 %v2156, 100
  %v2217 = vpop.permute.xlu0 %2216
  %2218 = vrot.lane.b32.xlu0 %v2157, 100
  %v2219 = vpop.permute.xlu0 %2218
  %v2220 = vsel %vm464, %v2209, %v2211
  %v2221 = vsel %vm464, %v2211, %v2213
  %v2222 = vsel %vm464, %v2215, %v2217
  %v2223 = vsel %vm464, %v2217, %v2219
  %2230 = vrot.lane.b32.xlu0 %v2152, 98
  %v2231 = vpop.permute.xlu0 %2230
  %2232 = vrot.lane.b32.xlu0 %v2153, 98
  %v2233 = vpop.permute.xlu0 %2232
  %2234 = vrot.lane.b32.xlu0 %v2154, 98
  %v2235 = vpop.permute.xlu0 %2234
  %2236 = vrot.lane.b32.xlu0 %v2155, 98
  %v2237 = vpop.permute.xlu0 %2236
  %2238 = vrot.lane.b32.xlu0 %v2156, 98
  %v2239 = vpop.permute.xlu0 %2238
  %2240 = vrot.lane.b32.xlu0 %v2157, 98
  %v2241 = vpop.permute.xlu0 %2240
  %v2242 = vsel %vm590, %v2231, %v2233
  %v2243 = vsel %vm590, %v2233, %v2235
  %v2244 = vsel %vm590, %v2237, %v2239
  %v2245 = vsel %vm590, %v2239, %v2241
  %2252 = vrot.lane.b32.xlu0 %v2152, 96
  %v2253 = vpop.permute.xlu0 %2252
  %2254 = vrot.lane.b32.xlu0 %v2153, 96
  %v2255 = vpop.permute.xlu0 %2254
  %2256 = vrot.lane.b32.xlu0 %v2154, 96
  %v2257 = vpop.permute.xlu0 %2256
  %2258 = vrot.lane.b32.xlu0 %v2155, 96
  %v2259 = vpop.permute.xlu0 %2258
  %2260 = vrot.lane.b32.xlu0 %v2156, 96
  %v2261 = vpop.permute.xlu0 %2260
  %2262 = vrot.lane.b32.xlu0 %v2157, 96
  %v2263 = vpop.permute.xlu0 %2262
  %v2264 = vsel %vm929, %v2253, %v2255
  %v2265 = vsel %vm929, %v2255, %v2257
  %v2266 = vsel %vm929, %v2259, %v2261
  %v2267 = vsel %vm929, %v2261, %v2263
  %2274 = vrot.lane.b32.xlu0 %v2152, 72
  %v2275 = vpop.permute.xlu0 %2274
  %2276 = vrot.lane.b32.xlu0 %v2153, 72
  %v2277 = vpop.permute.xlu0 %2276
  %2278 = vrot.lane.b32.xlu0 %v2154, 72
  %v2279 = vpop.permute.xlu0 %2278
  %2280 = vrot.lane.b32.xlu0 %v2155, 72
  %v2281 = vpop.permute.xlu0 %2280
  %2282 = vrot.lane.b32.xlu0 %v2156, 72
  %v2283 = vpop.permute.xlu0 %2282
  %2284 = vrot.lane.b32.xlu0 %v2157, 72
  %v2285 = vpop.permute.xlu0 %2284
  %v2286 = vsel %vm952, %v2275, %v2277
  %v2287 = vsel %vm952, %v2277, %v2279
  %v2288 = vsel %vm952, %v2281, %v2283
  %v2289 = vsel %vm952, %v2283, %v2285
  %2296 = vrot.lane.b32.xlu0 %v2152, 70
  %v2297 = vpop.permute.xlu0 %2296
  %2298 = vrot.lane.b32.xlu0 %v2153, 70
  %v2299 = vpop.permute.xlu0 %2298
  %2300 = vrot.lane.b32.xlu0 %v2154, 70
  %v2301 = vpop.permute.xlu0 %2300
  %2302 = vrot.lane.b32.xlu0 %v2155, 70
  %v2303 = vpop.permute.xlu0 %2302
  %2304 = vrot.lane.b32.xlu0 %v2156, 70
  %v2305 = vpop.permute.xlu0 %2304
  %2306 = vrot.lane.b32.xlu0 %v2157, 70
  %v2307 = vpop.permute.xlu0 %2306
  %v2308 = vsel %vm975, %v2297, %v2299
  %v2309 = vsel %vm975, %v2299, %v2301
  %v2310 = vsel %vm975, %v2303, %v2305
  %v2311 = vsel %vm975, %v2305, %v2307
  %2318 = vrot.lane.b32.xlu0 %v2152, 68
  %v2319 = vpop.permute.xlu0 %2318
  %2320 = vrot.lane.b32.xlu0 %v2153, 68
  %v2321 = vpop.permute.xlu0 %2320
  %2322 = vrot.lane.b32.xlu0 %v2154, 68
  %v2323 = vpop.permute.xlu0 %2322
  %2324 = vrot.lane.b32.xlu0 %v2155, 68
  %v2325 = vpop.permute.xlu0 %2324
  %2326 = vrot.lane.b32.xlu0 %v2156, 68
  %v2327 = vpop.permute.xlu0 %2326
  %2328 = vrot.lane.b32.xlu0 %v2157, 68
  %v2329 = vpop.permute.xlu0 %2328
  %v2330 = vsel %vm998, %v2319, %v2321
  %v2331 = vsel %vm998, %v2321, %v2323
  %v2332 = vsel %vm998, %v2325, %v2327
  %v2333 = vsel %vm998, %v2327, %v2329
  %2340 = vmatprep.subr.mxu0 %v2311
  %2341 = vmatpush1.msra.mxu0 %v2310
  %2342 = vmatprep.subr.mxu0 %v2309
  %2343 = vmatpush1.msra.mxu0 %v2308
  %2344 = vmatprep.subr.mxu0 %v2289
  %2345 = vmatpush1.msra.mxu0 %v2288
  %2346 = vmatprep.subr.mxu0 %v2287
  %2347 = vmatpush1.msra.mxu0 %v2286
  %2348 = vmatprep.subr.mxu0 %v2267
  %2349 = vmatpush1.msra.mxu0 %v2266
  %2350 = vmatprep.subr.mxu0 %v2265
  %2351 = vmatpush1.msra.mxu0 %v2264
  %2352 = vmatprep.subr.mxu0 %v2245
  %2353 = vmatpush1.msra.mxu0 %v2244
  %2354 = vmatprep.subr.mxu0 %v2243
  %2355 = vmatpush1.msra.mxu0 %v2242
  %2356 = vmatprep.subr.mxu0 %v2223
  %2357 = vmatpush1.msra.mxu0 %v2222
  %2358 = vmatprep.subr.mxu0 %v2221
  %2359 = vmatpush1.msra.mxu0 %v2220
  %2360 = vmatprep.subr.mxu0 %v2201
  %2361 = vmatpush1.msra.mxu0 %v2200
  %2362 = vmatprep.subr.mxu0 %v2199
  %2363 = vmatpush1.msra.mxu0 %v2198
  %2364 = vmatprep.subr.mxu0 %v2179
  %2365 = vmatpush1.msra.mxu0 %v2178
  %2366 = vmatprep.subr.mxu0 %v2177
  %2367 = vmatpush1.msra.mxu0 %v2176
  %2368 = vmatprep.subr.mxu0 %v2156
  %2369 = vmatpush1.msra.mxu0 %v2155
  %2370 = vmatprep.subr.mxu0 %v2153
  %2371 = vmatpush1.msra.mxu0 %v2152
  %2372 = vmatprep.subr.mxu0 0.0
  %2373 = vmatpush2.msra.mxu0 0.0
  %2374 = vmatprep.subr.mxu0 0.0
  %2375 = vmatpush2.msra.mxu0 0.0
  %2376 = vmatprep.subr.mxu0 0.0
  %2377 = vmatpush2.msra.mxu0 0.0
  %2378 = vmatprep.subr.mxu0 0.0
  %2379 = vmatpush2.msra.mxu0 0.0
  %2380 = vmatprep.subr.mxu0 0.0
  %2381 = vmatpush2.msra.mxu0 0.0
  %2382 = vmatprep.subr.mxu0 0.0
  %2383 = vmatpush2.msra.mxu0 0.0
  %2384 = vmatprep.subr.mxu0 0.0
  %2385 = vmatpush2.msra.mxu0 0.0
  %2386 = vmatprep.subr.mxu0 0.0
  %2387 = vmatpush2.msra.mxu0 0.0
  %2388 = vmatprep.subr.mxu0 0.0
  %2389 = vmatpush2.msra.mxu0 0.0
  %2390 = vmatprep.subr.mxu0 0.0
  %2391 = vmatpush2.msra.mxu0 0.0
  %2392 = vmatprep.subr.mxu0 0.0
  %2393 = vmatpush2.msra.mxu0 0.0
  %2394 = vmatprep.subr.mxu0 0.0
  %2395 = vmatpush2.msra.mxu0 0.0
  %2396 = vmatprep.subr.mxu0 0.0
  %2397 = vmatpush2.msra.mxu0 0.0
  %2398 = vmatprep.subr.mxu0 0.0
  %2399 = vmatpush2.msra.mxu0 0.0
  %2400 = vmatprep.subr.mxu0 %v2333
  %2401 = vmatpush2.msra.mxu0 %v2332
  %2402 = vmatprep.subr.mxu0 %v2331
  %2403 = vmatpush2.msra.mxu0 %v2330
  %2404 = vmatprep.mubr.f32.mxu0 %v1031
  %2405 = vmatmul.mubr.f32.gmra.mxu0 %v57
  %v2406 = vpop.f32.mrf.mxu0
  %v2407 = vadd.f32 %v1012, %v2406
  %v2408 = vpop.f32.mrf.mxu0
  %v2409 = vadd.f32 %v1012, %v2408
  %2410 = vmatprep.mubr.f32.mxu0 %v1034
  %2411 = vmatmul.mubr.f32.gmra.mxu0 %v59
  %v2412 = vpop.f32.mrf.mxu0
  %v2413 = vadd.f32 %v1017, %v2412
  %v2414 = vpop.f32.mrf.mxu0
  %v2415 = vadd.f32 %v1017, %v2414
  %2416 = vmatprep.mubr.f32.mxu0 %v1037
  %2417 = vmatmul.mubr.f32.gmra.mxu0 %v61
  %v2418 = vpop.f32.mrf.mxu0
  %v2419 = vadd.f32 %v1022, %v2418
  %v2420 = vpop.f32.mrf.mxu0
  %v2421 = vadd.f32 %v1022, %v2420
  %2422 = vmatprep.mubr.f32.mxu0 %v1040
  %2423 = vmatmul.mubr.f32.gmra.mxu0 %v63
  %v2424 = vpop.f32.mrf.mxu0
  %v2425 = vadd.f32 %v1027, %v2424
  %v2426 = vpop.f32.mrf.mxu0
  %v2427 = vadd.f32 %v1027, %v2426
  %2428 = vdwg.mxu0
  %2429 = vmatprep.subr.mxu0 0.0
  %2430 = vmatpush1.msra.mxu0 %v2307
  %2431 = vmatprep.subr.mxu0 0.0
  %2432 = vmatpush1.msra.mxu0 %v2301
  %2433 = vmatprep.subr.mxu0 0.0
  %2434 = vmatpush1.msra.mxu0 %v2285
  %2435 = vmatprep.subr.mxu0 0.0
  %2436 = vmatpush1.msra.mxu0 %v2279
  %2437 = vmatprep.subr.mxu0 0.0
  %2438 = vmatpush1.msra.mxu0 %v2263
  %2439 = vmatprep.subr.mxu0 0.0
  %2440 = vmatpush1.msra.mxu0 %v2257
  %2441 = vmatprep.subr.mxu0 0.0
  %2442 = vmatpush1.msra.mxu0 %v2241
  %2443 = vmatprep.subr.mxu0 0.0
  %2444 = vmatpush1.msra.mxu0 %v2235
  %2445 = vmatprep.subr.mxu0 0.0
  %2446 = vmatpush1.msra.mxu0 %v2219
  %2447 = vmatprep.subr.mxu0 0.0
  %2448 = vmatpush1.msra.mxu0 %v2213
  %2449 = vmatprep.subr.mxu0 0.0
  %2450 = vmatpush1.msra.mxu0 %v2197
  %2451 = vmatprep.subr.mxu0 0.0
  %2452 = vmatpush1.msra.mxu0 %v2191
  %2453 = vmatprep.subr.mxu0 0.0
  %2454 = vmatpush1.msra.mxu0 %v2175
  %2455 = vmatprep.subr.mxu0 0.0
  %2456 = vmatpush1.msra.mxu0 %v2169
  %2457 = vmatprep.subr.mxu0 0.0
  %2458 = vmatpush1.msra.mxu0 %v2157
  %2459 = vmatprep.subr.mxu0 0.0
  %2460 = vmatpush1.msra.mxu0 %v2154
  %2461 = vmatprep.subr.mxu0 0.0
  %2462 = vmatpush2.msra.mxu0 0.0
  %2463 = vmatprep.subr.mxu0 0.0
  %2464 = vmatpush2.msra.mxu0 0.0
  %2465 = vmatprep.subr.mxu0 0.0
  %2466 = vmatpush2.msra.mxu0 0.0
  %2467 = vmatprep.subr.mxu0 0.0
  %2468 = vmatpush2.msra.mxu0 0.0
  %2469 = vmatprep.subr.mxu0 0.0
  %2470 = vmatpush2.msra.mxu0 0.0
  %2471 = vmatprep.subr.mxu0 0.0
  %2472 = vmatpush2.msra.mxu0 0.0
  %2473 = vmatprep.subr.mxu0 0.0
  %2474 = vmatpush2.msra.mxu0 0.0
  %2475 = vmatprep.subr.mxu0 0.0
  %2476 = vmatpush2.msra.mxu0 0.0
  %2477 = vmatprep.subr.mxu0 0.0
  %2478 = vmatpush2.msra.mxu0 0.0
  %2479 = vmatprep.subr.mxu0 0.0
  %2480 = vmatpush2.msra.mxu0 0.0
  %2481 = vmatprep.subr.mxu0 0.0
  %2482 = vmatpush2.msra.mxu0 0.0
  %2483 = vmatprep.subr.mxu0 0.0
  %2484 = vmatpush2.msra.mxu0 0.0
  %2485 = vmatprep.subr.mxu0 0.0
  %2486 = vmatpush2.msra.mxu0 0.0
  %2487 = vmatprep.subr.mxu0 0.0
  %2488 = vmatpush2.msra.mxu0 0.0
  %2489 = vmatprep.subr.mxu0 0.0
  %2490 = vmatpush2.msra.mxu0 %v2329
  %2491 = vmatprep.subr.mxu0 0.0
  %2492 = vmatpush2.msra.mxu0 %v2323
  %2493 = vmatprep.mubr.f32.mxu0 %v1031
  %2494 = vmatmul.mubr.f32.gmra.mxu0 %v57
  %v2495 = vpop.f32.mrf.mxu0
  %v2496 = vadd.f32 %v1012, %v2495
  %v2497 = vpop.f32.mrf.mxu0
  %2498 = vmatprep.mubr.f32.mxu0 %v1034
  %2499 = vmatmul.mubr.f32.gmra.mxu0 %v59
  %v2500 = vpop.f32.mrf.mxu0
  %v2501 = vadd.f32 %v1017, %v2500
  %v2502 = vpop.f32.mrf.mxu0
  %2503 = vmatprep.mubr.f32.mxu0 %v1037
  %2504 = vmatmul.mubr.f32.gmra.mxu0 %v61
  %v2505 = vpop.f32.mrf.mxu0
  %v2506 = vadd.f32 %v1022, %v2505
  %v2507 = vpop.f32.mrf.mxu0
  %2508 = vmatprep.mubr.f32.mxu0 %v1040
  %2509 = vmatmul.mubr.f32.gmra.mxu0 %v63
  %v2510 = vpop.f32.mrf.mxu0
  %v2511 = vadd.f32 %v1027, %v2510
  %v2512 = vpop.f32.mrf.mxu0
  %2513 = vdwg.mxu0
  %2526 = vrot.lane.b32.xlu0 %v2407, 126
  %v2527 = vpop.permute.xlu0 %2526
  %2528 = vrot.lane.b32.xlu0 %v2409, 126
  %v2529 = vpop.permute.xlu0 %2528
  %2530 = vrot.lane.b32.xlu0 %v2496, 126
  %v2531 = vpop.permute.xlu0 %2530
  %2532 = vrot.lane.b32.xlu0 %v2413, 126
  %v2533 = vpop.permute.xlu0 %2532
  %2534 = vrot.lane.b32.xlu0 %v2415, 126
  %v2535 = vpop.permute.xlu0 %2534
  %2536 = vrot.lane.b32.xlu0 %v2501, 126
  %v2537 = vpop.permute.xlu0 %2536
  %2538 = vrot.lane.b32.xlu0 %v2419, 126
  %v2539 = vpop.permute.xlu0 %2538
  %2540 = vrot.lane.b32.xlu0 %v2421, 126
  %v2541 = vpop.permute.xlu0 %2540
  %2542 = vrot.lane.b32.xlu0 %v2506, 126
  %v2543 = vpop.permute.xlu0 %2542
  %2544 = vrot.lane.b32.xlu0 %v2425, 126
  %v2545 = vpop.permute.xlu0 %2544
  %2546 = vrot.lane.b32.xlu0 %v2427, 126
  %v2547 = vpop.permute.xlu0 %2546
  %2548 = vrot.lane.b32.xlu0 %v2511, 126
  %v2549 = vpop.permute.xlu0 %2548
  %v2550 = vsel %vm212, %v2527, %v2529
  %v2551 = vsel %vm212, %v2529, %v2531
  %v2552 = vsel %vm212, %v2533, %v2535
  %v2553 = vsel %vm212, %v2535, %v2537
  %v2554 = vsel %vm212, %v2539, %v2541
  %v2555 = vsel %vm212, %v2541, %v2543
  %v2556 = vsel %vm212, %v2545, %v2547
  %v2557 = vsel %vm212, %v2547, %v2549
  %v2570 = vmax.f32 %v2407, %v2550
  %v2571 = vmax.f32 %v2409, %v2551
  %v2572 = vmax.f32 %v2496, %v2531
  %v2573 = vmax.f32 %v2413, %v2552
  %v2574 = vmax.f32 %v2415, %v2553
  %v2575 = vmax.f32 %v2501, %v2537
  %v2576 = vmax.f32 %v2419, %v2554
  %v2577 = vmax.f32 %v2421, %v2555
  %v2578 = vmax.f32 %v2506, %v2543
  %v2579 = vmax.f32 %v2425, %v2556
  %v2580 = vmax.f32 %v2427, %v2557
  %v2581 = vmax.f32 %v2511, %v2549
  %2582 = vrot.lane.b32.xlu0 %v2407, 100
  %v2583 = vpop.permute.xlu0 %2582
  %2584 = vrot.lane.b32.xlu0 %v2409, 100
  %v2585 = vpop.permute.xlu0 %2584
  %2586 = vrot.lane.b32.xlu0 %v2496, 100
  %v2587 = vpop.permute.xlu0 %2586
  %2588 = vrot.lane.b32.xlu0 %v2413, 100
  %v2589 = vpop.permute.xlu0 %2588
  %2590 = vrot.lane.b32.xlu0 %v2415, 100
  %v2591 = vpop.permute.xlu0 %2590
  %2592 = vrot.lane.b32.xlu0 %v2501, 100
  %v2593 = vpop.permute.xlu0 %2592
  %2594 = vrot.lane.b32.xlu0 %v2419, 100
  %v2595 = vpop.permute.xlu0 %2594
  %2596 = vrot.lane.b32.xlu0 %v2421, 100
  %v2597 = vpop.permute.xlu0 %2596
  %2598 = vrot.lane.b32.xlu0 %v2506, 100
  %v2599 = vpop.permute.xlu0 %2598
  %2600 = vrot.lane.b32.xlu0 %v2425, 100
  %v2601 = vpop.permute.xlu0 %2600
  %2602 = vrot.lane.b32.xlu0 %v2427, 100
  %v2603 = vpop.permute.xlu0 %2602
  %2604 = vrot.lane.b32.xlu0 %v2511, 100
  %v2605 = vpop.permute.xlu0 %2604
  %v2606 = vsel %vm464, %v2583, %v2585
  %v2607 = vsel %vm464, %v2585, %v2587
  %v2608 = vsel %vm464, %v2589, %v2591
  %v2609 = vsel %vm464, %v2591, %v2593
  %v2610 = vsel %vm464, %v2595, %v2597
  %v2611 = vsel %vm464, %v2597, %v2599
  %v2612 = vsel %vm464, %v2601, %v2603
  %v2613 = vsel %vm464, %v2603, %v2605
  %v2626 = vmax.f32 %v2570, %v2606
  %v2627 = vmax.f32 %v2571, %v2607
  %v2628 = vmax.f32 %v2572, %v2587
  %v2629 = vmax.f32 %v2573, %v2608
  %v2630 = vmax.f32 %v2574, %v2609
  %v2631 = vmax.f32 %v2575, %v2593
  %v2632 = vmax.f32 %v2576, %v2610
  %v2633 = vmax.f32 %v2577, %v2611
  %v2634 = vmax.f32 %v2578, %v2599
  %v2635 = vmax.f32 %v2579, %v2612
  %v2636 = vmax.f32 %v2580, %v2613
  %v2637 = vmax.f32 %v2581, %v2605
  %2638 = vrot.lane.b32.xlu0 %v2407, 98
  %v2639 = vpop.permute.xlu0 %2638
  %2640 = vrot.lane.b32.xlu0 %v2409, 98
  %v2641 = vpop.permute.xlu0 %2640
  %2642 = vrot.lane.b32.xlu0 %v2496, 98
  %v2643 = vpop.permute.xlu0 %2642
  %2644 = vrot.lane.b32.xlu0 %v2413, 98
  %v2645 = vpop.permute.xlu0 %2644
  %2646 = vrot.lane.b32.xlu0 %v2415, 98
  %v2647 = vpop.permute.xlu0 %2646
  %2648 = vrot.lane.b32.xlu0 %v2501, 98
  %v2649 = vpop.permute.xlu0 %2648
  %2650 = vrot.lane.b32.xlu0 %v2419, 98
  %v2651 = vpop.permute.xlu0 %2650
  %2652 = vrot.lane.b32.xlu0 %v2421, 98
  %v2653 = vpop.permute.xlu0 %2652
  %2654 = vrot.lane.b32.xlu0 %v2506, 98
  %v2655 = vpop.permute.xlu0 %2654
  %2656 = vrot.lane.b32.xlu0 %v2425, 98
  %v2657 = vpop.permute.xlu0 %2656
  %2658 = vrot.lane.b32.xlu0 %v2427, 98
  %v2659 = vpop.permute.xlu0 %2658
  %2660 = vrot.lane.b32.xlu0 %v2511, 98
  %v2661 = vpop.permute.xlu0 %2660
  %v2662 = vsel %vm590, %v2639, %v2641
  %v2663 = vsel %vm590, %v2641, %v2643
  %v2664 = vsel %vm590, %v2645, %v2647
  %v2665 = vsel %vm590, %v2647, %v2649
  %v2666 = vsel %vm590, %v2651, %v2653
  %v2667 = vsel %vm590, %v2653, %v2655
  %v2668 = vsel %vm590, %v2657, %v2659
  %v2669 = vsel %vm590, %v2659, %v2661
  %v2682 = vmax.f32 %v2626, %v2662
  %v2683 = vmax.f32 %v2627, %v2663
  %v2684 = vmax.f32 %v2628, %v2643
  %v2685 = vmax.f32 %v2629, %v2664
  %v2686 = vmax.f32 %v2630, %v2665
  %v2687 = vmax.f32 %v2631, %v2649
  %v2688 = vmax.f32 %v2632, %v2666
  %v2689 = vmax.f32 %v2633, %v2667
  %v2690 = vmax.f32 %v2634, %v2655
  %v2691 = vmax.f32 %v2635, %v2668
  %v2692 = vmax.f32 %v2636, %v2669
  %v2693 = vmax.f32 %v2637, %v2661
  %2698 = vrot.lane.b32.xlu0 %v2683, 61
  %v2699 = vpop.permute.xlu0 %2698
  %2700 = vrot.lane.b32.xlu0 %v2686, 61
  %v2701 = vpop.permute.xlu0 %2700
  %2702 = vrot.lane.b32.xlu0 %v2689, 61
  %v2703 = vpop.permute.xlu0 %2702
  %2704 = vrot.lane.b32.xlu0 %v2692, 61
  %v2705 = vpop.permute.xlu0 %2704
  %v2710 = vsel %vm1412, %v2682, %v2699
  %v2711 = vsel %vm1412, %v2685, %v2701
  %v2712 = vsel %vm1412, %v2688, %v2703
  %v2713 = vsel %vm1412, %v2691, %v2705
  %2718 = vrot.lane.b32.xlu0 %v2682, 124
  %v2719 = vpop.permute.xlu0 %2718
  %2720 = vrot.lane.b32.xlu0 %v2685, 124
  %v2721 = vpop.permute.xlu0 %2720
  %2722 = vrot.lane.b32.xlu0 %v2688, 124
  %v2723 = vpop.permute.xlu0 %2722
  %2724 = vrot.lane.b32.xlu0 %v2691, 124
  %v2725 = vpop.permute.xlu0 %2724
  %2730 = vrot.lane.b32.xlu0 %v2683, 57
  %v2731 = vpop.permute.xlu0 %2730
  %2732 = vrot.lane.b32.xlu0 %v2686, 57
  %v2733 = vpop.permute.xlu0 %2732
  %2734 = vrot.lane.b32.xlu0 %v2689, 57
  %v2735 = vpop.permute.xlu0 %2734
  %2736 = vrot.lane.b32.xlu0 %v2692, 57
  %v2737 = vpop.permute.xlu0 %2736
  %v2742 = vsel %vm1412, %v2719, %v2731
  %v2743 = vsel %vm1412, %v2721, %v2733
  %v2744 = vsel %vm1412, %v2723, %v2735
  %v2745 = vsel %vm1412, %v2725, %v2737
  %2746 = vrot.lane.b32.xlu0 %v2682, 72
  %v2747 = vpop.permute.xlu0 %2746
  %2748 = vrot.lane.b32.xlu0 %v2685, 72
  %v2749 = vpop.permute.xlu0 %2748
  %2750 = vrot.lane.b32.xlu0 %v2688, 72
  %v2751 = vpop.permute.xlu0 %2750
  %2752 = vrot.lane.b32.xlu0 %v2691, 72
  %v2753 = vpop.permute.xlu0 %2752
  %2758 = vrot.lane.b32.xlu0 %v2683, 5
  %v2759 = vpop.permute.xlu0 %2758
  %2760 = vrot.lane.b32.xlu0 %v2686, 5
  %v2761 = vpop.permute.xlu0 %2760
  %2762 = vrot.lane.b32.xlu0 %v2689, 5
  %v2763 = vpop.permute.xlu0 %2762
  %2764 = vrot.lane.b32.xlu0 %v2692, 5
  %v2765 = vpop.permute.xlu0 %2764
  %v2770 = vsel %vm1412, %v2747, %v2759
  %v2771 = vsel %vm1412, %v2749, %v2761
  %v2772 = vsel %vm1412, %v2751, %v2763
  %v2773 = vsel %vm1412, %v2753, %v2765
  %2774 = vrot.lane.b32.xlu0 %v2682, 68
  %v2775 = vpop.permute.xlu0 %2774
  %2776 = vrot.lane.b32.xlu0 %v2685, 68
  %v2777 = vpop.permute.xlu0 %2776
  %2778 = vrot.lane.b32.xlu0 %v2688, 68
  %v2779 = vpop.permute.xlu0 %2778
  %2780 = vrot.lane.b32.xlu0 %v2691, 68
  %v2781 = vpop.permute.xlu0 %2780
  %2790 = vrot.lane.b32.xlu0 %v2684, 1
  %v2791 = vpop.permute.xlu0 %2790
  %2792 = vrot.lane.b32.xlu0 %v2687, 1
  %v2793 = vpop.permute.xlu0 %2792
  %2794 = vrot.lane.b32.xlu0 %v2690, 1
  %v2795 = vpop.permute.xlu0 %2794
  %2796 = vrot.lane.b32.xlu0 %v2693, 1
  %v2797 = vpop.permute.xlu0 %2796
  %v2802 = vsel %vm1412, %v2775, %v2791
  %v2803 = vsel %vm1412, %v2777, %v2793
  %v2804 = vsel %vm1412, %v2779, %v2795
  %v2805 = vsel %vm1412, %v2781, %v2797
  %2822 = vrot.lane.b32.xlu0 %v2710, 2
  %v2823 = vpop.permute.xlu0 %2822
  %2824 = vrot.lane.b32.xlu0 %v2711, 2
  %v2825 = vpop.permute.xlu0 %2824
  %2826 = vrot.lane.b32.xlu0 %v2712, 2
  %v2827 = vpop.permute.xlu0 %2826
  %2828 = vrot.lane.b32.xlu0 %v2713, 2
  %v2829 = vpop.permute.xlu0 %2828
  %2830 = vrot.lane.b32.xlu0 %v2742, 2
  %v2831 = vpop.permute.xlu0 %2830
  %2832 = vrot.lane.b32.xlu0 %v2743, 2
  %v2833 = vpop.permute.xlu0 %2832
  %2834 = vrot.lane.b32.xlu0 %v2744, 2
  %v2835 = vpop.permute.xlu0 %2834
  %2836 = vrot.lane.b32.xlu0 %v2745, 2
  %v2837 = vpop.permute.xlu0 %2836
  %2838 = vrot.lane.b32.xlu0 %v2770, 2
  %v2839 = vpop.permute.xlu0 %2838
  %2840 = vrot.lane.b32.xlu0 %v2771, 2
  %v2841 = vpop.permute.xlu0 %2840
  %2842 = vrot.lane.b32.xlu0 %v2772, 2
  %v2843 = vpop.permute.xlu0 %2842
  %2844 = vrot.lane.b32.xlu0 %v2773, 2
  %v2845 = vpop.permute.xlu0 %2844
  %2846 = vrot.lane.b32.xlu0 %v2802, 2
  %v2847 = vpop.permute.xlu0 %2846
  %2848 = vrot.lane.b32.xlu0 %v2803, 2
  %v2849 = vpop.permute.xlu0 %2848
  %2850 = vrot.lane.b32.xlu0 %v2804, 2
  %v2851 = vpop.permute.xlu0 %2850
  %2852 = vrot.lane.b32.xlu0 %v2805, 2
  %v2853 = vpop.permute.xlu0 %2852
  %vm2870 = vcmask 15360
  %v2871 = vsel %vm2870, %v1413, %v2823
  %v2872 = vsel %vm2870, %v1414, %v2825
  %v2873 = vsel %vm2870, %v1415, %v2827
  %v2874 = vsel %vm2870, %v1416, %v2829
  %v2875 = vsel %vm2870, %v1445, %v2831
  %v2876 = vsel %vm2870, %v1446, %v2833
  %v2877 = vsel %vm2870, %v1447, %v2835
  %v2878 = vsel %vm2870, %v1448, %v2837
  %v2879 = vsel %vm2870, %v1473, %v2839
  %v2880 = vsel %vm2870, %v1474, %v2841
  %v2881 = vsel %vm2870, %v1475, %v2843
  %v2882 = vsel %vm2870, %v1476, %v2845
  %v2883 = vsel %vm2870, %v1505, %v2847
  %v2884 = vsel %vm2870, %v1506, %v2849
  %v2885 = vsel %vm2870, %v1507, %v2851
  %v2886 = vsel %vm2870, %v1508, %v2853
  %v2887 = vld [vmem:[%s7] sm:$0xff]
  %v2888 = vld [vmem:[%s7 + $0x8] sm:$0x3]
  %v2889 = vld [vmem:[%s8] sm:$0xff]
  %v2890 = vld [vmem:[%s8 + $0x8] sm:$0x3]
  %2892 = vset.pattern.permute.xlu0 0
  %2893 = vperm.xlu0 %2892, %v2889
  %v2894 = vpop.permute.xlu0 %2893
  %2897 = vset.pattern.permute.xlu0 0
  %2898 = vperm.xlu0 %2897, %v2890
  %v2899 = vpop.permute.xlu0 %2898
  %2901 = vmatprep.subr.mxu0 0.0
  %2902 = vmatpush1.msra.mxu0 %v2886
  %2903 = vmatprep.subr.mxu0 0.0
  %2904 = vmatpush1.msra.mxu0 %v2885
  %2905 = vmatprep.subr.mxu0 0.0
  %2906 = vmatpush1.msra.mxu0 %v2884
  %2907 = vmatprep.subr.mxu0 0.0
  %2908 = vmatpush1.msra.mxu0 %v2883
  %2909 = vmatprep.subr.mxu0 0.0
  %2910 = vmatpush1.msra.mxu0 %v2882
  %2911 = vmatprep.subr.mxu0 0.0
  %2912 = vmatpush1.msra.mxu0 %v2881
  %2913 = vmatprep.subr.mxu0 0.0
  %2914 = vmatpush1.msra.mxu0 %v2880
  %2915 = vmatprep.subr.mxu0 0.0
  %2916 = vmatpush1.msra.mxu0 %v2879
  %2917 = vmatprep.subr.mxu0 0.0
  %2918 = vmatpush1.msra.mxu0 %v2878
  %2919 = vmatprep.subr.mxu0 0.0
  %2920 = vmatpush1.msra.mxu0 %v2877
  %2921 = vmatprep.subr.mxu0 0.0
  %2922 = vmatpush1.msra.mxu0 %v2876
  %2923 = vmatprep.subr.mxu0 0.0
  %2924 = vmatpush1.msra.mxu0 %v2875
  %2925 = vmatprep.subr.mxu0 0.0
  %2926 = vmatpush1.msra.mxu0 %v2874
  %2927 = vmatprep.subr.mxu0 0.0
  %2928 = vmatpush1.msra.mxu0 %v2873
  %2929 = vmatprep.subr.mxu0 0.0
  %2930 = vmatpush1.msra.mxu0 %v2872
  %2931 = vmatprep.subr.mxu0 0.0
  %2932 = vmatpush1.msra.mxu0 %v2871
  %2933 = vmatprep.subr.mxu0 0.0
  %2934 = vmatpush2.msra.mxu0 0.0
  %2935 = vmatprep.subr.mxu0 0.0
  %2936 = vmatpush2.msra.mxu0 0.0
  %2937 = vmatprep.subr.mxu0 0.0
  %2938 = vmatpush2.msra.mxu0 0.0
  %2939 = vmatprep.subr.mxu0 0.0
  %2940 = vmatpush2.msra.mxu0 0.0
  %2941 = vmatprep.subr.mxu0 0.0
  %2942 = vmatpush2.msra.mxu0 0.0
  %2943 = vmatprep.subr.mxu0 0.0
  %2944 = vmatpush2.msra.mxu0 0.0
  %2945 = vmatprep.subr.mxu0 0.0
  %2946 = vmatpush2.msra.mxu0 0.0
  %2947 = vmatprep.subr.mxu0 0.0
  %2948 = vmatpush2.msra.mxu0 0.0
  %2949 = vmatprep.subr.mxu0 0.0
  %2950 = vmatpush2.msra.mxu0 0.0
  %2951 = vmatprep.subr.mxu0 0.0
  %2952 = vmatpush2.msra.mxu0 0.0
  %2953 = vmatprep.subr.mxu0 0.0
  %2954 = vmatpush2.msra.mxu0 0.0
  %2955 = vmatprep.subr.mxu0 0.0
  %2956 = vmatpush2.msra.mxu0 0.0
  %2957 = vmatprep.subr.mxu0 0.0
  %2958 = vmatpush2.msra.mxu0 0.0
  %2959 = vmatprep.subr.mxu0 0.0
  %2960 = vmatpush2.msra.mxu0 0.0
  %2961 = vmatprep.subr.mxu0 0.0
  %2962 = vmatpush2.msra.mxu0 0.0
  %2963 = vmatprep.subr.mxu0 0.0
  %2964 = vmatpush2.msra.mxu0 0.0
  %2965 = vmatprep.mubr.f32.mxu0 0.0
  %2966 = vmatmul.mubr.f32.gmra.mxu0 %v2887
  %v2967 = vpop.f32.mrf.mxu0
  %v2968 = vadd.f32 %v2894, %v2967
  %v2969 = vpop.f32.mrf.mxu0
  %2970 = vmatprep.mubr.f32.mxu0 0.0
  %2971 = vmatmul.mubr.f32.gmra.mxu0 %v2888
  %v2972 = vpop.f32.mrf.mxu0
  %v2973 = vadd.f32 %v2899, %v2972
  %v2974 = vpop.f32.mrf.mxu0
  %2975 = vdwg.mxu0
  %v2976 = vld [vmem:[%s9] sm:$0xff]
  %v2977 = vld [vmem:[%s9 + $0x8] sm:$0x3]
  %v2978 = vld [vmem:[%s10] sm:$0xff]
  %v2979 = vld [vmem:[%s10 + $0x8] sm:$0x3]
  %v2980 = vsel %vm2870, %v2968, 0.0
  %2981 = vadd.xlane.f32.xlu0 %v2980
  %v2982 = vpop.xlane.xlu0 %2981
  %vm2983 = vcmask 9216
  %v2984 = vsel %vm2983, %v2973, 0.0
  %2985 = vadd.xlane.f32.xlu0 %v2984
  %v2986 = vpop.xlane.xlu0 %2985
  %v2987 = vrcp.pop 2.0
  %v2988 = vmul.f32 %v2982, %v2987
  %v2989 = vmul.f32 %v2986, %v2987
  %v2990 = vmul.f32 %v2968, %v2968
  %v2991 = vmul.f32 %v2973, %v2973
  %v2992 = vsel %vm2870, %v2990, 0.0
  %2993 = vadd.xlane.f32.xlu0 %v2992
  %v2994 = vpop.xlane.xlu0 %2993
  %v2995 = vsel %vm2983, %v2991, 0.0
  %2996 = vadd.xlane.f32.xlu0 %v2995
  %v2997 = vpop.xlane.xlu0 %2996
  %v2998 = vmul.f32 %v2994, %v2987
  %v2999 = vmul.f32 %v2997, %v2987
  %v3000 = vmul.f32 %v2988, %v2988
  %v3001 = vmul.f32 %v2989, %v2989
  %v3002 = vsub.f32 %v2998, %v3000
  %v3003 = vsub.f32 %v2999, %v3001
  %v3004 = vmax.f32 %v3002, 0.0
  %v3005 = vmax.f32 %v3003, 0.0
  %v3006 = vsub.f32 %v2968, %v2988
  %v3007 = vsub.f32 %v2973, %v2989
  %3009 = vset.pattern.permute.xlu0 0
  %3010 = vperm.xlu0 %3009, %v2976
  %v3011 = vpop.permute.xlu0 %3010
  %3014 = vset.pattern.permute.xlu0 0
  %3015 = vperm.xlu0 %3014, %v2977
  %v3016 = vpop.permute.xlu0 %3015
  %v3018 = vmul.f32 %v3011, %v3006
  %v3019 = vmul.f32 %v3016, %v3007
  %v3020 = vadd.f32 %v3004, 1e-05
  %v3021 = vadd.f32 %v3005, 1e-05
  %v3022 = vrsqrt.pop %v3020
  %v3023 = vrsqrt.pop %v3021
  %v3024 = vmul.f32 %v3018, %v3022
  %v3025 = vmul.f32 %v3019, %v3023
  %3027 = vset.pattern.permute.xlu0 0
  %3028 = vperm.xlu0 %3027, %v2978
  %v3029 = vpop.permute.xlu0 %3028
  %3032 = vset.pattern.permute.xlu0 0
  %3033 = vperm.xlu0 %3032, %v2979
  %v3034 = vpop.permute.xlu0 %3033
  %v3036 = vadd.f32 %v3024, %v3029
  %v3037 = vadd.f32 %v3025, %v3034
  %3040 = vrot.lane.b32.xlu0 %v2968, 126
  %v3041 = vpop.permute.xlu0 %3040
  %3042 = vrot.lane.b32.xlu0 %v2973, 126
  %v3043 = vpop.permute.xlu0 %3042
  %v3046 = vsel %vm2870, %v3041, 0.0
  %3047 = vadd.xlane.f32.xlu0 %v3046
  %v3048 = vpop.xlane.xlu0 %3047
  %v3049 = vsel %vm2983, %v3043, 0.0
  %3050 = vadd.xlane.f32.xlu0 %v3049
  %v3051 = vpop.xlane.xlu0 %3050
  %v3052 = vmul.f32 %v3048, %v2987
  %v3053 = vmul.f32 %v3051, %v2987
  %3056 = vrot.lane.b32.xlu0 %v2990, 126
  %v3057 = vpop.permute.xlu0 %3056
  %3058 = vrot.lane.b32.xlu0 %v2991, 126
  %v3059 = vpop.permute.xlu0 %3058
  %v3062 = vsel %vm2870, %v3057, 0.0
  %3063 = vadd.xlane.f32.xlu0 %v3062
  %v3064 = vpop.xlane.xlu0 %3063
  %v3065 = vsel %vm2983, %v3059, 0.0
  %3066 = vadd.xlane.f32.xlu0 %v3065
  %v3067 = vpop.xlane.xlu0 %3066
  %v3068 = vmul.f32 %v3064, %v2987
  %v3069 = vmul.f32 %v3067, %v2987
  %v3070 = vmul.f32 %v3052, %v3052
  %v3071 = vmul.f32 %v3053, %v3053
  %v3072 = vsub.f32 %v3068, %v3070
  %v3073 = vsub.f32 %v3069, %v3071
  %v3074 = vmax.f32 %v3072, 0.0
  %v3075 = vmax.f32 %v3073, 0.0
  %v3076 = vsub.f32 %v2968, %v3052
  %v3077 = vsub.f32 %v2973, %v3053
  %v3078 = vmul.f32 %v3011, %v3076
  %v3079 = vmul.f32 %v3016, %v3077
  %v3080 = vadd.f32 %v3074, 1e-05
  %v3081 = vadd.f32 %v3075, 1e-05
  %v3082 = vrsqrt.pop %v3080
  %v3083 = vrsqrt.pop %v3081
  %v3084 = vmul.f32 %v3078, %v3082
  %v3085 = vmul.f32 %v3079, %v3083
  %v3086 = vadd.f32 %v3084, %v3029
  %v3087 = vadd.f32 %v3085, %v3034
  %v3088 = vsel %vm2870, %v3036, %v3086
  %v3089 = vsel %vm2870, %v3037, %v3087
  %vm3090 = vcmask 31744
  %v3091 = vsel %vm3090, %v3088, -inf
  %vm3092 = vcmask 25600
  %v3093 = vsel %vm3092, %v3089, -inf
  %v3094 = vmax.f32 %v3091, %v3093
  %v3095 = vrot.slane %v3094, 4
  %v3096 = vmax.f32 %v3094, %v3095
  %v3097 = vrot.slane %v3096, 2
  %v3098 = vmax.f32 %v3096, %v3097
  %v3099 = vrot.slane %v3098, 1
  %v3100 = vmax.f32 %v3098, %v3099
  %v3101 = vsub.f32 %v3088, %v3100
  %v3102 = vsub.f32 %v3089, %v3100
  %v3103 = vmul.f32 %v3101, 1.442695
  %v3104 = vpow.pop %v3103
  %v3105 = vmul.f32 %v3102, 1.442695
  %v3106 = vpow.pop %v3105
  %v3107 = vsel %vm3090, %v3104, 0.0
  %v3108 = vsel %vm3092, %v3106, 0.0
  %v3109 = vadd.f32 %v3107, %v3108
  %v3110 = vrot.slane %v3109, 4
  %v3111 = vadd.f32 %v3109, %v3110
  %v3112 = vrot.slane %v3111, 2
  %v3113 = vadd.f32 %v3111, %v3112
  %v3114 = vrot.slane %v3113, 1
  %v3115 = vadd.f32 %v3113, %v3114
  %v3116 = vrcp.pop %v3115
  %v3117 = vmul.f32 %v3104, %v3116
  %v3118 = vmul.f32 %v3106, %v3116
  %vm3121 = vcmask 1041408
  %v3122 = vrot.slane %v3117, 6
  %v3123 = vrot.slane %v3118, 6
  %v3124 = vsel %vm3121, %v3122, %v3123
  %3125 = vrot.lane.b32.xlu0 %v3122, 126
  %v3126 = vpop.permute.xlu0 %3125
  %3127 = vrot.lane.b32.xlu0 %v3124, 126
  %v3128 = vpop.permute.xlu0 %3127
  %v3130 = vsel %vm3121, %v3118, %v3126
  %v3131 = vld [vmem:[%s11] sm:$0x3]
  %v3132 = vld [vmem:[%s12] sm:$0x3]
  %3134 = vset.pattern.permute.xlu0 0
  %3135 = vperm.xlu0 %3134, %v3132
  %v3136 = vpop.permute.xlu0 %3135
  %vm3138 = vcmask 162816
  %v3140 = vsel %vm3138, %v3131, 0
  %vm3142 = vcmask 1043456
  %v3143 = vsel %vm3142, %v3128, 0
  %3145 = vmatprep.subr.mxu0 0.0
  %3146 = vmatpush1.msra.mxu0 0.0
  %3147 = vmatprep.subr.mxu0 0.0
  %3148 = vmatpush1.msra.mxu0 0.0
  %3149 = vmatprep.subr.mxu0 0.0
  %3150 = vmatpush1.msra.mxu0 0.0
  %3151 = vmatprep.subr.mxu0 0.0
  %3152 = vmatpush1.msra.mxu0 0.0
  %3153 = vmatprep.subr.mxu0 0.0
  %3154 = vmatpush1.msra.mxu0 0.0
  %3155 = vmatprep.subr.mxu0 0.0
  %3156 = vmatpush1.msra.mxu0 0.0
  %3157 = vmatprep.subr.mxu0 0.0
  %3158 = vmatpush1.msra.mxu0 0.0
  %3159 = vmatprep.subr.mxu0 0.0
  %3160 = vmatpush1.msra.mxu0 0.0
  %3161 = vmatprep.subr.mxu0 0.0
  %3162 = vmatpush1.msra.mxu0 0.0
  %3163 = vmatprep.subr.mxu0 0.0
  %3164 = vmatpush1.msra.mxu0 0.0
  %3165 = vmatprep.subr.mxu0 0.0
  %3166 = vmatpush1.msra.mxu0 0.0
  %3167 = vmatprep.subr.mxu0 0.0
  %3168 = vmatpush1.msra.mxu0 0.0
  %3169 = vmatprep.subr.mxu0 0.0
  %3170 = vmatpush1.msra.mxu0 0.0
  %3171 = vmatprep.subr.mxu0 0.0
  %3172 = vmatpush1.msra.mxu0 %v3143
  %3173 = vmatprep.subr.mxu0 0.0
  %3174 = vmatpush1.msra.mxu0 %v3130
  %3175 = vmatprep.subr.mxu0 0.0
  %3176 = vmatpush1.msra.mxu0 %v3117
  %3177 = vmatprep.subr.mxu0 0.0
  %3178 = vmatpush2.msra.mxu0 0.0
  %3179 = vmatprep.subr.mxu0 0.0
  %3180 = vmatpush2.msra.mxu0 0.0
  %3181 = vmatprep.subr.mxu0 0.0
  %3182 = vmatpush2.msra.mxu0 0.0
  %3183 = vmatprep.subr.mxu0 0.0
  %3184 = vmatpush2.msra.mxu0 0.0
  %3185 = vmatprep.subr.mxu0 0.0
  %3186 = vmatpush2.msra.mxu0 0.0
  %3187 = vmatprep.subr.mxu0 0.0
  %3188 = vmatpush2.msra.mxu0 0.0
  %3189 = vmatprep.subr.mxu0 0.0
  %3190 = vmatpush2.msra.mxu0 0.0
  %3191 = vmatprep.subr.mxu0 0.0
  %3192 = vmatpush2.msra.mxu0 0.0
  %3193 = vmatprep.subr.mxu0 0.0
  %3194 = vmatpush2.msra.mxu0 0.0
  %3195 = vmatprep.subr.mxu0 0.0
  %3196 = vmatpush2.msra.mxu0 0.0
  %3197 = vmatprep.subr.mxu0 0.0
  %3198 = vmatpush2.msra.mxu0 0.0
  %3199 = vmatprep.subr.mxu0 0.0
  %3200 = vmatpush2.msra.mxu0 0.0
  %3201 = vmatprep.subr.mxu0 0.0
  %3202 = vmatpush2.msra.mxu0 0.0
  %3203 = vmatprep.subr.mxu0 0.0
  %3204 = vmatpush2.msra.mxu0 0.0
  %3205 = vmatprep.subr.mxu0 0.0
  %3206 = vmatpush2.msra.mxu0 0.0
  %3207 = vmatprep.subr.mxu0 0.0
  %3208 = vmatpush2.msra.mxu0 0.0
  %3209 = vmatprep.mubr.f32.mxu0 0.0
  %3210 = vmatmul.mubr.f32.gmra.mxu0 %v3140
  %v3211 = vpop.f32.mrf.mxu0
  %v3212 = vadd.f32 %v3136, %v3211
  %v3213 = vpop.f32.mrf.mxu0
  %3214 = vdwg.mxu0
  %v3215 = vld [vmem:[%s13] sm:$0x3]
  %v3216 = vld [vmem:[%s14] sm:$0x3]
  %v3217 = vsel %vm2983, %v3212, 0.0
  %3218 = vadd.xlane.f32.xlu0 %v3217
  %v3219 = vpop.xlane.xlu0 %3218
  %v3220 = vmul.f32 %v3219, %v2987
  %v3221 = vmul.f32 %v3212, %v3212
  %v3222 = vsel %vm2983, %v3221, 0.0
  %3223 = vadd.xlane.f32.xlu0 %v3222
  %v3224 = vpop.xlane.xlu0 %3223
  %v3225 = vmul.f32 %v3224, %v2987
  %v3226 = vmul.f32 %v3220, %v3220
  %v3227 = vsub.f32 %v3225, %v3226
  %v3228 = vmax.f32 %v3227, 0.0
  %v3229 = vsub.f32 %v3212, %v3220
  %3231 = vset.pattern.permute.xlu0 0
  %3232 = vperm.xlu0 %3231, %v3215
  %v3233 = vpop.permute.xlu0 %3232
  %v3235 = vmul.f32 %v3233, %v3229
  %v3236 = vadd.f32 %v3228, 1e-05
  %v3237 = vrsqrt.pop %v3236
  %v3238 = vmul.f32 %v3235, %v3237
  %3240 = vset.pattern.permute.xlu0 0
  %3241 = vperm.xlu0 %3240, %v3216
  %v3242 = vpop.permute.xlu0 %3241
  %v3244 = vadd.f32 %v3238, %v3242
  %v3245 = vsel %vm2983, %v3244, -inf
  %v3246 = vrot.slane %v3245, 4
  %v3247 = vmax.f32 %v3245, %v3246
  %v3248 = vrot.slane %v3247, 2
  %v3249 = vmax.f32 %v3247, %v3248
  %v3250 = vrot.slane %v3249, 1
  %v3251 = vmax.f32 %v3249, %v3250
  %v3252 = vsub.f32 %v3244, %v3251
  %v3253 = vmul.f32 %v3252, 1.442695
  %v3254 = vpow.pop %v3253
  %v3255 = vsel %vm2983, %v3254, 0.0
  %v3256 = vrot.slane %v3255, 4
  %v3257 = vadd.f32 %v3255, %v3256
  %v3258 = vrot.slane %v3257, 2
  %v3259 = vadd.f32 %v3257, %v3258
  %v3260 = vrot.slane %v3259, 1
  %v3261 = vadd.f32 %v3259, %v3260
  %v3262 = vrcp.pop %v3261
  %v3263 = vmul.f32 %v3254, %v3262
  %3264 = vst.msk [vmem:[%s15] sm:$0x3] %vm2983, %v3263
  // Predicated region
  $region62: #{_lambda_.1} parent=0 // pred_check
    _
  $region63: #{_lambda_.1} parent=0 // pred_check_branch
    %3266 = sbr.rel (0) target = $region65
  $region64: #{_lambda_.1} parent=0 // pred_region
    _
  $region65: #{_lambda_.1} parent=0 // pred_fallthru
    _
  // Predicated region
  $region66: #{_lambda_.1} parent=0 // pred_check
    _
  $region67: #{_lambda_.1} parent=0 // pred_check_branch
    %3268 = sbr.rel (0) target = $region69
  $region68: #{_lambda_.1} parent=0 // pred_region
    _
  $region69: #{_lambda_.1} parent=0 // pred_fallthru
    _

</llo_original>
